<compile_context>
chip_gen: v7x
topology: tpu7x:2x2x1
jax: 0.10.0
libtpu: 0.0.40
codegen_flags: <defaults>
</compile_context>

<pallas_src>
import math
import functools

import jax
import jax.numpy as jnp
from jax import lax
from jax.experimental import pallas as pl
from jax.experimental.pallas import tpu as pltpu


def _layernorm(x, scale, shift, eps=1e-5):
    mean = jnp.mean(x, axis=-1, keepdims=True)
    var = jnp.mean((x - mean) ** 2, axis=-1, keepdims=True)   # unbiased=False
    return scale * ((x - mean) * lax.rsqrt(var + eps)) + shift


def _gelu08(x):
    # 0.8 * x * (1 + tanh(sqrt(2/pi) * (x + 0.044715 x^3)))  -- exact module GELU
    c = jnp.sqrt(jnp.float32(2.0 / math.pi))
    return 0.8 * x * (1.0 + jnp.tanh(c * (x + 0.044715 * x * x * x)))


def transformer_block_kernel(
    xq_ref, xkv_ref,                    # (1, TQ, D), (1, T, D)   f32
    ln1_s_ref, ln1_b_ref,               # (1, D) f32
    ln2_s_ref, ln2_b_ref,               # (1, D) f32
    wq_ref, wk_ref, wv_ref,             # (H, D, hd) bf16  (head-batched, pre-transposed)
    wo_ref, bo_ref,                     # (H, hd, D) bf16, (1, D) f32
    w1_ref, b1_ref,                     # (D, 4D) bf16, (1, 4D) f32
    w2_ref, b2_ref,                     # (4D, D) bf16, (1, D) f32
    o_ref,                              # (1, TQ, D) f32
    *, num_heads, q_tile, ffn_chunk,
):
    f32 = jnp.float32
    bf16 = jnp.bfloat16

    xq = xq_ref[0]                      # (TQ, D) query rows (also residual)
    xkv = xkv_ref[0]                    # (T,  D) full sequence for K/V
    TQ, D = xq.shape
    T = xkv.shape[0]
    hd = D // num_heads
    scale = jnp.float32(1.0 / math.sqrt(hd))

    # ---- LayerNorm 1 (f32 math, bf16 matmul operands) ----
    ln1_s = ln1_s_ref[...]
    ln1_b = ln1_b_ref[...]
    xn_q = _layernorm(xq, ln1_s, ln1_b).astype(bf16)
    xn_kv = _layernorm(xkv, ln1_s, ln1_b).astype(bf16)

    # ---- causal mask on global positions (computed once, reused per head) ----
    q0 = pl.program_id(1) * q_tile
    q_pos = q0 + lax.broadcasted_iota(jnp.int32, (TQ, T), 0)
    k_pos = lax.broadcasted_iota(jnp.int32, (TQ, T), 1)
    mask = k_pos > q_pos
    neg_big = jnp.float32(-1e30)        # finite; diagonal is never masked -> no NaN rows

    # ---- masked multi-head attention (per-head 2-D matmuls, accumulated output proj) ----
    attn = jnp.zeros((TQ, D), f32)
    for h in range(num_heads):
        qh = jnp.dot(xn_q, wq_ref[h], preferred_element_type=f32) * scale   # (TQ, hd)
        kh = jnp.dot(xn_kv, wk_ref[h], preferred_element_type=f32)          # (T,  hd)
        vh = jnp.dot(xn_kv, wv_ref[h], preferred_element_type=f32)          # (T,  hd)

        # QK^T without materializing kh.T (dot_general NT form).
        s = lax.dot_general(qh.astype(bf16), kh.astype(bf16),
                            (((1,), (1,)), ((), ())),
                            preferred_element_type=f32)                      # (TQ, T)
        s = jnp.where(mask, neg_big, s)
        s = s - jnp.max(s, axis=-1, keepdims=True)
        p = jnp.exp(s)
        p = p * pl.reciprocal(jnp.sum(p, axis=-1, keepdims=True), approx=True)

        ctx = jnp.dot(p.astype(bf16), vh.astype(bf16),
                      preferred_element_type=f32)                            # (TQ, hd)
        attn = attn + jnp.dot(ctx.astype(bf16), wo_ref[h],
                              preferred_element_type=f32)                    # (TQ, D)
    attn = attn + bo_ref[...]

    # residual 1 (drop_shortcut == identity)
    x1 = xq + attn

    # ---- LayerNorm 2 + FeedForward, hidden dim processed in chunks ----
    xn2 = _layernorm(x1, ln2_s_ref[...], ln2_b_ref[...]).astype(bf16)
    Hff = w1_ref.shape[1]
    h2 = jnp.zeros((TQ, D), f32)
    for c in range(Hff // ffn_chunk):
        lo = c * ffn_chunk
        hi = lo + ffn_chunk
        h1 = jnp.dot(xn2, w1_ref[:, lo:hi], preferred_element_type=f32) + b1_ref[:, lo:hi]
        g = _gelu08(h1).astype(bf16)
        h2 = h2 + jnp.dot(g, w2_ref[lo:hi, :], preferred_element_type=f32)
    h2 = h2 + b2_ref[...]

    # residual 2
    o_ref[0] = x1 + h2


def _const_spec(shape, pipeline_mode):
    nd = len(shape)
    idx = lambda b, q: (0,) * nd
    if pipeline_mode is None:
        return pl.BlockSpec(shape, idx)
    return pl.BlockSpec(shape, idx, pipeline_mode=pipeline_mode)


def _transformer_block_call(x, params, num_heads, *, single_buffer_weights):
    B, T, D = x.shape
    Hff = 4 * D
    hd = D // num_heads

    # Query tile: 128 when T allows; otherwise take the whole (small) sequence.
    tq = 128 if (T % 128 == 0) else T
    n_q = T // tq
    # FFN hidden chunk (keeps the (TQ, chunk) intermediate bounded).
    ffn_chunk = 512 if (Hff % 512 == 0 and Hff > 512) else Hff

    bf16 = jnp.bfloat16
    # Head-batched weight layouts, prepared once outside the kernel.
    wq = params["wq"].reshape(D, num_heads, hd).transpose(1, 0, 2).astype(bf16)  # (H, D, hd)
    wk = params["wk"].reshape(D, num_heads, hd).transpose(1, 0, 2).astype(bf16)
    wv = params["wv"].reshape(D, num_heads, hd).transpose(1, 0, 2).astype(bf16)
    wo = params["wo"].reshape(num_heads, hd, D).astype(bf16)                     # (H, hd, D)
    w1 = params["w1"].astype(bf16)
    w2 = params["w2"].astype(bf16)

    # Constant (grid-invariant) operands never need re-fetching -> single buffer.
    wmode = pl.Buffered(1) if single_buffer_weights else None

    in_specs = [
        pl.BlockSpec((1, tq, D), lambda b, q: (b, q, 0)),     # x: query/residual rows
        pl.BlockSpec((1, T, D), lambda b, q: (b, 0, 0)),      # x: full sequence for K/V
        _const_spec((1, D), wmode), _const_spec((1, D), wmode),            # ln1 scale/shift
        _const_spec((1, D), wmode), _const_spec((1, D), wmode),            # ln2 scale/shift
        _const_spec((num_heads, D, hd), wmode),                            # Wq
        _const_spec((num_heads, D, hd), wmode),                            # Wk
        _const_spec((num_heads, D, hd), wmode),                            # Wv
        _const_spec((num_heads, hd, D), wmode),                            # Wo
        _const_spec((1, D), wmode),                                        # bo
        _const_spec((D, Hff), wmode), _const_spec((1, Hff), wmode),        # W1, b1
        _const_spec((Hff, D), wmode), _const_spec((1, D), wmode),          # W2, b2
    ]

    # Explicit VMEM budget sized from the tiles (with headroom), capped for v7x.
    weight_bytes = 2 * (4 * D * D + 2 * D * Hff) + 4 * (3 * D + Hff)
    act_bytes = 4 * (2 * tq * D + T * D) * 2
    vmem_limit = int(min(64 * 2 ** 20, max(32 * 2 ** 20, 8 * (weight_bytes + act_bytes))))

    kernel = functools.partial(
        transformer_block_kernel,
        num_heads=num_heads, q_tile=tq, ffn_chunk=ffn_chunk)

    return pl.pallas_call(
        kernel,
        out_shape=jax.ShapeDtypeStruct((B, T, D), jnp.float32),
        grid_spec=pltpu.PrefetchScalarGridSpec(
            num_scalar_prefetch=0,
            grid=(B, n_q),
            in_specs=in_specs,
            out_specs=pl.BlockSpec((1, tq, D), lambda b, q: (b, q, 0)),
        ),
        compiler_params=pltpu.CompilerParams(
            dimension_semantics=("parallel", "parallel"),
            vmem_limit_bytes=vmem_limit),
    )(
        x, x,
        params["ln1_scale"], params["ln1_shift"],
        params["ln2_scale"], params["ln2_shift"],
        wq, wk, wv, wo, params["bo"],
        w1, params["b1"], w2, params["b2"],
    )


def transformer_block(x, params, num_heads):
    try:
        return _transformer_block_call(x, params, num_heads, single_buffer_weights=True)
    except Exception:
        # pl.Buffered(1) / pipeline_mode not supported on this jax build:
        # fall back to default double-buffered weight specs.
        return _transformer_block_call(x, params, num_heads, single_buffer_weights=False)


def reference_block(x, params, num_heads):
    """Pure-JAX f32 reference (mirrors the PyTorch forward, dropout = identity)."""
    B, T, D = x.shape
    hd = D // num_heads

    def ln(v, s, sh):
        m = jnp.mean(v, axis=-1, keepdims=True)
        var = jnp.mean((v - m) ** 2, axis=-1, keepdims=True)
        return s * ((v - m) / jnp.sqrt(var + 1e-5)) + sh

    xn = ln(x, params["ln1_scale"], params["ln1_shift"])
    Q = xn @ params["wq"]
    K = xn @ params["wk"]
    V = xn @ params["wv"]
    Q = Q.reshape(B, T, num_heads, hd).transpose(0, 2, 1, 3)
    K = K.reshape(B, T, num_heads, hd).transpose(0, 2, 1, 3)
    V = V.reshape(B, T, num_heads, hd).transpose(0, 2, 1, 3)
    s = jnp.einsum("bhqd,bhkd->bhqk", Q, K)
    mask = jnp.triu(jnp.ones((T, T), bool), k=1)
    s = jnp.where(mask, -jnp.inf, s)
    p = jax.nn.softmax(s / jnp.sqrt(jnp.float32(hd)), axis=-1)
    ctx = jnp.einsum("bhqk,bhkd->bhqd", p, V).transpose(0, 2, 1, 3).reshape(B, T, D)
    attn = ctx @ params["wo"] + params["bo"][0]
    x1 = x + attn
    xn2 = ln(x1, params["ln2_scale"], params["ln2_shift"])
    h1 = xn2 @ params["w1"] + params["b1"][0]
    c = jnp.sqrt(jnp.float32(2.0 / math.pi))
    g = 0.8 * h1 * (1.0 + jnp.tanh(c * (h1 + 0.044715 * h1 ** 3)))
    h2 = g @ params["w2"] + params["b2"][0]
    return x1 + h2


if __name__ == "__main__":
    cfg = dict(emb_dim=32, context_length=8, n_heads=4, drop_rate=0.0, qkv_bias=False)
    B, T, D = 2, cfg["context_length"], cfg["emb_dim"]
    H = 4 * D

    key = jax.random.PRNGKey(0)
    ks = jax.random.split(key, 10)

    # Deterministic synthetic parameters (linear weights stored pre-transposed as (in, out)).
    params = {
        "ln1_scale": jnp.ones((1, D), jnp.float32),
        "ln1_shift": jnp.zeros((1, D), jnp.float32),
        "ln2_scale": jnp.ones((1, D), jnp.float32),
        "ln2_shift": jnp.zeros((1, D), jnp.float32),
        "wq": jax.random.normal(ks[0], (D, D), jnp.float32) * 0.1,
        "wk": jax.random.normal(ks[1], (D, D), jnp.float32) * 0.1,
        "wv": jax.random.normal(ks[2], (D, D), jnp.float32) * 0.1,
        "wo": jax.random.normal(ks[3], (D, D), jnp.float32) * 0.1,
        "bo": jax.random.normal(ks[4], (1, D), jnp.float32) * 0.05,
        "w1": jax.random.normal(ks[5], (D, H), jnp.float32) * 0.1,
        "b1": jax.random.normal(ks[6], (1, H), jnp.float32) * 0.05,
        "w2": jax.random.normal(ks[7], (H, D), jnp.float32) * 0.1,
        "b2": jax.random.normal(ks[8], (1, D), jnp.float32) * 0.05,
    }

    x = jax.random.normal(ks[9], (B, T, D), jnp.float32)

    out = transformer_block(x, params, cfg["n_heads"])
    out = jax.block_until_ready(out)

    ref = reference_block(x, params, cfg["n_heads"])
    assert out.shape == (B, T, D)
    # bf16 matmul inputs + approx reciprocal -> compare against the f32 reference
    # with a tolerance appropriate for bf16 accumulation error.
    assert jnp.allclose(out, ref, atol=5e-2, rtol=5e-2), "mismatch vs JAX reference"

    print("KERNEL_OK")
</pallas_src>

<mosaic_0001>
module attributes {stable_mosaic.version = 11 : i64} {
  func.func @transformer_block_kernel(%arg0: i32, %arg1: i32, %arg2: memref<1x8x32xf32, #tpu.memory_space<vmem>>, %arg3: memref<1x8x32xf32, #tpu.memory_space<vmem>>, %arg4: memref<1x32xf32, #tpu.memory_space<vmem>>, %arg5: memref<1x32xf32, #tpu.memory_space<vmem>>, %arg6: memref<1x32xf32, #tpu.memory_space<vmem>>, %arg7: memref<1x32xf32, #tpu.memory_space<vmem>>, %arg8: memref<4x32x8xbf16, #tpu.memory_space<vmem>>, %arg9: memref<4x32x8xbf16, #tpu.memory_space<vmem>>, %arg10: memref<4x32x8xbf16, #tpu.memory_space<vmem>>, %arg11: memref<4x8x32xbf16, #tpu.memory_space<vmem>>, %arg12: memref<1x32xf32, #tpu.memory_space<vmem>>, %arg13: memref<32x128xbf16, #tpu.memory_space<vmem>>, %arg14: memref<1x128xf32, #tpu.memory_space<vmem>>, %arg15: memref<128x32xbf16, #tpu.memory_space<vmem>>, %arg16: memref<1x32xf32, #tpu.memory_space<vmem>>, %arg17: memref<1x8x32xf32, #tpu.memory_space<vmem>>) attributes {dimension_semantics = [#tpu.dimension_semantics<parallel>, #tpu.dimension_semantics<parallel>], iteration_bounds = array<i64: 2, 1>, scalar_prefetch = 0 : i64, scratch_operands = 0 : i64, tpu.core_type = #tpu.core_type<tc>, window_params = [{transform_indices = @transform_0, window_bounds = array<i64: 1, 8, 32>}, {transform_indices = @transform_1, window_bounds = array<i64: 1, 8, 32>}, {pipeline_mode = #tpu.pipeline_mode<synchronous>, transform_indices = @transform_2, window_bounds = array<i64: 1, 32>}, {pipeline_mode = #tpu.pipeline_mode<synchronous>, transform_indices = @transform_3, window_bounds = array<i64: 1, 32>}, {pipeline_mode = #tpu.pipeline_mode<synchronous>, transform_indices = @transform_4, window_bounds = array<i64: 1, 32>}, {pipeline_mode = #tpu.pipeline_mode<synchronous>, transform_indices = @transform_5, window_bounds = array<i64: 1, 32>}, {pipeline_mode = #tpu.pipeline_mode<synchronous>, transform_indices = @transform_6, window_bounds = array<i64: 4, 32, 8>}, {pipeline_mode = #tpu.pipeline_mode<synchronous>, transform_indices = @transform_7, window_bounds = array<i64: 4, 32, 8>}, {pipeline_mode = #tpu.pipeline_mode<synchronous>, transform_indices = @transform_8, window_bounds = array<i64: 4, 32, 8>}, {pipeline_mode = #tpu.pipeline_mode<synchronous>, transform_indices = @transform_9, window_bounds = array<i64: 4, 8, 32>}, {pipeline_mode = #tpu.pipeline_mode<synchronous>, transform_indices = @transform_10, window_bounds = array<i64: 1, 32>}, {pipeline_mode = #tpu.pipeline_mode<synchronous>, transform_indices = @transform_11, window_bounds = array<i64: 32, 128>}, {pipeline_mode = #tpu.pipeline_mode<synchronous>, transform_indices = @transform_12, window_bounds = array<i64: 1, 128>}, {pipeline_mode = #tpu.pipeline_mode<synchronous>, transform_indices = @transform_13, window_bounds = array<i64: 128, 32>}, {pipeline_mode = #tpu.pipeline_mode<synchronous>, transform_indices = @transform_14, window_bounds = array<i64: 1, 32>}, {transform_indices = @transform_15, window_bounds = array<i64: 1, 8, 32>}]} {
    %c0 = arith.constant 0 : index
    %c0_0 = arith.constant 0 : index
    %c0_1 = arith.constant 0 : index
    %0 = vector.load %arg2[%c0, %c0_0, %c0_1] : memref<1x8x32xf32, #tpu.memory_space<vmem>>, vector<1x8x32xf32>
    %1 = vector.shape_cast %0 : vector<1x8x32xf32> to vector<8x32xf32>
    %c0_2 = arith.constant 0 : index
    %c0_3 = arith.constant 0 : index
    %c0_4 = arith.constant 0 : index
    %2 = vector.load %arg3[%c0_2, %c0_3, %c0_4] : memref<1x8x32xf32, #tpu.memory_space<vmem>>, vector<1x8x32xf32>
    %3 = vector.shape_cast %2 : vector<1x8x32xf32> to vector<8x32xf32>
    %c0_5 = arith.constant 0 : index
    %c0_6 = arith.constant 0 : index
    %4 = vector.load %arg4[%c0_5, %c0_6] : memref<1x32xf32, #tpu.memory_space<vmem>>, vector<1x32xf32>
    %c0_7 = arith.constant 0 : index
    %c0_8 = arith.constant 0 : index
    %5 = vector.load %arg5[%c0_7, %c0_8] : memref<1x32xf32, #tpu.memory_space<vmem>>, vector<1x32xf32>
    %cst = arith.constant dense<0.000000e+00> : vector<8xf32>
    %6 = vector.multi_reduction <add>, %1, %cst [1] : vector<8x32xf32> to vector<8xf32>
    %7 = vector.shape_cast %6 : vector<8xf32> to vector<8x1xf32>
    %cst_9 = arith.constant 3.200000e+01 : f32
    %8 = vector.broadcast %cst_9 : f32 to vector<8x1xf32>
    %9 = arith.divf %7, %8 : vector<8x1xf32>
    %10 = vector.broadcast %9 : vector<8x1xf32> to vector<8x32xf32>
    %11 = arith.subf %1, %10 : vector<8x32xf32>
    %12 = arith.mulf %11, %11 : vector<8x32xf32>
    %cst_10 = arith.constant dense<0.000000e+00> : vector<8xf32>
    %13 = vector.multi_reduction <add>, %12, %cst_10 [1] : vector<8x32xf32> to vector<8xf32>
    %14 = vector.shape_cast %13 : vector<8xf32> to vector<8x1xf32>
    %cst_11 = arith.constant 3.200000e+01 : f32
    %15 = vector.broadcast %cst_11 : f32 to vector<8x1xf32>
    %16 = arith.divf %14, %15 : vector<8x1xf32>
    %17 = vector.broadcast %9 : vector<8x1xf32> to vector<8x32xf32>
    %18 = arith.subf %1, %17 : vector<8x32xf32>
    %cst_12 = arith.constant 9.99999974E-6 : f32
    %19 = vector.broadcast %cst_12 : f32 to vector<8x1xf32>
    %20 = arith.addf %16, %19 : vector<8x1xf32>
    %21 = math.rsqrt %20 : vector<8x1xf32>
    %22 = vector.broadcast %21 : vector<8x1xf32> to vector<8x32xf32>
    %23 = arith.mulf %18, %22 : vector<8x32xf32>
    %24 = vector.broadcast %4 : vector<1x32xf32> to vector<8x32xf32>
    %25 = arith.mulf %24, %23 : vector<8x32xf32>
    %26 = vector.broadcast %5 : vector<1x32xf32> to vector<8x32xf32>
    %27 = arith.addf %25, %26 : vector<8x32xf32>
    %28 = arith.truncf %27 : vector<8x32xf32> to vector<8x32xbf16>
    %cst_13 = arith.constant dense<0.000000e+00> : vector<8xf32>
    %29 = vector.multi_reduction <add>, %3, %cst_13 [1] : vector<8x32xf32> to vector<8xf32>
    %30 = vector.shape_cast %29 : vector<8xf32> to vector<8x1xf32>
    %cst_14 = arith.constant 3.200000e+01 : f32
    %31 = vector.broadcast %cst_14 : f32 to vector<8x1xf32>
    %32 = arith.divf %30, %31 : vector<8x1xf32>
    %33 = vector.broadcast %32 : vector<8x1xf32> to vector<8x32xf32>
    %34 = arith.subf %3, %33 : vector<8x32xf32>
    %35 = arith.mulf %34, %34 : vector<8x32xf32>
    %cst_15 = arith.constant dense<0.000000e+00> : vector<8xf32>
    %36 = vector.multi_reduction <add>, %35, %cst_15 [1] : vector<8x32xf32> to vector<8xf32>
    %37 = vector.shape_cast %36 : vector<8xf32> to vector<8x1xf32>
    %cst_16 = arith.constant 3.200000e+01 : f32
    %38 = vector.broadcast %cst_16 : f32 to vector<8x1xf32>
    %39 = arith.divf %37, %38 : vector<8x1xf32>
    %40 = vector.broadcast %32 : vector<8x1xf32> to vector<8x32xf32>
    %41 = arith.subf %3, %40 : vector<8x32xf32>
    %cst_17 = arith.constant 9.99999974E-6 : f32
    %42 = vector.broadcast %cst_17 : f32 to vector<8x1xf32>
    %43 = arith.addf %39, %42 : vector<8x1xf32>
    %44 = math.rsqrt %43 : vector<8x1xf32>
    %45 = vector.broadcast %44 : vector<8x1xf32> to vector<8x32xf32>
    %46 = arith.mulf %41, %45 : vector<8x32xf32>
    %47 = vector.broadcast %4 : vector<1x32xf32> to vector<8x32xf32>
    %48 = arith.mulf %47, %46 : vector<8x32xf32>
    %49 = vector.broadcast %5 : vector<1x32xf32> to vector<8x32xf32>
    %50 = arith.addf %48, %49 : vector<8x32xf32>
    %51 = arith.truncf %50 : vector<8x32xf32> to vector<8x32xbf16>
    %c8_i32 = arith.constant 8 : i32
    %52 = arith.muli %arg1, %c8_i32 : i32
    %53 = tpu.iota {dimensions = array<i32: 0>} : vector<8x8xi32>
    %54 = vector.broadcast %52 : i32 to vector<8x8xi32>
    %55 = arith.addi %54, %53 : vector<8x8xi32>
    %56 = tpu.iota {dimensions = array<i32: 1>} : vector<8x8xi32>
    %57 = arith.cmpi sgt, %56, %55 : vector<8x8xi32>
    %cst_18 = arith.constant 0.000000e+00 : f32
    %58 = vector.broadcast %cst_18 : f32 to vector<8x32xf32>
    %c0_19 = arith.constant 0 : index
    %c0_20 = arith.constant 0 : index
    %c0_21 = arith.constant 0 : index
    %59 = vector.load %arg8[%c0_19, %c0_20, %c0_21] : memref<4x32x8xbf16, #tpu.memory_space<vmem>>, vector<1x32x8xbf16>
    %60 = vector.shape_cast %59 : vector<1x32x8xbf16> to vector<32x8xbf16>
    %cst_22 = arith.constant dense<0.000000e+00> : vector<8x8xf32>
    %61 = tpu.matmul %28, %60, %cst_22 {dimension_numbers = #tpu.dot_dimension_numbers<[1], [0], [0], [1], [0, 0, 1, 1], [], []>} : vector<8x32xbf16>, vector<32x8xbf16>, vector<8x8xf32> -> vector<8x8xf32>
    %cst_23 = arith.constant 0.353553385 : f32
    %62 = vector.broadcast %cst_23 : f32 to vector<8x8xf32>
    %63 = arith.mulf %61, %62 : vector<8x8xf32>
    %c0_24 = arith.constant 0 : index
    %c0_25 = arith.constant 0 : index
    %c0_26 = arith.constant 0 : index
    %64 = vector.load %arg9[%c0_24, %c0_25, %c0_26] : memref<4x32x8xbf16, #tpu.memory_space<vmem>>, vector<1x32x8xbf16>
    %65 = vector.shape_cast %64 : vector<1x32x8xbf16> to vector<32x8xbf16>
    %cst_27 = arith.constant dense<0.000000e+00> : vector<8x8xf32>
    %66 = tpu.matmul %51, %65, %cst_27 {dimension_numbers = #tpu.dot_dimension_numbers<[1], [0], [0], [1], [0, 0, 1, 1], [], []>} : vector<8x32xbf16>, vector<32x8xbf16>, vector<8x8xf32> -> vector<8x8xf32>
    %c0_28 = arith.constant 0 : index
    %c0_29 = arith.constant 0 : index
    %c0_30 = arith.constant 0 : index
    %67 = vector.load %arg10[%c0_28, %c0_29, %c0_30] : memref<4x32x8xbf16, #tpu.memory_space<vmem>>, vector<1x32x8xbf16>
    %68 = vector.shape_cast %67 : vector<1x32x8xbf16> to vector<32x8xbf16>
    %cst_31 = arith.constant dense<0.000000e+00> : vector<8x8xf32>
    %69 = tpu.matmul %51, %68, %cst_31 {dimension_numbers = #tpu.dot_dimension_numbers<[1], [0], [0], [1], [0, 0, 1, 1], [], []>} : vector<8x32xbf16>, vector<32x8xbf16>, vector<8x8xf32> -> vector<8x8xf32>
    %70 = arith.truncf %63 : vector<8x8xf32> to vector<8x8xbf16>
    %71 = arith.truncf %66 : vector<8x8xf32> to vector<8x8xbf16>
    %cst_32 = arith.constant dense<0.000000e+00> : vector<8x8xf32>
    %72 = tpu.matmul %70, %71, %cst_32 {dimension_numbers = #tpu.dot_dimension_numbers<[1], [1], [0], [0], [0, 0, 1, 0], [], []>} : vector<8x8xbf16>, vector<8x8xbf16>, vector<8x8xf32> -> vector<8x8xf32>
    %cst_33 = arith.constant -1.000000e+30 : f32
    %73 = vector.broadcast %cst_33 : f32 to vector<8x8xf32>
    %74 = arith.select %57, %73, %72 : vector<8x8xi1>, vector<8x8xf32>
    %cst_34 = arith.constant dense<0xFF800000> : vector<8xf32>
    %75 = vector.multi_reduction <maximumf>, %74, %cst_34 [1] : vector<8x8xf32> to vector<8xf32>
    %76 = vector.shape_cast %75 : vector<8xf32> to vector<8x1xf32>
    %77 = vector.broadcast %76 : vector<8x1xf32> to vector<8x8xf32>
    %78 = arith.subf %74, %77 : vector<8x8xf32>
    %79 = math.exp %78 : vector<8x8xf32>
    %cst_35 = arith.constant dense<0.000000e+00> : vector<8xf32>
    %80 = vector.multi_reduction <add>, %79, %cst_35 [1] : vector<8x8xf32> to vector<8xf32>
    %81 = vector.shape_cast %80 : vector<8xf32> to vector<8x1xf32>
    %82 = tpu.reciprocal %81 {approx = true} : vector<8x1xf32> -> vector<8x1xf32>
    %83 = vector.broadcast %82 : vector<8x1xf32> to vector<8x8xf32>
    %84 = arith.mulf %79, %83 : vector<8x8xf32>
    %85 = arith.truncf %84 : vector<8x8xf32> to vector<8x8xbf16>
    %86 = arith.truncf %69 : vector<8x8xf32> to vector<8x8xbf16>
    %cst_36 = arith.constant dense<0.000000e+00> : vector<8x8xf32>
    %87 = tpu.matmul %85, %86, %cst_36 {dimension_numbers = #tpu.dot_dimension_numbers<[1], [0], [0], [1], [0, 0, 1, 1], [], []>} : vector<8x8xbf16>, vector<8x8xbf16>, vector<8x8xf32> -> vector<8x8xf32>
    %88 = arith.truncf %87 : vector<8x8xf32> to vector<8x8xbf16>
    %c0_37 = arith.constant 0 : index
    %c0_38 = arith.constant 0 : index
    %c0_39 = arith.constant 0 : index
    %89 = vector.load %arg11[%c0_37, %c0_38, %c0_39] : memref<4x8x32xbf16, #tpu.memory_space<vmem>>, vector<1x8x32xbf16>
    %90 = vector.shape_cast %89 : vector<1x8x32xbf16> to vector<8x32xbf16>
    %cst_40 = arith.constant dense<0.000000e+00> : vector<8x32xf32>
    %91 = tpu.matmul %88, %90, %cst_40 {dimension_numbers = #tpu.dot_dimension_numbers<[1], [0], [0], [1], [0, 0, 1, 1], [], []>} : vector<8x8xbf16>, vector<8x32xbf16>, vector<8x32xf32> -> vector<8x32xf32>
    %92 = arith.addf %58, %91 : vector<8x32xf32>
    %c1 = arith.constant 1 : index
    %c0_41 = arith.constant 0 : index
    %c0_42 = arith.constant 0 : index
    %93 = vector.load %arg8[%c1, %c0_41, %c0_42] : memref<4x32x8xbf16, #tpu.memory_space<vmem>>, vector<1x32x8xbf16>
    %94 = vector.shape_cast %93 : vector<1x32x8xbf16> to vector<32x8xbf16>
    %cst_43 = arith.constant dense<0.000000e+00> : vector<8x8xf32>
    %95 = tpu.matmul %28, %94, %cst_43 {dimension_numbers = #tpu.dot_dimension_numbers<[1], [0], [0], [1], [0, 0, 1, 1], [], []>} : vector<8x32xbf16>, vector<32x8xbf16>, vector<8x8xf32> -> vector<8x8xf32>
    %cst_44 = arith.constant 0.353553385 : f32
    %96 = vector.broadcast %cst_44 : f32 to vector<8x8xf32>
    %97 = arith.mulf %95, %96 : vector<8x8xf32>
    %c1_45 = arith.constant 1 : index
    %c0_46 = arith.constant 0 : index
    %c0_47 = arith.constant 0 : index
    %98 = vector.load %arg9[%c1_45, %c0_46, %c0_47] : memref<4x32x8xbf16, #tpu.memory_space<vmem>>, vector<1x32x8xbf16>
    %99 = vector.shape_cast %98 : vector<1x32x8xbf16> to vector<32x8xbf16>
    %cst_48 = arith.constant dense<0.000000e+00> : vector<8x8xf32>
    %100 = tpu.matmul %51, %99, %cst_48 {dimension_numbers = #tpu.dot_dimension_numbers<[1], [0], [0], [1], [0, 0, 1, 1], [], []>} : vector<8x32xbf16>, vector<32x8xbf16>, vector<8x8xf32> -> vector<8x8xf32>
    %c1_49 = arith.constant 1 : index
    %c0_50 = arith.constant 0 : index
    %c0_51 = arith.constant 0 : index
    %101 = vector.load %arg10[%c1_49, %c0_50, %c0_51] : memref<4x32x8xbf16, #tpu.memory_space<vmem>>, vector<1x32x8xbf16>
    %102 = vector.shape_cast %101 : vector<1x32x8xbf16> to vector<32x8xbf16>
    %cst_52 = arith.constant dense<0.000000e+00> : vector<8x8xf32>
    %103 = tpu.matmul %51, %102, %cst_52 {dimension_numbers = #tpu.dot_dimension_numbers<[1], [0], [0], [1], [0, 0, 1, 1], [], []>} : vector<8x32xbf16>, vector<32x8xbf16>, vector<8x8xf32> -> vector<8x8xf32>
    %104 = arith.truncf %97 : vector<8x8xf32> to vector<8x8xbf16>
    %105 = arith.truncf %100 : vector<8x8xf32> to vector<8x8xbf16>
    %cst_53 = arith.constant dense<0.000000e+00> : vector<8x8xf32>
    %106 = tpu.matmul %104, %105, %cst_53 {dimension_numbers = #tpu.dot_dimension_numbers<[1], [1], [0], [0], [0, 0, 1, 0], [], []>} : vector<8x8xbf16>, vector<8x8xbf16>, vector<8x8xf32> -> vector<8x8xf32>
    %cst_54 = arith.constant -1.000000e+30 : f32
    %107 = vector.broadcast %cst_54 : f32 to vector<8x8xf32>
    %108 = arith.select %57, %107, %106 : vector<8x8xi1>, vector<8x8xf32>
    %cst_55 = arith.constant dense<0xFF800000> : vector<8xf32>
    %109 = vector.multi_reduction <maximumf>, %108, %cst_55 [1] : vector<8x8xf32> to vector<8xf32>
    %110 = vector.shape_cast %109 : vector<8xf32> to vector<8x1xf32>
    %111 = vector.broadcast %110 : vector<8x1xf32> to vector<8x8xf32>
    %112 = arith.subf %108, %111 : vector<8x8xf32>
    %113 = math.exp %112 : vector<8x8xf32>
    %cst_56 = arith.constant dense<0.000000e+00> : vector<8xf32>
    %114 = vector.multi_reduction <add>, %113, %cst_56 [1] : vector<8x8xf32> to vector<8xf32>
    %115 = vector.shape_cast %114 : vector<8xf32> to vector<8x1xf32>
    %116 = tpu.reciprocal %115 {approx = true} : vector<8x1xf32> -> vector<8x1xf32>
    %117 = vector.broadcast %116 : vector<8x1xf32> to vector<8x8xf32>
    %118 = arith.mulf %113, %117 : vector<8x8xf32>
    %119 = arith.truncf %118 : vector<8x8xf32> to vector<8x8xbf16>
    %120 = arith.truncf %103 : vector<8x8xf32> to vector<8x8xbf16>
    %cst_57 = arith.constant dense<0.000000e+00> : vector<8x8xf32>
    %121 = tpu.matmul %119, %120, %cst_57 {dimension_numbers = #tpu.dot_dimension_numbers<[1], [0], [0], [1], [0, 0, 1, 1], [], []>} : vector<8x8xbf16>, vector<8x8xbf16>, vector<8x8xf32> -> vector<8x8xf32>
    %122 = arith.truncf %121 : vector<8x8xf32> to vector<8x8xbf16>
    %c1_58 = arith.constant 1 : index
    %c0_59 = arith.constant 0 : index
    %c0_60 = arith.constant 0 : index
    %123 = vector.load %arg11[%c1_58, %c0_59, %c0_60] : memref<4x8x32xbf16, #tpu.memory_space<vmem>>, vector<1x8x32xbf16>
    %124 = vector.shape_cast %123 : vector<1x8x32xbf16> to vector<8x32xbf16>
    %cst_61 = arith.constant dense<0.000000e+00> : vector<8x32xf32>
    %125 = tpu.matmul %122, %124, %cst_61 {dimension_numbers = #tpu.dot_dimension_numbers<[1], [0], [0], [1], [0, 0, 1, 1], [], []>} : vector<8x8xbf16>, vector<8x32xbf16>, vector<8x32xf32> -> vector<8x32xf32>
    %126 = arith.addf %92, %125 : vector<8x32xf32>
    %c2 = arith.constant 2 : index
    %c0_62 = arith.constant 0 : index
    %c0_63 = arith.constant 0 : index
    %127 = vector.load %arg8[%c2, %c0_62, %c0_63] : memref<4x32x8xbf16, #tpu.memory_space<vmem>>, vector<1x32x8xbf16>
    %128 = vector.shape_cast %127 : vector<1x32x8xbf16> to vector<32x8xbf16>
    %cst_64 = arith.constant dense<0.000000e+00> : vector<8x8xf32>
    %129 = tpu.matmul %28, %128, %cst_64 {dimension_numbers = #tpu.dot_dimension_numbers<[1], [0], [0], [1], [0, 0, 1, 1], [], []>} : vector<8x32xbf16>, vector<32x8xbf16>, vector<8x8xf32> -> vector<8x8xf32>
    %cst_65 = arith.constant 0.353553385 : f32
    %130 = vector.broadcast %cst_65 : f32 to vector<8x8xf32>
    %131 = arith.mulf %129, %130 : vector<8x8xf32>
    %c2_66 = arith.constant 2 : index
    %c0_67 = arith.constant 0 : index
    %c0_68 = arith.constant 0 : index
    %132 = vector.load %arg9[%c2_66, %c0_67, %c0_68] : memref<4x32x8xbf16, #tpu.memory_space<vmem>>, vector<1x32x8xbf16>
    %133 = vector.shape_cast %132 : vector<1x32x8xbf16> to vector<32x8xbf16>
    %cst_69 = arith.constant dense<0.000000e+00> : vector<8x8xf32>
    %134 = tpu.matmul %51, %133, %cst_69 {dimension_numbers = #tpu.dot_dimension_numbers<[1], [0], [0], [1], [0, 0, 1, 1], [], []>} : vector<8x32xbf16>, vector<32x8xbf16>, vector<8x8xf32> -> vector<8x8xf32>
    %c2_70 = arith.constant 2 : index
    %c0_71 = arith.constant 0 : index
    %c0_72 = arith.constant 0 : index
    %135 = vector.load %arg10[%c2_70, %c0_71, %c0_72] : memref<4x32x8xbf16, #tpu.memory_space<vmem>>, vector<1x32x8xbf16>
    %136 = vector.shape_cast %135 : vector<1x32x8xbf16> to vector<32x8xbf16>
    %cst_73 = arith.constant dense<0.000000e+00> : vector<8x8xf32>
    %137 = tpu.matmul %51, %136, %cst_73 {dimension_numbers = #tpu.dot_dimension_numbers<[1], [0], [0], [1], [0, 0, 1, 1], [], []>} : vector<8x32xbf16>, vector<32x8xbf16>, vector<8x8xf32> -> vector<8x8xf32>
    %138 = arith.truncf %131 : vector<8x8xf32> to vector<8x8xbf16>
    %139 = arith.truncf %134 : vector<8x8xf32> to vector<8x8xbf16>
    %cst_74 = arith.constant dense<0.000000e+00> : vector<8x8xf32>
    %140 = tpu.matmul %138, %139, %cst_74 {dimension_numbers = #tpu.dot_dimension_numbers<[1], [1], [0], [0], [0, 0, 1, 0], [], []>} : vector<8x8xbf16>, vector<8x8xbf16>, vector<8x8xf32> -> vector<8x8xf32>
    %cst_75 = arith.constant -1.000000e+30 : f32
    %141 = vector.broadcast %cst_75 : f32 to vector<8x8xf32>
    %142 = arith.select %57, %141, %140 : vector<8x8xi1>, vector<8x8xf32>
    %cst_76 = arith.constant dense<0xFF800000> : vector<8xf32>
    %143 = vector.multi_reduction <maximumf>, %142, %cst_76 [1] : vector<8x8xf32> to vector<8xf32>
    %144 = vector.shape_cast %143 : vector<8xf32> to vector<8x1xf32>
    %145 = vector.broadcast %144 : vector<8x1xf32> to vector<8x8xf32>
    %146 = arith.subf %142, %145 : vector<8x8xf32>
    %147 = math.exp %146 : vector<8x8xf32>
    %cst_77 = arith.constant dense<0.000000e+00> : vector<8xf32>
    %148 = vector.multi_reduction <add>, %147, %cst_77 [1] : vector<8x8xf32> to vector<8xf32>
    %149 = vector.shape_cast %148 : vector<8xf32> to vector<8x1xf32>
    %150 = tpu.reciprocal %149 {approx = true} : vector<8x1xf32> -> vector<8x1xf32>
    %151 = vector.broadcast %150 : vector<8x1xf32> to vector<8x8xf32>
    %152 = arith.mulf %147, %151 : vector<8x8xf32>
    %153 = arith.truncf %152 : vector<8x8xf32> to vector<8x8xbf16>
    %154 = arith.truncf %137 : vector<8x8xf32> to vector<8x8xbf16>
    %cst_78 = arith.constant dense<0.000000e+00> : vector<8x8xf32>
    %155 = tpu.matmul %153, %154, %cst_78 {dimension_numbers = #tpu.dot_dimension_numbers<[1], [0], [0], [1], [0, 0, 1, 1], [], []>} : vector<8x8xbf16>, vector<8x8xbf16>, vector<8x8xf32> -> vector<8x8xf32>
    %156 = arith.truncf %155 : vector<8x8xf32> to vector<8x8xbf16>
    %c2_79 = arith.constant 2 : index
    %c0_80 = arith.constant 0 : index
    %c0_81 = arith.constant 0 : index
    %157 = vector.load %arg11[%c2_79, %c0_80, %c0_81] : memref<4x8x32xbf16, #tpu.memory_space<vmem>>, vector<1x8x32xbf16>
    %158 = vector.shape_cast %157 : vector<1x8x32xbf16> to vector<8x32xbf16>
    %cst_82 = arith.constant dense<0.000000e+00> : vector<8x32xf32>
    %159 = tpu.matmul %156, %158, %cst_82 {dimension_numbers = #tpu.dot_dimension_numbers<[1], [0], [0], [1], [0, 0, 1, 1], [], []>} : vector<8x8xbf16>, vector<8x32xbf16>, vector<8x32xf32> -> vector<8x32xf32>
    %160 = arith.addf %126, %159 : vector<8x32xf32>
    %c3 = arith.constant 3 : index
    %c0_83 = arith.constant 0 : index
    %c0_84 = arith.constant 0 : index
    %161 = vector.load %arg8[%c3, %c0_83, %c0_84] : memref<4x32x8xbf16, #tpu.memory_space<vmem>>, vector<1x32x8xbf16>
    %162 = vector.shape_cast %161 : vector<1x32x8xbf16> to vector<32x8xbf16>
    %cst_85 = arith.constant dense<0.000000e+00> : vector<8x8xf32>
    %163 = tpu.matmul %28, %162, %cst_85 {dimension_numbers = #tpu.dot_dimension_numbers<[1], [0], [0], [1], [0, 0, 1, 1], [], []>} : vector<8x32xbf16>, vector<32x8xbf16>, vector<8x8xf32> -> vector<8x8xf32>
    %cst_86 = arith.constant 0.353553385 : f32
    %164 = vector.broadcast %cst_86 : f32 to vector<8x8xf32>
    %165 = arith.mulf %163, %164 : vector<8x8xf32>
    %c3_87 = arith.constant 3 : index
    %c0_88 = arith.constant 0 : index
    %c0_89 = arith.constant 0 : index
    %166 = vector.load %arg9[%c3_87, %c0_88, %c0_89] : memref<4x32x8xbf16, #tpu.memory_space<vmem>>, vector<1x32x8xbf16>
    %167 = vector.shape_cast %166 : vector<1x32x8xbf16> to vector<32x8xbf16>
    %cst_90 = arith.constant dense<0.000000e+00> : vector<8x8xf32>
    %168 = tpu.matmul %51, %167, %cst_90 {dimension_numbers = #tpu.dot_dimension_numbers<[1], [0], [0], [1], [0, 0, 1, 1], [], []>} : vector<8x32xbf16>, vector<32x8xbf16>, vector<8x8xf32> -> vector<8x8xf32>
    %c3_91 = arith.constant 3 : index
    %c0_92 = arith.constant 0 : index
    %c0_93 = arith.constant 0 : index
    %169 = vector.load %arg10[%c3_91, %c0_92, %c0_93] : memref<4x32x8xbf16, #tpu.memory_space<vmem>>, vector<1x32x8xbf16>
    %170 = vector.shape_cast %169 : vector<1x32x8xbf16> to vector<32x8xbf16>
    %cst_94 = arith.constant dense<0.000000e+00> : vector<8x8xf32>
    %171 = tpu.matmul %51, %170, %cst_94 {dimension_numbers = #tpu.dot_dimension_numbers<[1], [0], [0], [1], [0, 0, 1, 1], [], []>} : vector<8x32xbf16>, vector<32x8xbf16>, vector<8x8xf32> -> vector<8x8xf32>
    %172 = arith.truncf %165 : vector<8x8xf32> to vector<8x8xbf16>
    %173 = arith.truncf %168 : vector<8x8xf32> to vector<8x8xbf16>
    %cst_95 = arith.constant dense<0.000000e+00> : vector<8x8xf32>
    %174 = tpu.matmul %172, %173, %cst_95 {dimension_numbers = #tpu.dot_dimension_numbers<[1], [1], [0], [0], [0, 0, 1, 0], [], []>} : vector<8x8xbf16>, vector<8x8xbf16>, vector<8x8xf32> -> vector<8x8xf32>
    %cst_96 = arith.constant -1.000000e+30 : f32
    %175 = vector.broadcast %cst_96 : f32 to vector<8x8xf32>
    %176 = arith.select %57, %175, %174 : vector<8x8xi1>, vector<8x8xf32>
    %cst_97 = arith.constant dense<0xFF800000> : vector<8xf32>
    %177 = vector.multi_reduction <maximumf>, %176, %cst_97 [1] : vector<8x8xf32> to vector<8xf32>
    %178 = vector.shape_cast %177 : vector<8xf32> to vector<8x1xf32>
    %179 = vector.broadcast %178 : vector<8x1xf32> to vector<8x8xf32>
    %180 = arith.subf %176, %179 : vector<8x8xf32>
    %181 = math.exp %180 : vector<8x8xf32>
    %cst_98 = arith.constant dense<0.000000e+00> : vector<8xf32>
    %182 = vector.multi_reduction <add>, %181, %cst_98 [1] : vector<8x8xf32> to vector<8xf32>
    %183 = vector.shape_cast %182 : vector<8xf32> to vector<8x1xf32>
    %184 = tpu.reciprocal %183 {approx = true} : vector<8x1xf32> -> vector<8x1xf32>
    %185 = vector.broadcast %184 : vector<8x1xf32> to vector<8x8xf32>
    %186 = arith.mulf %181, %185 : vector<8x8xf32>
    %187 = arith.truncf %186 : vector<8x8xf32> to vector<8x8xbf16>
    %188 = arith.truncf %171 : vector<8x8xf32> to vector<8x8xbf16>
    %cst_99 = arith.constant dense<0.000000e+00> : vector<8x8xf32>
    %189 = tpu.matmul %187, %188, %cst_99 {dimension_numbers = #tpu.dot_dimension_numbers<[1], [0], [0], [1], [0, 0, 1, 1], [], []>} : vector<8x8xbf16>, vector<8x8xbf16>, vector<8x8xf32> -> vector<8x8xf32>
    %190 = arith.truncf %189 : vector<8x8xf32> to vector<8x8xbf16>
    %c3_100 = arith.constant 3 : index
    %c0_101 = arith.constant 0 : index
    %c0_102 = arith.constant 0 : index
    %191 = vector.load %arg11[%c3_100, %c0_101, %c0_102] : memref<4x8x32xbf16, #tpu.memory_space<vmem>>, vector<1x8x32xbf16>
    %192 = vector.shape_cast %191 : vector<1x8x32xbf16> to vector<8x32xbf16>
    %cst_103 = arith.constant dense<0.000000e+00> : vector<8x32xf32>
    %193 = tpu.matmul %190, %192, %cst_103 {dimension_numbers = #tpu.dot_dimension_numbers<[1], [0], [0], [1], [0, 0, 1, 1], [], []>} : vector<8x8xbf16>, vector<8x32xbf16>, vector<8x32xf32> -> vector<8x32xf32>
    %194 = arith.addf %160, %193 : vector<8x32xf32>
    %c0_104 = arith.constant 0 : index
    %c0_105 = arith.constant 0 : index
    %195 = vector.load %arg12[%c0_104, %c0_105] : memref<1x32xf32, #tpu.memory_space<vmem>>, vector<1x32xf32>
    %196 = vector.broadcast %195 : vector<1x32xf32> to vector<8x32xf32>
    %197 = arith.addf %194, %196 : vector<8x32xf32>
    %198 = arith.addf %1, %197 : vector<8x32xf32>
    %c0_106 = arith.constant 0 : index
    %c0_107 = arith.constant 0 : index
    %199 = vector.load %arg6[%c0_106, %c0_107] : memref<1x32xf32, #tpu.memory_space<vmem>>, vector<1x32xf32>
    %c0_108 = arith.constant 0 : index
    %c0_109 = arith.constant 0 : index
    %200 = vector.load %arg7[%c0_108, %c0_109] : memref<1x32xf32, #tpu.memory_space<vmem>>, vector<1x32xf32>
    %cst_110 = arith.constant dense<0.000000e+00> : vector<8xf32>
    %201 = vector.multi_reduction <add>, %198, %cst_110 [1] : vector<8x32xf32> to vector<8xf32>
    %202 = vector.shape_cast %201 : vector<8xf32> to vector<8x1xf32>
    %cst_111 = arith.constant 3.200000e+01 : f32
    %203 = vector.broadcast %cst_111 : f32 to vector<8x1xf32>
    %204 = arith.divf %202, %203 : vector<8x1xf32>
    %205 = vector.broadcast %204 : vector<8x1xf32> to vector<8x32xf32>
    %206 = arith.subf %198, %205 : vector<8x32xf32>
    %207 = arith.mulf %206, %206 : vector<8x32xf32>
    %cst_112 = arith.constant dense<0.000000e+00> : vector<8xf32>
    %208 = vector.multi_reduction <add>, %207, %cst_112 [1] : vector<8x32xf32> to vector<8xf32>
    %209 = vector.shape_cast %208 : vector<8xf32> to vector<8x1xf32>
    %cst_113 = arith.constant 3.200000e+01 : f32
    %210 = vector.broadcast %cst_113 : f32 to vector<8x1xf32>
    %211 = arith.divf %209, %210 : vector<8x1xf32>
    %212 = vector.broadcast %204 : vector<8x1xf32> to vector<8x32xf32>
    %213 = arith.subf %198, %212 : vector<8x32xf32>
    %cst_114 = arith.constant 9.99999974E-6 : f32
    %214 = vector.broadcast %cst_114 : f32 to vector<8x1xf32>
    %215 = arith.addf %211, %214 : vector<8x1xf32>
    %216 = math.rsqrt %215 : vector<8x1xf32>
    %217 = vector.broadcast %216 : vector<8x1xf32> to vector<8x32xf32>
    %218 = arith.mulf %213, %217 : vector<8x32xf32>
    %219 = vector.broadcast %199 : vector<1x32xf32> to vector<8x32xf32>
    %220 = arith.mulf %219, %218 : vector<8x32xf32>
    %221 = vector.broadcast %200 : vector<1x32xf32> to vector<8x32xf32>
    %222 = arith.addf %220, %221 : vector<8x32xf32>
    %223 = arith.truncf %222 : vector<8x32xf32> to vector<8x32xbf16>
    %cst_115 = arith.constant 0.000000e+00 : f32
    %224 = vector.broadcast %cst_115 : f32 to vector<8x32xf32>
    %c0_116 = arith.constant 0 : index
    %c0_117 = arith.constant 0 : index
    %225 = vector.load %arg13[%c0_116, %c0_117] : memref<32x128xbf16, #tpu.memory_space<vmem>>, vector<32x128xbf16>
    %cst_118 = arith.constant dense<0.000000e+00> : vector<8x128xf32>
    %226 = tpu.matmul %223, %225, %cst_118 {dimension_numbers = #tpu.dot_dimension_numbers<[1], [0], [0], [1], [0, 0, 1, 1], [], []>} : vector<8x32xbf16>, vector<32x128xbf16>, vector<8x128xf32> -> vector<8x128xf32>
    %c0_119 = arith.constant 0 : index
    %c0_120 = arith.constant 0 : index
    %227 = vector.load %arg14[%c0_119, %c0_120] : memref<1x128xf32, #tpu.memory_space<vmem>>, vector<1x128xf32>
    %228 = vector.broadcast %227 : vector<1x128xf32> to vector<8x128xf32>
    %229 = arith.addf %226, %228 : vector<8x128xf32>
    %cst_121 = arith.constant 0.636619746 : f32
    %230 = math.sqrt %cst_121 : f32
    %cst_122 = arith.constant 8.000000e-01 : f32
    %231 = vector.broadcast %cst_122 : f32 to vector<8x128xf32>
    %232 = arith.mulf %231, %229 : vector<8x128xf32>
    %cst_123 = arith.constant 4.471500e-02 : f32
    %233 = vector.broadcast %cst_123 : f32 to vector<8x128xf32>
    %234 = arith.mulf %233, %229 : vector<8x128xf32>
    %235 = arith.mulf %234, %229 : vector<8x128xf32>
    %236 = arith.mulf %235, %229 : vector<8x128xf32>
    %237 = arith.addf %229, %236 : vector<8x128xf32>
    %238 = vector.broadcast %230 : f32 to vector<8x128xf32>
    %239 = arith.mulf %238, %237 : vector<8x128xf32>
    %240 = math.tanh %239 : vector<8x128xf32>
    %cst_124 = arith.constant 1.000000e+00 : f32
    %241 = vector.broadcast %cst_124 : f32 to vector<8x128xf32>
    %242 = arith.addf %241, %240 : vector<8x128xf32>
    %243 = arith.mulf %232, %242 : vector<8x128xf32>
    %244 = arith.truncf %243 : vector<8x128xf32> to vector<8x128xbf16>
    %c0_125 = arith.constant 0 : index
    %c0_126 = arith.constant 0 : index
    %245 = vector.load %arg15[%c0_125, %c0_126] : memref<128x32xbf16, #tpu.memory_space<vmem>>, vector<128x32xbf16>
    %cst_127 = arith.constant dense<0.000000e+00> : vector<8x32xf32>
    %246 = tpu.matmul %244, %245, %cst_127 {dimension_numbers = #tpu.dot_dimension_numbers<[1], [0], [0], [1], [0, 0, 1, 1], [], []>} : vector<8x128xbf16>, vector<128x32xbf16>, vector<8x32xf32> -> vector<8x32xf32>
    %247 = arith.addf %224, %246 : vector<8x32xf32>
    %c0_128 = arith.constant 0 : index
    %c0_129 = arith.constant 0 : index
    %248 = vector.load %arg16[%c0_128, %c0_129] : memref<1x32xf32, #tpu.memory_space<vmem>>, vector<1x32xf32>
    %249 = vector.broadcast %248 : vector<1x32xf32> to vector<8x32xf32>
    %250 = arith.addf %247, %249 : vector<8x32xf32>
    %251 = arith.addf %198, %250 : vector<8x32xf32>
    %c0_130 = arith.constant 0 : index
    %c0_131 = arith.constant 0 : index
    %c0_132 = arith.constant 0 : index
    %252 = vector.load %arg17[%c0_130, %c0_131, %c0_132] : memref<1x8x32xf32, #tpu.memory_space<vmem>>, vector<1x8x32xf32>
    %253 = vector.shape_cast %252 : vector<1x8x32xf32> to vector<8x32xf32>
    %254 = vector.shape_cast %251 : vector<8x32xf32> to vector<1x8x32xf32>
    tpu.vector_store %arg17[%c0_130, %c0_131, %c0_132], %254 {strides = array<i32>} : memref<1x8x32xf32, #tpu.memory_space<vmem>>, vector<1x8x32xf32>,
    return
  }
  func.func @transform_0(%arg0: i32, %arg1: i32) -> (i32, i32, i32) {
    %c0_i32 = arith.constant 0 : i32
    %c0_i32_0 = arith.constant 0 : i32
    return %arg0, %arg1, %c0_i32 : i32, i32, i32
  }
  func.func @transform_1(%arg0: i32, %arg1: i32) -> (i32, i32, i32) {
    %c0_i32 = arith.constant 0 : i32
    %c0_i32_0 = arith.constant 0 : i32
    %c0_i32_1 = arith.constant 0 : i32
    return %arg0, %c0_i32, %c0_i32_0 : i32, i32, i32
  }
  func.func @transform_2(%arg0: i32, %arg1: i32) -> (i32, i32) {
    %c0_i32 = arith.constant 0 : i32
    %c0_i32_0 = arith.constant 0 : i32
    %c0_i32_1 = arith.constant 0 : i32
    return %c0_i32, %c0_i32_0 : i32, i32
  }
  func.func @transform_3(%arg0: i32, %arg1: i32) -> (i32, i32) {
    %c0_i32 = arith.constant 0 : i32
    %c0_i32_0 = arith.constant 0 : i32
    %c0_i32_1 = arith.constant 0 : i32
    return %c0_i32, %c0_i32_0 : i32, i32
  }
  func.func @transform_4(%arg0: i32, %arg1: i32) -> (i32, i32) {
    %c0_i32 = arith.constant 0 : i32
    %c0_i32_0 = arith.constant 0 : i32
    %c0_i32_1 = arith.constant 0 : i32
    return %c0_i32, %c0_i32_0 : i32, i32
  }
  func.func @transform_5(%arg0: i32, %arg1: i32) -> (i32, i32) {
    %c0_i32 = arith.constant 0 : i32
    %c0_i32_0 = arith.constant 0 : i32
    %c0_i32_1 = arith.constant 0 : i32
    return %c0_i32, %c0_i32_0 : i32, i32
  }
  func.func @transform_6(%arg0: i32, %arg1: i32) -> (i32, i32, i32) {
    %c0_i32 = arith.constant 0 : i32
    %c0_i32_0 = arith.constant 0 : i32
    %c0_i32_1 = arith.constant 0 : i32
    %c0_i32_2 = arith.constant 0 : i32
    return %c0_i32, %c0_i32_0, %c0_i32_1 : i32, i32, i32
  }
  func.func @transform_7(%arg0: i32, %arg1: i32) -> (i32, i32, i32) {
    %c0_i32 = arith.constant 0 : i32
    %c0_i32_0 = arith.constant 0 : i32
    %c0_i32_1 = arith.constant 0 : i32
    %c0_i32_2 = arith.constant 0 : i32
    return %c0_i32, %c0_i32_0, %c0_i32_1 : i32, i32, i32
  }
  func.func @transform_8(%arg0: i32, %arg1: i32) -> (i32, i32, i32) {
    %c0_i32 = arith.constant 0 : i32
    %c0_i32_0 = arith.constant 0 : i32
    %c0_i32_1 = arith.constant 0 : i32
    %c0_i32_2 = arith.constant 0 : i32
    return %c0_i32, %c0_i32_0, %c0_i32_1 : i32, i32, i32
  }
  func.func @transform_9(%arg0: i32, %arg1: i32) -> (i32, i32, i32) {
    %c0_i32 = arith.constant 0 : i32
    %c0_i32_0 = arith.constant 0 : i32
    %c0_i32_1 = arith.constant 0 : i32
    %c0_i32_2 = arith.constant 0 : i32
    return %c0_i32, %c0_i32_0, %c0_i32_1 : i32, i32, i32
  }
  func.func @transform_10(%arg0: i32, %arg1: i32) -> (i32, i32) {
    %c0_i32 = arith.constant 0 : i32
    %c0_i32_0 = arith.constant 0 : i32
    %c0_i32_1 = arith.constant 0 : i32
    return %c0_i32, %c0_i32_0 : i32, i32
  }
  func.func @transform_11(%arg0: i32, %arg1: i32) -> (i32, i32) {
    %c0_i32 = arith.constant 0 : i32
    %c0_i32_0 = arith.constant 0 : i32
    %c0_i32_1 = arith.constant 0 : i32
    return %c0_i32, %c0_i32_0 : i32, i32
  }
  func.func @transform_12(%arg0: i32, %arg1: i32) -> (i32, i32) {
    %c0_i32 = arith.constant 0 : i32
    %c0_i32_0 = arith.constant 0 : i32
    %c0_i32_1 = arith.constant 0 : i32
    return %c0_i32, %c0_i32_0 : i32, i32
  }
  func.func @transform_13(%arg0: i32, %arg1: i32) -> (i32, i32) {
    %c0_i32 = arith.constant 0 : i32
    %c0_i32_0 = arith.constant 0 : i32
    %c0_i32_1 = arith.constant 0 : i32
    return %c0_i32, %c0_i32_0 : i32, i32
  }
  func.func @transform_14(%arg0: i32, %arg1: i32) -> (i32, i32) {
    %c0_i32 = arith.constant 0 : i32
    %c0_i32_0 = arith.constant 0 : i32
    %c0_i32_1 = arith.constant 0 : i32
    return %c0_i32, %c0_i32_0 : i32, i32
  }
  func.func @transform_15(%arg0: i32, %arg1: i32) -> (i32, i32, i32) {
    %c0_i32 = arith.constant 0 : i32
    %c0_i32_0 = arith.constant 0 : i32
    return %arg0, %arg1, %c0_i32 : i32, i32, i32
  }
}

module attributes {stable_mosaic.version = 11 : i64} {
  func.func @transformer_block_kernel(%arg0: i32, %arg1: i32, %arg2: memref<1x8x32xf32, #tpu.memory_space<vmem>>, %arg3: memref<1x8x32xf32, #tpu.memory_space<vmem>>, %arg4: memref<1x32xf32, #tpu.memory_space<vmem>>, %arg5: memref<1x32xf32, #tpu.memory_space<vmem>>, %arg6: memref<1x32xf32, #tpu.memory_space<vmem>>, %arg7: memref<1x32xf32, #tpu.memory_space<vmem>>, %arg8: memref<4x32x8xbf16, #tpu.memory_space<vmem>>, %arg9: memref<4x32x8xbf16, #tpu.memory_space<vmem>>, %arg10: memref<4x32x8xbf16, #tpu.memory_space<vmem>>, %arg11: memref<4x8x32xbf16, #tpu.memory_space<vmem>>, %arg12: memref<1x32xf32, #tpu.memory_space<vmem>>, %arg13: memref<32x128xbf16, #tpu.memory_space<vmem>>, %arg14: memref<1x128xf32, #tpu.memory_space<vmem>>, %arg15: memref<128x32xbf16, #tpu.memory_space<vmem>>, %arg16: memref<1x32xf32, #tpu.memory_space<vmem>>, %arg17: memref<1x8x32xf32, #tpu.memory_space<vmem>>) attributes {dimension_semantics = [#tpu.dimension_semantics<parallel>, #tpu.dimension_semantics<parallel>], iteration_bounds = array<i64: 2, 1>, scalar_prefetch = 0 : i64, scratch_operands = 0 : i64, tpu.core_type = #tpu.core_type<tc>, window_params = [{transform_indices = @transform_0, window_bounds = array<i64: 1, 8, 32>}, {transform_indices = @transform_1, window_bounds = array<i64: 1, 8, 32>}, {pipeline_mode = #tpu.pipeline_mode<synchronous>, transform_indices = @transform_2, window_bounds = array<i64: 1, 32>}, {pipeline_mode = #tpu.pipeline_mode<synchronous>, transform_indices = @transform_3, window_bounds = array<i64: 1, 32>}, {pipeline_mode = #tpu.pipeline_mode<synchronous>, transform_indices = @transform_4, window_bounds = array<i64: 1, 32>}, {pipeline_mode = #tpu.pipeline_mode<synchronous>, transform_indices = @transform_5, window_bounds = array<i64: 1, 32>}, {pipeline_mode = #tpu.pipeline_mode<synchronous>, transform_indices = @transform_6, window_bounds = array<i64: 4, 32, 8>}, {pipeline_mode = #tpu.pipeline_mode<synchronous>, transform_indices = @transform_7, window_bounds = array<i64: 4, 32, 8>}, {pipeline_mode = #tpu.pipeline_mode<synchronous>, transform_indices = @transform_8, window_bounds = array<i64: 4, 32, 8>}, {pipeline_mode = #tpu.pipeline_mode<synchronous>, transform_indices = @transform_9, window_bounds = array<i64: 4, 8, 32>}, {pipeline_mode = #tpu.pipeline_mode<synchronous>, transform_indices = @transform_10, window_bounds = array<i64: 1, 32>}, {pipeline_mode = #tpu.pipeline_mode<synchronous>, transform_indices = @transform_11, window_bounds = array<i64: 32, 128>}, {pipeline_mode = #tpu.pipeline_mode<synchronous>, transform_indices = @transform_12, window_bounds = array<i64: 1, 128>}, {pipeline_mode = #tpu.pipeline_mode<synchronous>, transform_indices = @transform_13, window_bounds = array<i64: 128, 32>}, {pipeline_mode = #tpu.pipeline_mode<synchronous>, transform_indices = @transform_14, window_bounds = array<i64: 1, 32>}, {transform_indices = @transform_15, window_bounds = array<i64: 1, 8, 32>}]} {
    %c0 = arith.constant 0 : index
    %c0_0 = arith.constant 0 : index
    %c0_1 = arith.constant 0 : index
    %0 = vector.load %arg2[%c0, %c0_0, %c0_1] : memref<1x8x32xf32, #tpu.memory_space<vmem>>, vector<1x8x32xf32>
    %1 = vector.shape_cast %0 : vector<1x8x32xf32> to vector<8x32xf32>
    %c0_2 = arith.constant 0 : index
    %c0_3 = arith.constant 0 : index
    %c0_4 = arith.constant 0 : index
    %2 = vector.load %arg3[%c0_2, %c0_3, %c0_4] : memref<1x8x32xf32, #tpu.memory_space<vmem>>, vector<1x8x32xf32>
    %3 = vector.shape_cast %2 : vector<1x8x32xf32> to vector<8x32xf32>
    %c0_5 = arith.constant 0 : index
    %c0_6 = arith.constant 0 : index
    %4 = vector.load %arg4[%c0_5, %c0_6] : memref<1x32xf32, #tpu.memory_space<vmem>>, vector<1x32xf32>
    %c0_7 = arith.constant 0 : index
    %c0_8 = arith.constant 0 : index
    %5 = vector.load %arg5[%c0_7, %c0_8] : memref<1x32xf32, #tpu.memory_space<vmem>>, vector<1x32xf32>
    %cst = arith.constant dense<0.000000e+00> : vector<8xf32>
    %6 = vector.multi_reduction <add>, %1, %cst [1] : vector<8x32xf32> to vector<8xf32>
    %7 = vector.shape_cast %6 : vector<8xf32> to vector<8x1xf32>
    %cst_9 = arith.constant 3.200000e+01 : f32
    %8 = vector.broadcast %cst_9 : f32 to vector<8x1xf32>
    %9 = arith.divf %7, %8 : vector<8x1xf32>
    %10 = vector.broadcast %9 : vector<8x1xf32> to vector<8x32xf32>
    %11 = arith.subf %1, %10 : vector<8x32xf32>
    %12 = arith.mulf %11, %11 : vector<8x32xf32>
    %cst_10 = arith.constant dense<0.000000e+00> : vector<8xf32>
    %13 = vector.multi_reduction <add>, %12, %cst_10 [1] : vector<8x32xf32> to vector<8xf32>
    %14 = vector.shape_cast %13 : vector<8xf32> to vector<8x1xf32>
    %cst_11 = arith.constant 3.200000e+01 : f32
    %15 = vector.broadcast %cst_11 : f32 to vector<8x1xf32>
    %16 = arith.divf %14, %15 : vector<8x1xf32>
    %17 = vector.broadcast %9 : vector<8x1xf32> to vector<8x32xf32>
    %18 = arith.subf %1, %17 : vector<8x32xf32>
    %cst_12 = arith.constant 9.99999974E-6 : f32
    %19 = vector.broadcast %cst_12 : f32 to vector<8x1xf32>
    %20 = arith.addf %16, %19 : vector<8x1xf32>
    %21 = math.rsqrt %20 : vector<8x1xf32>
    %22 = vector.broadcast %21 : vector<8x1xf32> to vector<8x32xf32>
    %23 = arith.mulf %18, %22 : vector<8x32xf32>
    %24 = vector.broadcast %4 : vector<1x32xf32> to vector<8x32xf32>
    %25 = arith.mulf %24, %23 : vector<8x32xf32>
    %26 = vector.broadcast %5 : vector<1x32xf32> to vector<8x32xf32>
    %27 = arith.addf %25, %26 : vector<8x32xf32>
    %28 = arith.truncf %27 : vector<8x32xf32> to vector<8x32xbf16>
    %cst_13 = arith.constant dense<0.000000e+00> : vector<8xf32>
    %29 = vector.multi_reduction <add>, %3, %cst_13 [1] : vector<8x32xf32> to vector<8xf32>
    %30 = vector.shape_cast %29 : vector<8xf32> to vector<8x1xf32>
    %cst_14 = arith.constant 3.200000e+01 : f32
    %31 = vector.broadcast %cst_14 : f32 to vector<8x1xf32>
    %32 = arith.divf %30, %31 : vector<8x1xf32>
    %33 = vector.broadcast %32 : vector<8x1xf32> to vector<8x32xf32>
    %34 = arith.subf %3, %33 : vector<8x32xf32>
    %35 = arith.mulf %34, %34 : vector<8x32xf32>
    %cst_15 = arith.constant dense<0.000000e+00> : vector<8xf32>
    %36 = vector.multi_reduction <add>, %35, %cst_15 [1] : vector<8x32xf32> to vector<8xf32>
    %37 = vector.shape_cast %36 : vector<8xf32> to vector<8x1xf32>
    %cst_16 = arith.constant 3.200000e+01 : f32
    %38 = vector.broadcast %cst_16 : f32 to vector<8x1xf32>
    %39 = arith.divf %37, %38 : vector<8x1xf32>
    %40 = vector.broadcast %32 : vector<8x1xf32> to vector<8x32xf32>
    %41 = arith.subf %3, %40 : vector<8x32xf32>
    %cst_17 = arith.constant 9.99999974E-6 : f32
    %42 = vector.broadcast %cst_17 : f32 to vector<8x1xf32>
    %43 = arith.addf %39, %42 : vector<8x1xf32>
    %44 = math.rsqrt %43 : vector<8x1xf32>
    %45 = vector.broadcast %44 : vector<8x1xf32> to vector<8x32xf32>
    %46 = arith.mulf %41, %45 : vector<8x32xf32>
    %47 = vector.broadcast %4 : vector<1x32xf32> to vector<8x32xf32>
    %48 = arith.mulf %47, %46 : vector<8x32xf32>
    %49 = vector.broadcast %5 : vector<1x32xf32> to vector<8x32xf32>
    %50 = arith.addf %48, %49 : vector<8x32xf32>
    %51 = arith.truncf %50 : vector<8x32xf32> to vector<8x32xbf16>
    %c8_i32 = arith.constant 8 : i32
    %52 = arith.muli %arg1, %c8_i32 : i32
    %53 = tpu.iota {dimensions = array<i32: 0>} : vector<8x8xi32>
    %54 = vector.broadcast %52 : i32 to vector<8x8xi32>
    %55 = arith.addi %54, %53 : vector<8x8xi32>
    %56 = tpu.iota {dimensions = array<i32: 1>} : vector<8x8xi32>
    %57 = arith.cmpi sgt, %56, %55 : vector<8x8xi32>
    %cst_18 = arith.constant 0.000000e+00 : f32
    %58 = vector.broadcast %cst_18 : f32 to vector<8x32xf32>
    %c0_19 = arith.constant 0 : index
    %c0_20 = arith.constant 0 : index
    %c0_21 = arith.constant 0 : index
    %59 = vector.load %arg8[%c0_19, %c0_20, %c0_21] : memref<4x32x8xbf16, #tpu.memory_space<vmem>>, vector<1x32x8xbf16>
    %60 = vector.shape_cast %59 : vector<1x32x8xbf16> to vector<32x8xbf16>
    %cst_22 = arith.constant dense<0.000000e+00> : vector<8x8xf32>
    %61 = tpu.matmul %28, %60, %cst_22 {dimension_numbers = #tpu.dot_dimension_numbers<[1], [0], [0], [1], [0, 0, 1, 1], [], []>} : vector<8x32xbf16>, vector<32x8xbf16>, vector<8x8xf32> -> vector<8x8xf32>
    %cst_23 = arith.constant 0.353553385 : f32
    %62 = vector.broadcast %cst_23 : f32 to vector<8x8xf32>
    %63 = arith.mulf %61, %62 : vector<8x8xf32>
    %c0_24 = arith.constant 0 : index
    %c0_25 = arith.constant 0 : index
    %c0_26 = arith.constant 0 : index
    %64 = vector.load %arg9[%c0_24, %c0_25, %c0_26] : memref<4x32x8xbf16, #tpu.memory_space<vmem>>, vector<1x32x8xbf16>
    %65 = vector.shape_cast %64 : vector<1x32x8xbf16> to vector<32x8xbf16>
    %cst_27 = arith.constant dense<0.000000e+00> : vector<8x8xf32>
    %66 = tpu.matmul %51, %65, %cst_27 {dimension_numbers = #tpu.dot_dimension_numbers<[1], [0], [0], [1], [0, 0, 1, 1], [], []>} : vector<8x32xbf16>, vector<32x8xbf16>, vector<8x8xf32> -> vector<8x8xf32>
    %c0_28 = arith.constant 0 : index
    %c0_29 = arith.constant 0 : index
    %c0_30 = arith.constant 0 : index
    %67 = vector.load %arg10[%c0_28, %c0_29, %c0_30] : memref<4x32x8xbf16, #tpu.memory_space<vmem>>, vector<1x32x8xbf16>
    %68 = vector.shape_cast %67 : vector<1x32x8xbf16> to vector<32x8xbf16>
    %cst_31 = arith.constant dense<0.000000e+00> : vector<8x8xf32>
    %69 = tpu.matmul %51, %68, %cst_31 {dimension_numbers = #tpu.dot_dimension_numbers<[1], [0], [0], [1], [0, 0, 1, 1], [], []>} : vector<8x32xbf16>, vector<32x8xbf16>, vector<8x8xf32> -> vector<8x8xf32>
    %70 = arith.truncf %63 : vector<8x8xf32> to vector<8x8xbf16>
    %71 = arith.truncf %66 : vector<8x8xf32> to vector<8x8xbf16>
    %cst_32 = arith.constant dense<0.000000e+00> : vector<8x8xf32>
    %72 = tpu.matmul %70, %71, %cst_32 {dimension_numbers = #tpu.dot_dimension_numbers<[1], [1], [0], [0], [0, 0, 1, 0], [], []>} : vector<8x8xbf16>, vector<8x8xbf16>, vector<8x8xf32> -> vector<8x8xf32>
    %cst_33 = arith.constant -1.000000e+30 : f32
    %73 = vector.broadcast %cst_33 : f32 to vector<8x8xf32>
    %74 = arith.select %57, %73, %72 : vector<8x8xi1>, vector<8x8xf32>
    %cst_34 = arith.constant dense<0xFF800000> : vector<8xf32>
    %75 = vector.multi_reduction <maximumf>, %74, %cst_34 [1] : vector<8x8xf32> to vector<8xf32>
    %76 = vector.shape_cast %75 : vector<8xf32> to vector<8x1xf32>
    %77 = vector.broadcast %76 : vector<8x1xf32> to vector<8x8xf32>
    %78 = arith.subf %74, %77 : vector<8x8xf32>
    %79 = math.exp %78 : vector<8x8xf32>
    %cst_35 = arith.constant dense<0.000000e+00> : vector<8xf32>
    %80 = vector.multi_reduction <add>, %79, %cst_35 [1] : vector<8x8xf32> to vector<8xf32>
    %81 = vector.shape_cast %80 : vector<8xf32> to vector<8x1xf32>
    %82 = tpu.reciprocal %81 {approx = true} : vector<8x1xf32> -> vector<8x1xf32>
    %83 = vector.broadcast %82 : vector<8x1xf32> to vector<8x8xf32>
    %84 = arith.mulf %79, %83 : vector<8x8xf32>
    %85 = arith.truncf %84 : vector<8x8xf32> to vector<8x8xbf16>
    %86 = arith.truncf %69 : vector<8x8xf32> to vector<8x8xbf16>
    %cst_36 = arith.constant dense<0.000000e+00> : vector<8x8xf32>
    %87 = tpu.matmul %85, %86, %cst_36 {dimension_numbers = #tpu.dot_dimension_numbers<[1], [0], [0], [1], [0, 0, 1, 1], [], []>} : vector<8x8xbf16>, vector<8x8xbf16>, vector<8x8xf32> -> vector<8x8xf32>
    %88 = arith.truncf %87 : vector<8x8xf32> to vector<8x8xbf16>
    %c0_37 = arith.constant 0 : index
    %c0_38 = arith.constant 0 : index
    %c0_39 = arith.constant 0 : index
    %89 = vector.load %arg11[%c0_37, %c0_38, %c0_39] : memref<4x8x32xbf16, #tpu.memory_space<vmem>>, vector<1x8x32xbf16>
    %90 = vector.shape_cast %89 : vector<1x8x32xbf16> to vector<8x32xbf16>
    %cst_40 = arith.constant dense<0.000000e+00> : vector<8x32xf32>
    %91 = tpu.matmul %88, %90, %cst_40 {dimension_numbers = #tpu.dot_dimension_numbers<[1], [0], [0], [1], [0, 0, 1, 1], [], []>} : vector<8x8xbf16>, vector<8x32xbf16>, vector<8x32xf32> -> vector<8x32xf32>
    %92 = arith.addf %58, %91 : vector<8x32xf32>
    %c1 = arith.constant 1 : index
    %c0_41 = arith.constant 0 : index
    %c0_42 = arith.constant 0 : index
    %93 = vector.load %arg8[%c1, %c0_41, %c0_42] : memref<4x32x8xbf16, #tpu.memory_space<vmem>>, vector<1x32x8xbf16>
    %94 = vector.shape_cast %93 : vector<1x32x8xbf16> to vector<32x8xbf16>
    %cst_43 = arith.constant dense<0.000000e+00> : vector<8x8xf32>
    %95 = tpu.matmul %28, %94, %cst_43 {dimension_numbers = #tpu.dot_dimension_numbers<[1], [0], [0], [1], [0, 0, 1, 1], [], []>} : vector<8x32xbf16>, vector<32x8xbf16>, vector<8x8xf32> -> vector<8x8xf32>
    %cst_44 = arith.constant 0.353553385 : f32
    %96 = vector.broadcast %cst_44 : f32 to vector<8x8xf32>
    %97 = arith.mulf %95, %96 : vector<8x8xf32>
    %c1_45 = arith.constant 1 : index
    %c0_46 = arith.constant 0 : index
    %c0_47 = arith.constant 0 : index
    %98 = vector.load %arg9[%c1_45, %c0_46, %c0_47] : memref<4x32x8xbf16, #tpu.memory_space<vmem>>, vector<1x32x8xbf16>
    %99 = vector.shape_cast %98 : vector<1x32x8xbf16> to vector<32x8xbf16>
    %cst_48 = arith.constant dense<0.000000e+00> : vector<8x8xf32>
    %100 = tpu.matmul %51, %99, %cst_48 {dimension_numbers = #tpu.dot_dimension_numbers<[1], [0], [0], [1], [0, 0, 1, 1], [], []>} : vector<8x32xbf16>, vector<32x8xbf16>, vector<8x8xf32> -> vector<8x8xf32>
    %c1_49 = arith.constant 1 : index
    %c0_50 = arith.constant 0 : index
    %c0_51 = arith.constant 0 : index
    %101 = vector.load %arg10[%c1_49, %c0_50, %c0_51] : memref<4x32x8xbf16, #tpu.memory_space<vmem>>, vector<1x32x8xbf16>
    %102 = vector.shape_cast %101 : vector<1x32x8xbf16> to vector<32x8xbf16>
    %cst_52 = arith.constant dense<0.000000e+00> : vector<8x8xf32>
    %103 = tpu.matmul %51, %102, %cst_52 {dimension_numbers = #tpu.dot_dimension_numbers<[1], [0], [0], [1], [0, 0, 1, 1], [], []>} : vector<8x32xbf16>, vector<32x8xbf16>, vector<8x8xf32> -> vector<8x8xf32>
    %104 = arith.truncf %97 : vector<8x8xf32> to vector<8x8xbf16>
    %105 = arith.truncf %100 : vector<8x8xf32> to vector<8x8xbf16>
    %cst_53 = arith.constant dense<0.000000e+00> : vector<8x8xf32>
    %106 = tpu.matmul %104, %105, %cst_53 {dimension_numbers = #tpu.dot_dimension_numbers<[1], [1], [0], [0], [0, 0, 1, 0], [], []>} : vector<8x8xbf16>, vector<8x8xbf16>, vector<8x8xf32> -> vector<8x8xf32>
    %cst_54 = arith.constant -1.000000e+30 : f32
    %107 = vector.broadcast %cst_54 : f32 to vector<8x8xf32>
    %108 = arith.select %57, %107, %106 : vector<8x8xi1>, vector<8x8xf32>
    %cst_55 = arith.constant dense<0xFF800000> : vector<8xf32>
    %109 = vector.multi_reduction <maximumf>, %108, %cst_55 [1] : vector<8x8xf32> to vector<8xf32>
    %110 = vector.shape_cast %109 : vector<8xf32> to vector<8x1xf32>
    %111 = vector.broadcast %110 : vector<8x1xf32> to vector<8x8xf32>
    %112 = arith.subf %108, %111 : vector<8x8xf32>
    %113 = math.exp %112 : vector<8x8xf32>
    %cst_56 = arith.constant dense<0.000000e+00> : vector<8xf32>
    %114 = vector.multi_reduction <add>, %113, %cst_56 [1] : vector<8x8xf32> to vector<8xf32>
    %115 = vector.shape_cast %114 : vector<8xf32> to vector<8x1xf32>
    %116 = tpu.reciprocal %115 {approx = true} : vector<8x1xf32> -> vector<8x1xf32>
    %117 = vector.broadcast %116 : vector<8x1xf32> to vector<8x8xf32>
    %118 = arith.mulf %113, %117 : vector<8x8xf32>
    %119 = arith.truncf %118 : vector<8x8xf32> to vector<8x8xbf16>
    %120 = arith.truncf %103 : vector<8x8xf32> to vector<8x8xbf16>
    %cst_57 = arith.constant dense<0.000000e+00> : vector<8x8xf32>
    %121 = tpu.matmul %119, %120, %cst_57 {dimension_numbers = #tpu.dot_dimension_numbers<[1], [0], [0], [1], [0, 0, 1, 1], [], []>} : vector<8x8xbf16>, vector<8x8xbf16>, vector<8x8xf32> -> vector<8x8xf32>
    %122 = arith.truncf %121 : vector<8x8xf32> to vector<8x8xbf16>
    %c1_58 = arith.constant 1 : index
    %c0_59 = arith.constant 0 : index
    %c0_60 = arith.constant 0 : index
    %123 = vector.load %arg11[%c1_58, %c0_59, %c0_60] : memref<4x8x32xbf16, #tpu.memory_space<vmem>>, vector<1x8x32xbf16>
    %124 = vector.shape_cast %123 : vector<1x8x32xbf16> to vector<8x32xbf16>
    %cst_61 = arith.constant dense<0.000000e+00> : vector<8x32xf32>
    %125 = tpu.matmul %122, %124, %cst_61 {dimension_numbers = #tpu.dot_dimension_numbers<[1], [0], [0], [1], [0, 0, 1, 1], [], []>} : vector<8x8xbf16>, vector<8x32xbf16>, vector<8x32xf32> -> vector<8x32xf32>
    %126 = arith.addf %92, %125 : vector<8x32xf32>
    %c2 = arith.constant 2 : index
    %c0_62 = arith.constant 0 : index
    %c0_63 = arith.constant 0 : index
    %127 = vector.load %arg8[%c2, %c0_62, %c0_63] : memref<4x32x8xbf16, #tpu.memory_space<vmem>>, vector<1x32x8xbf16>
    %128 = vector.shape_cast %127 : vector<1x32x8xbf16> to vector<32x8xbf16>
    %cst_64 = arith.constant dense<0.000000e+00> : vector<8x8xf32>
    %129 = tpu.matmul %28, %128, %cst_64 {dimension_numbers = #tpu.dot_dimension_numbers<[1], [0], [0], [1], [0, 0, 1, 1], [], []>} : vector<8x32xbf16>, vector<32x8xbf16>, vector<8x8xf32> -> vector<8x8xf32>
    %cst_65 = arith.constant 0.353553385 : f32
    %130 = vector.broadcast %cst_65 : f32 to vector<8x8xf32>
    %131 = arith.mulf %129, %130 : vector<8x8xf32>
    %c2_66 = arith.constant 2 : index
    %c0_67 = arith.constant 0 : index
    %c0_68 = arith.constant 0 : index
    %132 = vector.load %arg9[%c2_66, %c0_67, %c0_68] : memref<4x32x8xbf16, #tpu.memory_space<vmem>>, vector<1x32x8xbf16>
    %133 = vector.shape_cast %132 : vector<1x32x8xbf16> to vector<32x8xbf16>
    %cst_69 = arith.constant dense<0.000000e+00> : vector<8x8xf32>
    %134 = tpu.matmul %51, %133, %cst_69 {dimension_numbers = #tpu.dot_dimension_numbers<[1], [0], [0], [1], [0, 0, 1, 1], [], []>} : vector<8x32xbf16>, vector<32x8xbf16>, vector<8x8xf32> -> vector<8x8xf32>
    %c2_70 = arith.constant 2 : index
    %c0_71 = arith.constant 0 : index
    %c0_72 = arith.constant 0 : index
    %135 = vector.load %arg10[%c2_70, %c0_71, %c0_72] : memref<4x32x8xbf16, #tpu.memory_space<vmem>>, vector<1x32x8xbf16>
    %136 = vector.shape_cast %135 : vector<1x32x8xbf16> to vector<32x8xbf16>
    %cst_73 = arith.constant dense<0.000000e+00> : vector<8x8xf32>
    %137 = tpu.matmul %51, %136, %cst_73 {dimension_numbers = #tpu.dot_dimension_numbers<[1], [0], [0], [1], [0, 0, 1, 1], [], []>} : vector<8x32xbf16>, vector<32x8xbf16>, vector<8x8xf32> -> vector<8x8xf32>
    %138 = arith.truncf %131 : vector<8x8xf32> to vector<8x8xbf16>
    %139 = arith.truncf %134 : vector<8x8xf32> to vector<8x8xbf16>
    %cst_74 = arith.constant dense<0.000000e+00> : vector<8x8xf32>
    %140 = tpu.matmul %138, %139, %cst_74 {dimension_numbers = #tpu.dot_dimension_numbers<[1], [1], [0], [0], [0, 0, 1, 0], [], []>} : vector<8x8xbf16>, vector<8x8xbf16>, vector<8x8xf32> -> vector<8x8xf32>
    %cst_75 = arith.constant -1.000000e+30 : f32
    %141 = vector.broadcast %cst_75 : f32 to vector<8x8xf32>
    %142 = arith.select %57, %141, %140 : vector<8x8xi1>, vector<8x8xf32>
    %cst_76 = arith.constant dense<0xFF800000> : vector<8xf32>
    %143 = vector.multi_reduction <maximumf>, %142, %cst_76 [1] : vector<8x8xf32> to vector<8xf32>
    %144 = vector.shape_cast %143 : vector<8xf32> to vector<8x1xf32>
    %145 = vector.broadcast %144 : vector<8x1xf32> to vector<8x8xf32>
    %146 = arith.subf %142, %145 : vector<8x8xf32>
    %147 = math.exp %146 : vector<8x8xf32>
    %cst_77 = arith.constant dense<0.000000e+00> : vector<8xf32>
    %148 = vector.multi_reduction <add>, %147, %cst_77 [1] : vector<8x8xf32> to vector<8xf32>
    %149 = vector.shape_cast %148 : vector<8xf32> to vector<8x1xf32>
    %150 = tpu.reciprocal %149 {approx = true} : vector<8x1xf32> -> vector<8x1xf32>
    %151 = vector.broadcast %150 : vector<8x1xf32> to vector<8x8xf32>
    %152 = arith.mulf %147, %151 : vector<8x8xf32>
    %153 = arith.truncf %152 : vector<8x8xf32> to vector<8x8xbf16>
    %154 = arith.truncf %137 : vector<8x8xf32> to vector<8x8xbf16>
    %cst_78 = arith.constant dense<0.000000e+00> : vector<8x8xf32>
    %155 = tpu.matmul %153, %154, %cst_78 {dimension_numbers = #tpu.dot_dimension_numbers<[1], [0], [0], [1], [0, 0, 1, 1], [], []>} : vector<8x8xbf16>, vector<8x8xbf16>, vector<8x8xf32> -> vector<8x8xf32>
    %156 = arith.truncf %155 : vector<8x8xf32> to vector<8x8xbf16>
    %c2_79 = arith.constant 2 : index
    %c0_80 = arith.constant 0 : index
    %c0_81 = arith.constant 0 : index
    %157 = vector.load %arg11[%c2_79, %c0_80, %c0_81] : memref<4x8x32xbf16, #tpu.memory_space<vmem>>, vector<1x8x32xbf16>
    %158 = vector.shape_cast %157 : vector<1x8x32xbf16> to vector<8x32xbf16>
    %cst_82 = arith.constant dense<0.000000e+00> : vector<8x32xf32>
    %159 = tpu.matmul %156, %158, %cst_82 {dimension_numbers = #tpu.dot_dimension_numbers<[1], [0], [0], [1], [0, 0, 1, 1], [], []>} : vector<8x8xbf16>, vector<8x32xbf16>, vector<8x32xf32> -> vector<8x32xf32>
    %160 = arith.addf %126, %159 : vector<8x32xf32>
    %c3 = arith.constant 3 : index
    %c0_83 = arith.constant 0 : index
    %c0_84 = arith.constant 0 : index
    %161 = vector.load %arg8[%c3, %c0_83, %c0_84] : memref<4x32x8xbf16, #tpu.memory_space<vmem>>, vector<1x32x8xbf16>
    %162 = vector.shape_cast %161 : vector<1x32x8xbf16> to vector<32x8xbf16>
    %cst_85 = arith.constant dense<0.000000e+00> : vector<8x8xf32>
    %163 = tpu.matmul %28, %162, %cst_85 {dimension_numbers = #tpu.dot_dimension_numbers<[1], [0], [0], [1], [0, 0, 1, 1], [], []>} : vector<8x32xbf16>, vector<32x8xbf16>, vector<8x8xf32> -> vector<8x8xf32>
    %cst_86 = arith.constant 0.353553385 : f32
    %164 = vector.broadcast %cst_86 : f32 to vector<8x8xf32>
    %165 = arith.mulf %163, %164 : vector<8x8xf32>
    %c3_87 = arith.constant 3 : index
    %c0_88 = arith.constant 0 : index
    %c0_89 = arith.constant 0 : index
    %166 = vector.load %arg9[%c3_87, %c0_88, %c0_89] : memref<4x32x8xbf16, #tpu.memory_space<vmem>>, vector<1x32x8xbf16>
    %167 = vector.shape_cast %166 : vector<1x32x8xbf16> to vector<32x8xbf16>
    %cst_90 = arith.constant dense<0.000000e+00> : vector<8x8xf32>
    %168 = tpu.matmul %51, %167, %cst_90 {dimension_numbers = #tpu.dot_dimension_numbers<[1], [0], [0], [1], [0, 0, 1, 1], [], []>} : vector<8x32xbf16>, vector<32x8xbf16>, vector<8x8xf32> -> vector<8x8xf32>
    %c3_91 = arith.constant 3 : index
    %c0_92 = arith.constant 0 : index
    %c0_93 = arith.constant 0 : index
    %169 = vector.load %arg10[%c3_91, %c0_92, %c0_93] : memref<4x32x8xbf16, #tpu.memory_space<vmem>>, vector<1x32x8xbf16>
    %170 = vector.shape_cast %169 : vector<1x32x8xbf16> to vector<32x8xbf16>
    %cst_94 = arith.constant dense<0.000000e+00> : vector<8x8xf32>
    %171 = tpu.matmul %51, %170, %cst_94 {dimension_numbers = #tpu.dot_dimension_numbers<[1], [0], [0], [1], [0, 0, 1, 1], [], []>} : vector<8x32xbf16>, vector<32x8xbf16>, vector<8x8xf32> -> vector<8x8xf32>
    %172 = arith.truncf %165 : vector<8x8xf32> to vector<8x8xbf16>
    %173 = arith.truncf %168 : vector<8x8xf32> to vector<8x8xbf16>
    %cst_95 = arith.constant dense<0.000000e+00> : vector<8x8xf32>
    %174 = tpu.matmul %172, %173, %cst_95 {dimension_numbers = #tpu.dot_dimension_numbers<[1], [1], [0], [0], [0, 0, 1, 0], [], []>} : vector<8x8xbf16>, vector<8x8xbf16>, vector<8x8xf32> -> vector<8x8xf32>
    %cst_96 = arith.constant -1.000000e+30 : f32
    %175 = vector.broadcast %cst_96 : f32 to vector<8x8xf32>
    %176 = arith.select %57, %175, %174 : vector<8x8xi1>, vector<8x8xf32>
    %cst_97 = arith.constant dense<0xFF800000> : vector<8xf32>
    %177 = vector.multi_reduction <maximumf>, %176, %cst_97 [1] : vector<8x8xf32> to vector<8xf32>
    %178 = vector.shape_cast %177 : vector<8xf32> to vector<8x1xf32>
    %179 = vector.broadcast %178 : vector<8x1xf32> to vector<8x8xf32>
    %180 = arith.subf %176, %179 : vector<8x8xf32>
    %181 = math.exp %180 : vector<8x8xf32>
    %cst_98 = arith.constant dense<0.000000e+00> : vector<8xf32>
    %182 = vector.multi_reduction <add>, %181, %cst_98 [1] : vector<8x8xf32> to vector<8xf32>
    %183 = vector.shape_cast %182 : vector<8xf32> to vector<8x1xf32>
    %184 = tpu.reciprocal %183 {approx = true} : vector<8x1xf32> -> vector<8x1xf32>
    %185 = vector.broadcast %184 : vector<8x1xf32> to vector<8x8xf32>
    %186 = arith.mulf %181, %185 : vector<8x8xf32>
    %187 = arith.truncf %186 : vector<8x8xf32> to vector<8x8xbf16>
    %188 = arith.truncf %171 : vector<8x8xf32> to vector<8x8xbf16>
    %cst_99 = arith.constant dense<0.000000e+00> : vector<8x8xf32>
    %189 = tpu.matmul %187, %188, %cst_99 {dimension_numbers = #tpu.dot_dimension_numbers<[1], [0], [0], [1], [0, 0, 1, 1], [], []>} : vector<8x8xbf16>, vector<8x8xbf16>, vector<8x8xf32> -> vector<8x8xf32>
    %190 = arith.truncf %189 : vector<8x8xf32> to vector<8x8xbf16>
    %c3_100 = arith.constant 3 : index
    %c0_101 = arith.constant 0 : index
    %c0_102 = arith.constant 0 : index
    %191 = vector.load %arg11[%c3_100, %c0_101, %c0_102] : memref<4x8x32xbf16, #tpu.memory_space<vmem>>, vector<1x8x32xbf16>
    %192 = vector.shape_cast %191 : vector<1x8x32xbf16> to vector<8x32xbf16>
    %cst_103 = arith.constant dense<0.000000e+00> : vector<8x32xf32>
    %193 = tpu.matmul %190, %192, %cst_103 {dimension_numbers = #tpu.dot_dimension_numbers<[1], [0], [0], [1], [0, 0, 1, 1], [], []>} : vector<8x8xbf16>, vector<8x32xbf16>, vector<8x32xf32> -> vector<8x32xf32>
    %194 = arith.addf %160, %193 : vector<8x32xf32>
    %c0_104 = arith.constant 0 : index
    %c0_105 = arith.constant 0 : index
    %195 = vector.load %arg12[%c0_104, %c0_105] : memref<1x32xf32, #tpu.memory_space<vmem>>, vector<1x32xf32>
    %196 = vector.broadcast %195 : vector<1x32xf32> to vector<8x32xf32>
    %197 = arith.addf %194, %196 : vector<8x32xf32>
    %198 = arith.addf %1, %197 : vector<8x32xf32>
    %c0_106 = arith.constant 0 : index
    %c0_107 = arith.constant 0 : index
    %199 = vector.load %arg6[%c0_106, %c0_107] : memref<1x32xf32, #tpu.memory_space<vmem>>, vector<1x32xf32>
    %c0_108 = arith.constant 0 : index
    %c0_109 = arith.constant 0 : index
    %200 = vector.load %arg7[%c0_108, %c0_109] : memref<1x32xf32, #tpu.memory_space<vmem>>, vector<1x32xf32>
    %cst_110 = arith.constant dense<0.000000e+00> : vector<8xf32>
    %201 = vector.multi_reduction <add>, %198, %cst_110 [1] : vector<8x32xf32> to vector<8xf32>
    %202 = vector.shape_cast %201 : vector<8xf32> to vector<8x1xf32>
    %cst_111 = arith.constant 3.200000e+01 : f32
    %203 = vector.broadcast %cst_111 : f32 to vector<8x1xf32>
    %204 = arith.divf %202, %203 : vector<8x1xf32>
    %205 = vector.broadcast %204 : vector<8x1xf32> to vector<8x32xf32>
    %206 = arith.subf %198, %205 : vector<8x32xf32>
    %207 = arith.mulf %206, %206 : vector<8x32xf32>
    %cst_112 = arith.constant dense<0.000000e+00> : vector<8xf32>
    %208 = vector.multi_reduction <add>, %207, %cst_112 [1] : vector<8x32xf32> to vector<8xf32>
    %209 = vector.shape_cast %208 : vector<8xf32> to vector<8x1xf32>
    %cst_113 = arith.constant 3.200000e+01 : f32
    %210 = vector.broadcast %cst_113 : f32 to vector<8x1xf32>
    %211 = arith.divf %209, %210 : vector<8x1xf32>
    %212 = vector.broadcast %204 : vector<8x1xf32> to vector<8x32xf32>
    %213 = arith.subf %198, %212 : vector<8x32xf32>
    %cst_114 = arith.constant 9.99999974E-6 : f32
    %214 = vector.broadcast %cst_114 : f32 to vector<8x1xf32>
    %215 = arith.addf %211, %214 : vector<8x1xf32>
    %216 = math.rsqrt %215 : vector<8x1xf32>
    %217 = vector.broadcast %216 : vector<8x1xf32> to vector<8x32xf32>
    %218 = arith.mulf %213, %217 : vector<8x32xf32>
    %219 = vector.broadcast %199 : vector<1x32xf32> to vector<8x32xf32>
    %220 = arith.mulf %219, %218 : vector<8x32xf32>
    %221 = vector.broadcast %200 : vector<1x32xf32> to vector<8x32xf32>
    %222 = arith.addf %220, %221 : vector<8x32xf32>
    %223 = arith.truncf %222 : vector<8x32xf32> to vector<8x32xbf16>
    %cst_115 = arith.constant 0.000000e+00 : f32
    %224 = vector.broadcast %cst_115 : f32 to vector<8x32xf32>
    %c0_116 = arith.constant 0 : index
    %c0_117 = arith.constant 0 : index
    %225 = vector.load %arg13[%c0_116, %c0_117] : memref<32x128xbf16, #tpu.memory_space<vmem>>, vector<32x128xbf16>
    %cst_118 = arith.constant dense<0.000000e+00> : vector<8x128xf32>
    %226 = tpu.matmul %223, %225, %cst_118 {dimension_numbers = #tpu.dot_dimension_numbers<[1], [0], [0], [1], [0, 0, 1, 1], [], []>} : vector<8x32xbf16>, vector<32x128xbf16>, vector<8x128xf32> -> vector<8x128xf32>
    %c0_119 = arith.constant 0 : index
    %c0_120 = arith.constant 0 : index
    %227 = vector.load %arg14[%c0_119, %c0_120] : memref<1x128xf32, #tpu.memory_space<vmem>>, vector<1x128xf32>
    %228 = vector.broadcast %227 : vector<1x128xf32> to vector<8x128xf32>
    %229 = arith.addf %226, %228 : vector<8x128xf32>
    %cst_121 = arith.constant 0.636619746 : f32
    %230 = math.sqrt %cst_121 : f32
    %cst_122 = arith.constant 8.000000e-01 : f32
    %231 = vector.broadcast %cst_122 : f32 to vector<8x128xf32>
    %232 = arith.mulf %231, %229 : vector<8x128xf32>
    %cst_123 = arith.constant 4.471500e-02 : f32
    %233 = vector.broadcast %cst_123 : f32 to vector<8x128xf32>
    %234 = arith.mulf %233, %229 : vector<8x128xf32>
    %235 = arith.mulf %234, %229 : vector<8x128xf32>
    %236 = arith.mulf %235, %229 : vector<8x128xf32>
    %237 = arith.addf %229, %236 : vector<8x128xf32>
    %238 = vector.broadcast %230 : f32 to vector<8x128xf32>
    %239 = arith.mulf %238, %237 : vector<8x128xf32>
    %240 = math.tanh %239 : vector<8x128xf32>
    %cst_124 = arith.constant 1.000000e+00 : f32
    %241 = vector.broadcast %cst_124 : f32 to vector<8x128xf32>
    %242 = arith.addf %241, %240 : vector<8x128xf32>
    %243 = arith.mulf %232, %242 : vector<8x128xf32>
    %244 = arith.truncf %243 : vector<8x128xf32> to vector<8x128xbf16>
    %c0_125 = arith.constant 0 : index
    %c0_126 = arith.constant 0 : index
    %245 = vector.load %arg15[%c0_125, %c0_126] : memref<128x32xbf16, #tpu.memory_space<vmem>>, vector<128x32xbf16>
    %cst_127 = arith.constant dense<0.000000e+00> : vector<8x32xf32>
    %246 = tpu.matmul %244, %245, %cst_127 {dimension_numbers = #tpu.dot_dimension_numbers<[1], [0], [0], [1], [0, 0, 1, 1], [], []>} : vector<8x128xbf16>, vector<128x32xbf16>, vector<8x32xf32> -> vector<8x32xf32>
    %247 = arith.addf %224, %246 : vector<8x32xf32>
    %c0_128 = arith.constant 0 : index
    %c0_129 = arith.constant 0 : index
    %248 = vector.load %arg16[%c0_128, %c0_129] : memref<1x32xf32, #tpu.memory_space<vmem>>, vector<1x32xf32>
    %249 = vector.broadcast %248 : vector<1x32xf32> to vector<8x32xf32>
    %250 = arith.addf %247, %249 : vector<8x32xf32>
    %251 = arith.addf %198, %250 : vector<8x32xf32>
    %c0_130 = arith.constant 0 : index
    %c0_131 = arith.constant 0 : index
    %c0_132 = arith.constant 0 : index
    %252 = vector.load %arg17[%c0_130, %c0_131, %c0_132] : memref<1x8x32xf32, #tpu.memory_space<vmem>>, vector<1x8x32xf32>
    %253 = vector.shape_cast %252 : vector<1x8x32xf32> to vector<8x32xf32>
    %254 = vector.shape_cast %251 : vector<8x32xf32> to vector<1x8x32xf32>
    tpu.vector_store %arg17[%c0_130, %c0_131, %c0_132], %254 {strides = array<i32>} : memref<1x8x32xf32, #tpu.memory_space<vmem>>, vector<1x8x32xf32>,
    return
  }
  func.func @transform_0(%arg0: i32, %arg1: i32) -> (i32, i32, i32) {
    %c0_i32 = arith.constant 0 : i32
    %c0_i32_0 = arith.constant 0 : i32
    return %arg0, %arg1, %c0_i32 : i32, i32, i32
  }
  func.func @transform_1(%arg0: i32, %arg1: i32) -> (i32, i32, i32) {
    %c0_i32 = arith.constant 0 : i32
    %c0_i32_0 = arith.constant 0 : i32
    %c0_i32_1 = arith.constant 0 : i32
    return %arg0, %c0_i32, %c0_i32_0 : i32, i32, i32
  }
  func.func @transform_2(%arg0: i32, %arg1: i32) -> (i32, i32) {
    %c0_i32 = arith.constant 0 : i32
    %c0_i32_0 = arith.constant 0 : i32
    %c0_i32_1 = arith.constant 0 : i32
    return %c0_i32, %c0_i32_0 : i32, i32
  }
  func.func @transform_3(%arg0: i32, %arg1: i32) -> (i32, i32) {
    %c0_i32 = arith.constant 0 : i32
    %c0_i32_0 = arith.constant 0 : i32
    %c0_i32_1 = arith.constant 0 : i32
    return %c0_i32, %c0_i32_0 : i32, i32
  }
  func.func @transform_4(%arg0: i32, %arg1: i32) -> (i32, i32) {
    %c0_i32 = arith.constant 0 : i32
    %c0_i32_0 = arith.constant 0 : i32
    %c0_i32_1 = arith.constant 0 : i32
    return %c0_i32, %c0_i32_0 : i32, i32
  }
  func.func @transform_5(%arg0: i32, %arg1: i32) -> (i32, i32) {
    %c0_i32 = arith.constant 0 : i32
    %c0_i32_0 = arith.constant 0 : i32
    %c0_i32_1 = arith.constant 0 : i32
    return %c0_i32, %c0_i32_0 : i32, i32
  }
  func.func @transform_6(%arg0: i32, %arg1: i32) -> (i32, i32, i32) {
    %c0_i32 = arith.constant 0 : i32
    %c0_i32_0 = arith.constant 0 : i32
    %c0_i32_1 = arith.constant 0 : i32
    %c0_i32_2 = arith.constant 0 : i32
    return %c0_i32, %c0_i32_0, %c0_i32_1 : i32, i32, i32
  }
  func.func @transform_7(%arg0: i32, %arg1: i32) -> (i32, i32, i32) {
    %c0_i32 = arith.constant 0 : i32
    %c0_i32_0 = arith.constant 0 : i32
    %c0_i32_1 = arith.constant 0 : i32
    %c0_i32_2 = arith.constant 0 : i32
    return %c0_i32, %c0_i32_0, %c0_i32_1 : i32, i32, i32
  }
  func.func @transform_8(%arg0: i32, %arg1: i32) -> (i32, i32, i32) {
    %c0_i32 = arith.constant 0 : i32
    %c0_i32_0 = arith.constant 0 : i32
    %c0_i32_1 = arith.constant 0 : i32
    %c0_i32_2 = arith.constant 0 : i32
    return %c0_i32, %c0_i32_0, %c0_i32_1 : i32, i32, i32
  }
  func.func @transform_9(%arg0: i32, %arg1: i32) -> (i32, i32, i32) {
    %c0_i32 = arith.constant 0 : i32
    %c0_i32_0 = arith.constant 0 : i32
    %c0_i32_1 = arith.constant 0 : i32
    %c0_i32_2 = arith.constant 0 : i32
    return %c0_i32, %c0_i32_0, %c0_i32_1 : i32, i32, i32
  }
  func.func @transform_10(%arg0: i32, %arg1: i32) -> (i32, i32) {
    %c0_i32 = arith.constant 0 : i32
    %c0_i32_0 = arith.constant 0 : i32
    %c0_i32_1 = arith.constant 0 : i32
    return %c0_i32, %c0_i32_0 : i32, i32
  }
  func.func @transform_11(%arg0: i32, %arg1: i32) -> (i32, i32) {
    %c0_i32 = arith.constant 0 : i32
    %c0_i32_0 = arith.constant 0 : i32
    %c0_i32_1 = arith.constant 0 : i32
    return %c0_i32, %c0_i32_0 : i32, i32
  }
  func.func @transform_12(%arg0: i32, %arg1: i32) -> (i32, i32) {
    %c0_i32 = arith.constant 0 : i32
    %c0_i32_0 = arith.constant 0 : i32
    %c0_i32_1 = arith.constant 0 : i32
    return %c0_i32, %c0_i32_0 : i32, i32
  }
  func.func @transform_13(%arg0: i32, %arg1: i32) -> (i32, i32) {
    %c0_i32 = arith.constant 0 : i32
    %c0_i32_0 = arith.constant 0 : i32
    %c0_i32_1 = arith.constant 0 : i32
    return %c0_i32, %c0_i32_0 : i32, i32
  }
  func.func @transform_14(%arg0: i32, %arg1: i32) -> (i32, i32) {
    %c0_i32 = arith.constant 0 : i32
    %c0_i32_0 = arith.constant 0 : i32
    %c0_i32_1 = arith.constant 0 : i32
    return %c0_i32, %c0_i32_0 : i32, i32
  }
  func.func @transform_15(%arg0: i32, %arg1: i32) -> (i32, i32, i32) {
    %c0_i32 = arith.constant 0 : i32
    %c0_i32_0 = arith.constant 0 : i32
    return %arg0, %arg1, %c0_i32 : i32, i32, i32
  }
}

</mosaic_0001>

<llo_original>
// kernel: tpu_custom_call.1
$region0: #{tpu_custom_call.1}
  #allocation0 [shape = 'u32[]', space=smem, size = 0x4, offset = 0x4, fixed_abs, tag = 'smem constant byte address 0x4 - core index']
  #allocation1 [shape = 'u32[144,128]{1,0:T(1,128)}', space=vmem, size = 0x12000, scoped, tag = 'internal scratch']
  %s0 = inlined_call_operand.vmem [shape: f32[2,8,32], index: 0, kind: input, shape index: {}]
  %s1 = inlined_call_operand.vmem [shape: f32[2,8,32], index: 1, kind: input, shape index: {}]
  %s2 = inlined_call_operand.vmem [shape: f32[1,32], index: 2, kind: input, shape index: {}]
  %s3 = inlined_call_operand.vmem [shape: f32[1,32], index: 3, kind: input, shape index: {}]
  %s4 = inlined_call_operand.vmem [shape: f32[1,32], index: 4, kind: input, shape index: {}]
  %s5 = inlined_call_operand.vmem [shape: f32[1,32], index: 5, kind: input, shape index: {}]
  %s6 = inlined_call_operand.vmem [shape: bf16[4,32,8], index: 6, kind: input, shape index: {}]
  %s7 = inlined_call_operand.vmem [shape: bf16[4,32,8], index: 7, kind: input, shape index: {}]
  %s8 = inlined_call_operand.vmem [shape: bf16[4,32,8], index: 8, kind: input, shape index: {}]
  %s9 = inlined_call_operand.vmem [shape: bf16[4,8,32], index: 9, kind: input, shape index: {}]
  %s10 = inlined_call_operand.vmem [shape: f32[1,32], index: 10, kind: input, shape index: {}]
  %s11 = inlined_call_operand.vmem [shape: bf16[32,128], index: 11, kind: input, shape index: {}]
  %s12 = inlined_call_operand.vmem [shape: f32[1,128], index: 12, kind: input, shape index: {}]
  %s13 = inlined_call_operand.vmem [shape: bf16[128,32], index: 13, kind: input, shape index: {}]
  %s14 = inlined_call_operand.vmem [shape: f32[1,32], index: 14, kind: input, shape index: {}]
  %s15 = inlined_call_operand.hbm [shape: f32[2,8,32], index: 15, kind: output, shape index: {}]
  %s16 = sld [smem:[#allocation0]]
  $region93: #{tpu_custom_call.1} parent=0
    _
  %s18 = ssub.s32 1, %s16
  %s19 = scalar_select 0, %s18, %s16
  $region1: #{tpu_custom_call.1} parent=0
    #allocation2 [shape = 'u8[8192]{0}', space=vmem, size = 0x2000, scoped, tag = 'output window, operand 0']
    #allocation3 [shape = 's32[2]{0}', space=sflag, size = 0x8, scoped, tag = 'scoped memory for tpu_custom_call.1']
    %20 = vsyncpa [#allocation3], 0
    %s21 = scalar_lea.sflag [#allocation3], 1
    %22 = vsyncpa %s21, 0
    loop: start=0, step=1, limit=4
    $region2: #{tpu_custom_call.1} parent=1 // loop_pre_header
      _
    $region3: #{tpu_custom_call.1} parent=1 // loop_header
      %s24 = sphi 0, %s28
      %p25 = scmp.ge.s32.totalorder %s24, 4
      %s31 = sphi 0, %s43
      %s32 = sphi 0, %s39
      %s33 = sphi 0, %s31
      %s34 = sphi 0, %s32
      %s35 = sphi 0, %s33
      %s36 = sphi 0, %s34
      %s48 = sphi 0, %s50
      %s51 = sphi 0, %s48
      %s52 = sphi 0, %s51
      %s68 = sphi 0, %s52
      %s74 = sphi 0, %s76
      %s77 = sphi 0, %s74
      %s78 = sphi 0, %s77
      %s94 = sphi 0, %s78
      %s98 = sphi 0, %s98
      %s100 = sphi 0, %s98
      %s101 = sphi 0, %s100
      %s115 = sphi 0, %s101
      %s119 = sphi 0, %s119
      %s121 = sphi 0, %s119
      %s122 = sphi 0, %s121
      %s136 = sphi 0, %s122
      %s140 = sphi 0, %s140
      %s142 = sphi 0, %s140
      %s143 = sphi 0, %s142
      %s157 = sphi 0, %s143
      %s161 = sphi 0, %s161
      %s163 = sphi 0, %s161
      %s164 = sphi 0, %s163
      %s178 = sphi 0, %s164
      %s182 = sphi 0, %s182
      %s184 = sphi 0, %s182
      %s185 = sphi 0, %s184
      %s199 = sphi 0, %s185
      %s203 = sphi 0, %s203
      %s205 = sphi 0, %s203
      %s206 = sphi 0, %s205
      %s220 = sphi 0, %s206
      %s224 = sphi 0, %s224
      %s226 = sphi 0, %s224
      %s227 = sphi 0, %s226
      %s241 = sphi 0, %s227
      %s245 = sphi 0, %s245
      %s247 = sphi 0, %s245
      %s248 = sphi 0, %s247
      %s262 = sphi 0, %s248
      %s266 = sphi 0, %s266
      %s268 = sphi 0, %s266
      %s269 = sphi 0, %s268
      %s283 = sphi 0, %s269
      %s287 = sphi 0, %s287
      %s289 = sphi 0, %s287
      %s290 = sphi 0, %s289
      %s304 = sphi 0, %s290
      %s308 = sphi 0, %s308
      %s310 = sphi 0, %s308
      %s311 = sphi 0, %s310
      %s325 = sphi 0, %s311
      %s329 = sphi 0, %s329
      %s331 = sphi 0, %s329
      %s332 = sphi 0, %s331
      %s346 = sphi 0, %s332
      %s350 = sphi 0, %s350
      %s352 = sphi 0, %s350
      %s353 = sphi 0, %s352
      %s367 = sphi 0, %s353
      %s375 = sphi 0, %s377
      %s378 = sphi 0, %s375
      %s379 = sphi 0, %s378
      %s395 = sphi 0, %s379
    $region4: #{tpu_custom_call.1} parent=1 // loop_header_branch
      %27 = sbr.rel (%p25) target = $region8
    $region5: #{tpu_custom_call.1} parent=1 // loop_body
      %s29 = ssub.s32 %s24, 1
      %s30 = ssub.s32 %s24, 2
      %s37 = sadd.s32 1, %s32
      %p38 = scmp.ge.s32.totalorder %s37, 1
      %s39 = scalar_select %p38, 0, %s37
      %s40 = sadd.s32 1, %s31
      %s41 = scalar_select %p38, %s40, %s31
      %p42 = scmp.ge.s32.totalorder %s41, 2
      %s43 = scalar_select %p42, 0, %s41
      %s44 = ssub.s32 %s31, %s43
      %s45 = ssub.s32 %s32, %s39
      %s46 = sor.u32 %s44, %s45
      %p47 = scmp.eq.s32.totalorder %s46, 0
      %s49 = sadd.s32 %s48, 1
      %s50 = scalar_select %p47, %s48, %s49
      %p53 = pneg %p47
      %p54 = scmp.eq.s32.totalorder %s24, 1
      %p55 = por %p53, %p54
      %p56 = scmp.ne.s32.totalorder %s48, %s51
      %p57 = scmp.eq.s32.totalorder %s24, 0
      %p58 = por %p56, %p57
      %p59 = scmp.ne.s32.totalorder %s48, %s51
      %p60 = scmp.eq.s32.totalorder %s29, 1
      %p61 = por %p59, %p60
      %p62 = scmp.ne.s32.totalorder %s51, %s52
      %p63 = scmp.eq.s32.totalorder %s29, 0
      %p64 = por %p62, %p63
      %p65 = scmp.ne.s32.totalorder %s51, %s52
      %p66 = scmp.eq.s32.totalorder %s30, 1
      %p67 = por %p65, %p66
      %p69 = scmp.ne.s32.totalorder %s52, %s68
      %p70 = scmp.eq.s32.totalorder %s30, 0
      %p71 = por %p69, %p70
      %s72 = ssub.s32 %s31, %s43
      %p73 = scmp.eq.s32.totalorder %s72, 0
      %s75 = sadd.s32 %s74, 1
      %s76 = scalar_select %p73, %s74, %s75
      %p79 = pneg %p73
      %p80 = scmp.eq.s32.totalorder %s24, 1
      %p81 = por %p79, %p80
      %p82 = scmp.ne.s32.totalorder %s74, %s77
      %p83 = scmp.eq.s32.totalorder %s24, 0
      %p84 = por %p82, %p83
      %p85 = scmp.ne.s32.totalorder %s74, %s77
      %p86 = scmp.eq.s32.totalorder %s29, 1
      %p87 = por %p85, %p86
      %p88 = scmp.ne.s32.totalorder %s77, %s78
      %p89 = scmp.eq.s32.totalorder %s29, 0
      %p90 = por %p88, %p89
      %p91 = scmp.ne.s32.totalorder %s77, %s78
      %p92 = scmp.eq.s32.totalorder %s30, 1
      %p93 = por %p91, %p92
      %p95 = scmp.ne.s32.totalorder %s78, %s94
      %p96 = scmp.eq.s32.totalorder %s30, 0
      %p97 = por %p95, %p96
      %s99 = sadd.s32 %s98, 1
      %p102 = scmp.eq.s32.totalorder %s24, 1
      %p103 = scmp.ne.s32.totalorder %s98, %s100
      %p104 = scmp.eq.s32.totalorder %s24, 0
      %p105 = por %p103, %p104
      %p106 = scmp.ne.s32.totalorder %s98, %s100
      %p107 = scmp.eq.s32.totalorder %s29, 1
      %p108 = por %p106, %p107
      %p109 = scmp.ne.s32.totalorder %s100, %s101
      %p110 = scmp.eq.s32.totalorder %s29, 0
      %p111 = por %p109, %p110
      %p112 = scmp.ne.s32.totalorder %s100, %s101
      %p113 = scmp.eq.s32.totalorder %s30, 1
      %p114 = por %p112, %p113
      %p116 = scmp.ne.s32.totalorder %s101, %s115
      %p117 = scmp.eq.s32.totalorder %s30, 0
      %p118 = por %p116, %p117
      %s120 = sadd.s32 %s119, 1
      %p123 = scmp.eq.s32.totalorder %s24, 1
      %p124 = scmp.ne.s32.totalorder %s119, %s121
      %p125 = scmp.eq.s32.totalorder %s24, 0
      %p126 = por %p124, %p125
      %p127 = scmp.ne.s32.totalorder %s119, %s121
      %p128 = scmp.eq.s32.totalorder %s29, 1
      %p129 = por %p127, %p128
      %p130 = scmp.ne.s32.totalorder %s121, %s122
      %p131 = scmp.eq.s32.totalorder %s29, 0
      %p132 = por %p130, %p131
      %p133 = scmp.ne.s32.totalorder %s121, %s122
      %p134 = scmp.eq.s32.totalorder %s30, 1
      %p135 = por %p133, %p134
      %p137 = scmp.ne.s32.totalorder %s122, %s136
      %p138 = scmp.eq.s32.totalorder %s30, 0
      %p139 = por %p137, %p138
      %s141 = sadd.s32 %s140, 1
      %p144 = scmp.eq.s32.totalorder %s24, 1
      %p145 = scmp.ne.s32.totalorder %s140, %s142
      %p146 = scmp.eq.s32.totalorder %s24, 0
      %p147 = por %p145, %p146
      %p148 = scmp.ne.s32.totalorder %s140, %s142
      %p149 = scmp.eq.s32.totalorder %s29, 1
      %p150 = por %p148, %p149
      %p151 = scmp.ne.s32.totalorder %s142, %s143
      %p152 = scmp.eq.s32.totalorder %s29, 0
      %p153 = por %p151, %p152
      %p154 = scmp.ne.s32.totalorder %s142, %s143
      %p155 = scmp.eq.s32.totalorder %s30, 1
      %p156 = por %p154, %p155
      %p158 = scmp.ne.s32.totalorder %s143, %s157
      %p159 = scmp.eq.s32.totalorder %s30, 0
      %p160 = por %p158, %p159
      %s162 = sadd.s32 %s161, 1
      %p165 = scmp.eq.s32.totalorder %s24, 1
      %p166 = scmp.ne.s32.totalorder %s161, %s163
      %p167 = scmp.eq.s32.totalorder %s24, 0
      %p168 = por %p166, %p167
      %p169 = scmp.ne.s32.totalorder %s161, %s163
      %p170 = scmp.eq.s32.totalorder %s29, 1
      %p171 = por %p169, %p170
      %p172 = scmp.ne.s32.totalorder %s163, %s164
      %p173 = scmp.eq.s32.totalorder %s29, 0
      %p174 = por %p172, %p173
      %p175 = scmp.ne.s32.totalorder %s163, %s164
      %p176 = scmp.eq.s32.totalorder %s30, 1
      %p177 = por %p175, %p176
      %p179 = scmp.ne.s32.totalorder %s164, %s178
      %p180 = scmp.eq.s32.totalorder %s30, 0
      %p181 = por %p179, %p180
      %s183 = sadd.s32 %s182, 1
      %p186 = scmp.eq.s32.totalorder %s24, 1
      %p187 = scmp.ne.s32.totalorder %s182, %s184
      %p188 = scmp.eq.s32.totalorder %s24, 0
      %p189 = por %p187, %p188
      %p190 = scmp.ne.s32.totalorder %s182, %s184
      %p191 = scmp.eq.s32.totalorder %s29, 1
      %p192 = por %p190, %p191
      %p193 = scmp.ne.s32.totalorder %s184, %s185
      %p194 = scmp.eq.s32.totalorder %s29, 0
      %p195 = por %p193, %p194
      %p196 = scmp.ne.s32.totalorder %s184, %s185
      %p197 = scmp.eq.s32.totalorder %s30, 1
      %p198 = por %p196, %p197
      %p200 = scmp.ne.s32.totalorder %s185, %s199
      %p201 = scmp.eq.s32.totalorder %s30, 0
      %p202 = por %p200, %p201
      %s204 = sadd.s32 %s203, 1
      %p207 = scmp.eq.s32.totalorder %s24, 1
      %p208 = scmp.ne.s32.totalorder %s203, %s205
      %p209 = scmp.eq.s32.totalorder %s24, 0
      %p210 = por %p208, %p209
      %p211 = scmp.ne.s32.totalorder %s203, %s205
      %p212 = scmp.eq.s32.totalorder %s29, 1
      %p213 = por %p211, %p212
      %p214 = scmp.ne.s32.totalorder %s205, %s206
      %p215 = scmp.eq.s32.totalorder %s29, 0
      %p216 = por %p214, %p215
      %p217 = scmp.ne.s32.totalorder %s205, %s206
      %p218 = scmp.eq.s32.totalorder %s30, 1
      %p219 = por %p217, %p218
      %p221 = scmp.ne.s32.totalorder %s206, %s220
      %p222 = scmp.eq.s32.totalorder %s30, 0
      %p223 = por %p221, %p222
      %s225 = sadd.s32 %s224, 1
      %p228 = scmp.eq.s32.totalorder %s24, 1
      %p229 = scmp.ne.s32.totalorder %s224, %s226
      %p230 = scmp.eq.s32.totalorder %s24, 0
      %p231 = por %p229, %p230
      %p232 = scmp.ne.s32.totalorder %s224, %s226
      %p233 = scmp.eq.s32.totalorder %s29, 1
      %p234 = por %p232, %p233
      %p235 = scmp.ne.s32.totalorder %s226, %s227
      %p236 = scmp.eq.s32.totalorder %s29, 0
      %p237 = por %p235, %p236
      %p238 = scmp.ne.s32.totalorder %s226, %s227
      %p239 = scmp.eq.s32.totalorder %s30, 1
      %p240 = por %p238, %p239
      %p242 = scmp.ne.s32.totalorder %s227, %s241
      %p243 = scmp.eq.s32.totalorder %s30, 0
      %p244 = por %p242, %p243
      %s246 = sadd.s32 %s245, 1
      %p249 = scmp.eq.s32.totalorder %s24, 1
      %p250 = scmp.ne.s32.totalorder %s245, %s247
      %p251 = scmp.eq.s32.totalorder %s24, 0
      %p252 = por %p250, %p251
      %p253 = scmp.ne.s32.totalorder %s245, %s247
      %p254 = scmp.eq.s32.totalorder %s29, 1
      %p255 = por %p253, %p254
      %p256 = scmp.ne.s32.totalorder %s247, %s248
      %p257 = scmp.eq.s32.totalorder %s29, 0
      %p258 = por %p256, %p257
      %p259 = scmp.ne.s32.totalorder %s247, %s248
      %p260 = scmp.eq.s32.totalorder %s30, 1
      %p261 = por %p259, %p260
      %p263 = scmp.ne.s32.totalorder %s248, %s262
      %p264 = scmp.eq.s32.totalorder %s30, 0
      %p265 = por %p263, %p264
      %s267 = sadd.s32 %s266, 1
      %p270 = scmp.eq.s32.totalorder %s24, 1
      %p271 = scmp.ne.s32.totalorder %s266, %s268
      %p272 = scmp.eq.s32.totalorder %s24, 0
      %p273 = por %p271, %p272
      %p274 = scmp.ne.s32.totalorder %s266, %s268
      %p275 = scmp.eq.s32.totalorder %s29, 1
      %p276 = por %p274, %p275
      %p277 = scmp.ne.s32.totalorder %s268, %s269
      %p278 = scmp.eq.s32.totalorder %s29, 0
      %p279 = por %p277, %p278
      %p280 = scmp.ne.s32.totalorder %s268, %s269
      %p281 = scmp.eq.s32.totalorder %s30, 1
      %p282 = por %p280, %p281
      %p284 = scmp.ne.s32.totalorder %s269, %s283
      %p285 = scmp.eq.s32.totalorder %s30, 0
      %p286 = por %p284, %p285
      %s288 = sadd.s32 %s287, 1
      %p291 = scmp.eq.s32.totalorder %s24, 1
      %p292 = scmp.ne.s32.totalorder %s287, %s289
      %p293 = scmp.eq.s32.totalorder %s24, 0
      %p294 = por %p292, %p293
      %p295 = scmp.ne.s32.totalorder %s287, %s289
      %p296 = scmp.eq.s32.totalorder %s29, 1
      %p297 = por %p295, %p296
      %p298 = scmp.ne.s32.totalorder %s289, %s290
      %p299 = scmp.eq.s32.totalorder %s29, 0
      %p300 = por %p298, %p299
      %p301 = scmp.ne.s32.totalorder %s289, %s290
      %p302 = scmp.eq.s32.totalorder %s30, 1
      %p303 = por %p301, %p302
      %p305 = scmp.ne.s32.totalorder %s290, %s304
      %p306 = scmp.eq.s32.totalorder %s30, 0
      %p307 = por %p305, %p306
      %s309 = sadd.s32 %s308, 1
      %p312 = scmp.eq.s32.totalorder %s24, 1
      %p313 = scmp.ne.s32.totalorder %s308, %s310
      %p314 = scmp.eq.s32.totalorder %s24, 0
      %p315 = por %p313, %p314
      %p316 = scmp.ne.s32.totalorder %s308, %s310
      %p317 = scmp.eq.s32.totalorder %s29, 1
      %p318 = por %p316, %p317
      %p319 = scmp.ne.s32.totalorder %s310, %s311
      %p320 = scmp.eq.s32.totalorder %s29, 0
      %p321 = por %p319, %p320
      %p322 = scmp.ne.s32.totalorder %s310, %s311
      %p323 = scmp.eq.s32.totalorder %s30, 1
      %p324 = por %p322, %p323
      %p326 = scmp.ne.s32.totalorder %s311, %s325
      %p327 = scmp.eq.s32.totalorder %s30, 0
      %p328 = por %p326, %p327
      %s330 = sadd.s32 %s329, 1
      %p333 = scmp.eq.s32.totalorder %s24, 1
      %p334 = scmp.ne.s32.totalorder %s329, %s331
      %p335 = scmp.eq.s32.totalorder %s24, 0
      %p336 = por %p334, %p335
      %p337 = scmp.ne.s32.totalorder %s329, %s331
      %p338 = scmp.eq.s32.totalorder %s29, 1
      %p339 = por %p337, %p338
      %p340 = scmp.ne.s32.totalorder %s331, %s332
      %p341 = scmp.eq.s32.totalorder %s29, 0
      %p342 = por %p340, %p341
      %p343 = scmp.ne.s32.totalorder %s331, %s332
      %p344 = scmp.eq.s32.totalorder %s30, 1
      %p345 = por %p343, %p344
      %p347 = scmp.ne.s32.totalorder %s332, %s346
      %p348 = scmp.eq.s32.totalorder %s30, 0
      %p349 = por %p347, %p348
      %s351 = sadd.s32 %s350, 1
      %p354 = scmp.eq.s32.totalorder %s24, 1
      %p355 = scmp.ne.s32.totalorder %s350, %s352
      %p356 = scmp.eq.s32.totalorder %s24, 0
      %p357 = por %p355, %p356
      %p358 = scmp.ne.s32.totalorder %s350, %s352
      %p359 = scmp.eq.s32.totalorder %s29, 1
      %p360 = por %p358, %p359
      %p361 = scmp.ne.s32.totalorder %s352, %s353
      %p362 = scmp.eq.s32.totalorder %s29, 0
      %p363 = por %p361, %p362
      %p364 = scmp.ne.s32.totalorder %s352, %s353
      %p365 = scmp.eq.s32.totalorder %s30, 1
      %p366 = por %p364, %p365
      %p368 = scmp.ne.s32.totalorder %s353, %s367
      %p369 = scmp.eq.s32.totalorder %s30, 0
      %p370 = por %p368, %p369
      %s371 = ssub.s32 %s31, %s43
      %s372 = ssub.s32 %s32, %s39
      %s373 = sor.u32 %s371, %s372
      %p374 = scmp.eq.s32.totalorder %s373, 0
      %s376 = sadd.s32 %s375, 1
      %s377 = scalar_select %p374, %s375, %s376
      %p380 = pneg %p374
      %p381 = scmp.eq.s32.totalorder %s24, 1
      %p382 = por %p380, %p381
      %p383 = scmp.ne.s32.totalorder %s375, %s378
      %p384 = scmp.eq.s32.totalorder %s24, 0
      %p385 = por %p383, %p384
      %p386 = scmp.ne.s32.totalorder %s375, %s378
      %p387 = scmp.eq.s32.totalorder %s29, 1
      %p388 = por %p386, %p387
      %p389 = scmp.ne.s32.totalorder %s378, %s379
      %p390 = scmp.eq.s32.totalorder %s29, 0
      %p391 = por %p389, %p390
      %p392 = scmp.ne.s32.totalorder %s378, %s379
      %p393 = scmp.eq.s32.totalorder %s30, 1
      %p394 = por %p392, %p393
      %p396 = scmp.ne.s32.totalorder %s379, %s395
      %p397 = scmp.eq.s32.totalorder %s30, 0
      %p398 = por %p396, %p397
      %p399 = scmp.le.s32.totalorder 1, %s24
      %p400 = scmp.lt.s32.totalorder %s24, 3
      %p401 = pnand %p399, %p400
      %p402 = pneg %p401
      // Predicated region
      $region9: #{tpu_custom_call.1} parent=5 // pred_check
        _
      $region10: #{tpu_custom_call.1} parent=5 // pred_check_branch
        %404 = sbr.rel (%p401) target = $region12
      $region11: #{tpu_custom_call.1} parent=5 // pred_region
        %s405 = ssub.s32 %s24, 1
        // Predicated region
        $region13: #{tpu_custom_call.1} parent=11 // pred_check
          %p406 = pneg %p111
        $region14: #{tpu_custom_call.1} parent=11 // pred_check_branch
          %408 = sbr.rel (%p406) target = $region16
        $region15: #{tpu_custom_call.1} parent=11 // pred_region
          _
        $region16: #{tpu_custom_call.1} parent=11 // pred_fallthru
          _
        // Predicated region
        $region17: #{tpu_custom_call.1} parent=11 // pred_check
          %p409 = pneg %p132
        $region18: #{tpu_custom_call.1} parent=11 // pred_check_branch
          %411 = sbr.rel (%p409) target = $region20
        $region19: #{tpu_custom_call.1} parent=11 // pred_region
          _
        $region20: #{tpu_custom_call.1} parent=11 // pred_fallthru
          _
        // Predicated region
        $region21: #{tpu_custom_call.1} parent=11 // pred_check
          %p412 = pneg %p153
        $region22: #{tpu_custom_call.1} parent=11 // pred_check_branch
          %414 = sbr.rel (%p412) target = $region24
        $region23: #{tpu_custom_call.1} parent=11 // pred_region
          _
        $region24: #{tpu_custom_call.1} parent=11 // pred_fallthru
          _
        // Predicated region
        $region25: #{tpu_custom_call.1} parent=11 // pred_check
          %p415 = pneg %p174
        $region26: #{tpu_custom_call.1} parent=11 // pred_check_branch
          %417 = sbr.rel (%p415) target = $region28
        $region27: #{tpu_custom_call.1} parent=11 // pred_region
          _
        $region28: #{tpu_custom_call.1} parent=11 // pred_fallthru
          _
        // Predicated region
        $region29: #{tpu_custom_call.1} parent=11 // pred_check
          %p418 = pneg %p195
        $region30: #{tpu_custom_call.1} parent=11 // pred_check_branch
          %420 = sbr.rel (%p418) target = $region32
        $region31: #{tpu_custom_call.1} parent=11 // pred_region
          _
        $region32: #{tpu_custom_call.1} parent=11 // pred_fallthru
          _
        // Predicated region
        $region33: #{tpu_custom_call.1} parent=11 // pred_check
          %p421 = pneg %p216
        $region34: #{tpu_custom_call.1} parent=11 // pred_check_branch
          %423 = sbr.rel (%p421) target = $region36
        $region35: #{tpu_custom_call.1} parent=11 // pred_region
          _
        $region36: #{tpu_custom_call.1} parent=11 // pred_fallthru
          _
        // Predicated region
        $region37: #{tpu_custom_call.1} parent=11 // pred_check
          %p424 = pneg %p237
        $region38: #{tpu_custom_call.1} parent=11 // pred_check_branch
          %426 = sbr.rel (%p424) target = $region40
        $region39: #{tpu_custom_call.1} parent=11 // pred_region
          _
        $region40: #{tpu_custom_call.1} parent=11 // pred_fallthru
          _
        // Predicated region
        $region41: #{tpu_custom_call.1} parent=11 // pred_check
          %p427 = pneg %p258
        $region42: #{tpu_custom_call.1} parent=11 // pred_check_branch
          %429 = sbr.rel (%p427) target = $region44
        $region43: #{tpu_custom_call.1} parent=11 // pred_region
          _
        $region44: #{tpu_custom_call.1} parent=11 // pred_fallthru
          _
        // Predicated region
        $region45: #{tpu_custom_call.1} parent=11 // pred_check
          %p430 = pneg %p279
        $region46: #{tpu_custom_call.1} parent=11 // pred_check_branch
          %432 = sbr.rel (%p430) target = $region48
        $region47: #{tpu_custom_call.1} parent=11 // pred_region
          _
        $region48: #{tpu_custom_call.1} parent=11 // pred_fallthru
          _
        // Predicated region
        $region49: #{tpu_custom_call.1} parent=11 // pred_check
          %p433 = pneg %p300
        $region50: #{tpu_custom_call.1} parent=11 // pred_check_branch
          %435 = sbr.rel (%p433) target = $region52
        $region51: #{tpu_custom_call.1} parent=11 // pred_region
          _
        $region52: #{tpu_custom_call.1} parent=11 // pred_fallthru
          _
        // Predicated region
        $region53: #{tpu_custom_call.1} parent=11 // pred_check
          %p436 = pneg %p321
        $region54: #{tpu_custom_call.1} parent=11 // pred_check_branch
          %438 = sbr.rel (%p436) target = $region56
        $region55: #{tpu_custom_call.1} parent=11 // pred_region
          _
        $region56: #{tpu_custom_call.1} parent=11 // pred_fallthru
          _
        // Predicated region
        $region57: #{tpu_custom_call.1} parent=11 // pred_check
          %p439 = pneg %p342
        $region58: #{tpu_custom_call.1} parent=11 // pred_check_branch
          %441 = sbr.rel (%p439) target = $region60
        $region59: #{tpu_custom_call.1} parent=11 // pred_region
          _
        $region60: #{tpu_custom_call.1} parent=11 // pred_fallthru
          _
        // Predicated region
        $region61: #{tpu_custom_call.1} parent=11 // pred_check
          %p442 = pneg %p363
        $region62: #{tpu_custom_call.1} parent=11 // pred_check_branch
          %444 = sbr.rel (%p442) target = $region64
        $region63: #{tpu_custom_call.1} parent=11 // pred_region
          _
        $region64: #{tpu_custom_call.1} parent=11 // pred_fallthru
          _
      $region12: #{tpu_custom_call.1} parent=5 // pred_fallthru
        _
      %p445 = scmp.lt.s32.totalorder %s24, 2
      // Predicated region
      $region65: #{tpu_custom_call.1} parent=5 // pred_check
        %p446 = pneg %p445
      $region66: #{tpu_custom_call.1} parent=5 // pred_check_branch
        %448 = sbr.rel (%p446) target = $region68
      $region67: #{tpu_custom_call.1} parent=5 // pred_region
        // Predicated region
        $region69: #{tpu_custom_call.1} parent=67 // pred_check
          %p449 = pneg %p58
        $region70: #{tpu_custom_call.1} parent=67 // pred_check_branch
          %451 = sbr.rel (%p449) target = $region72
        $region71: #{tpu_custom_call.1} parent=67 // pred_region
          %p452 = scmp.lt.s32.totalorder %s31, 1
          %s453 = scalar_select %p452, %s31, 1
          %p454 = scmp.lt.s32.totalorder %s32, 0
          %s455 = scalar_select %p454, %s32, 0
          %s456 = sadd.s32 %s455, %s453
          %s457 = smul.addr %s456, 8
          %s458 = scalar_lea.vmem %s0, %s457
        $region72: #{tpu_custom_call.1} parent=67 // pred_fallthru
          _
        // Predicated region
        $region73: #{tpu_custom_call.1} parent=67 // pred_check
          %p459 = pneg %p84
        $region74: #{tpu_custom_call.1} parent=67 // pred_check_branch
          %461 = sbr.rel (%p459) target = $region76
        $region75: #{tpu_custom_call.1} parent=67 // pred_region
          %p462 = scmp.lt.s32.totalorder %s31, 1
          %s463 = scalar_select %p462, %s31, 1
          %s464 = smul.addr %s463, 8
          %s465 = scalar_lea.vmem %s1, %s464
        $region76: #{tpu_custom_call.1} parent=67 // pred_fallthru
          _
      $region68: #{tpu_custom_call.1} parent=5 // pred_fallthru
        _
      %p466 = scmp.le.s32.totalorder 1, %s24
      %p467 = scmp.lt.s32.totalorder %s24, 3
      %p468 = pnand %p466, %p467
      %p469 = pneg %p468
      // Predicated region
      $region77: #{tpu_custom_call.1} parent=5 // pred_check
        _
      $region78: #{tpu_custom_call.1} parent=5 // pred_check_branch
        %471 = sbr.rel (%p468) target = $region80
      $region79: #{tpu_custom_call.1} parent=5 // pred_region
        %s472 = ssub.s32 %s24, 1
        %p473 = scmp.lt.s32.totalorder %s33, 1
        %s474 = scalar_select %p473, %s33, 1
        %p475 = scmp.lt.s32.totalorder %s34, 0
        %s476 = scalar_select %p475, %s34, 0
        %s477 = sadd.s32 %s476, %s474
        %s478 = smul.addr %s477, 8
        %s479 = scalar_lea.vmem %s0, %s478
        %p480 = pneg %p64
        %p481 = pneg %p61
        %p482 = scmp.lt.s32.totalorder %s33, 1
        %s483 = scalar_select %p482, %s33, 1
        %s484 = smul.addr %s483, 8
        %s485 = scalar_lea.vmem %s1, %s484
        %p486 = pneg %p90
        %p487 = pneg %p87
        %p488 = pneg %p111
        %p489 = pneg %p108
        %p490 = pneg %p132
        %p491 = pneg %p129
        %p492 = pneg %p153
        %p493 = pneg %p150
        %p494 = pneg %p174
        %p495 = pneg %p171
        %p496 = pneg %p195
        %p497 = pneg %p192
        %p498 = pneg %p216
        %p499 = pneg %p213
        %p500 = pneg %p237
        %p501 = pneg %p234
        %p502 = pneg %p258
        %p503 = pneg %p255
        %p504 = pneg %p279
        %p505 = pneg %p276
        %p506 = pneg %p300
        %p507 = pneg %p297
        %p508 = pneg %p321
        %p509 = pneg %p318
        %p510 = pneg %p342
        %p511 = pneg %p339
        %p512 = pneg %p363
        %p513 = pneg %p360
        %p514 = pneg %p391
        %p515 = pneg %p388
        %s516 = sand.u32 %s378, 1
        %s517 = scalar_lea.sflag [#allocation3], %s516
        %s518 = sand.u32 %s378, 1
        %s519 = smul.addr %s518, 8
        %s520 = scalar_lea.vmem [#allocation2], %s519
        %p521 = scmp.lt.s32.totalorder %s33, 1
        %s522 = scalar_select %p521, %s33, 1
        %p523 = scmp.lt.s32.totalorder %s34, 0
        %s524 = scalar_select %p523, %s34, 0
        %s525 = sadd.s32 %s524, %s522
        %s526 = smul.addr %s525, 8
        %s527 = scalar_lea.vmem %s0, %s526
        %p528 = scmp.lt.s32.totalorder %s33, 1
        %s529 = scalar_select %p528, %s33, 1
        %s530 = smul.addr %s529, 8
        %s531 = scalar_lea.vmem %s1, %s530
        %v533 = vld [vmem:[%s527] sm:$0xff]
        %v534 = vld [vmem:[%s531] sm:$0xff]
        %v535 = vld [vmem:[%s2] sm:$0x1]
        %v536 = vld [vmem:[%s3] sm:$0x1]
        %vm537 = vcmask 261120
        %v538 = vsel %vm537, %v533, 0.0
        %539 = vadd.xlane.f32.xlu0 %v538
        %v540 = vpop.xlane.xlu0 %539
        %v541 = vrcp.pop 32.0
        %v542 = vmul.f32 %v540, %v541
        %v543 = vsub.f32 %v533, %v542
        %v544 = vmul.f32 %v543, %v543
        %v545 = vsel %vm537, %v544, 0.0
        %546 = vadd.xlane.f32.xlu0 %v545
        %v547 = vpop.xlane.xlu0 %546
        %v548 = vmul.f32 %v547, %v541
        %v549 = vadd.f32 %v548, 1e-05
        %v550 = vrsqrt.pop %v549
        %v551 = vmul.f32 %v543, %v550
        %v553 = vlaneseq
        %v554 = vshrl.u32 %v553, 7
        %v555 = vsub.s32 0, %v554
        %v556 = vrot.slane %v535, %v555
        %v558 = vmul.f32 %v556, %v551
        %v560 = vlaneseq
        %v561 = vshrl.u32 %v560, 7
        %v562 = vsub.s32 0, %v561
        %v563 = vrot.slane %v536, %v562
        %v565 = vadd.f32 %v558, %v563
        %v566 = vpack.c.bf16 %v565, %v565
        %v567 = vsel %vm537, %v534, 0.0
        %568 = vadd.xlane.f32.xlu0 %v567
        %v569 = vpop.xlane.xlu0 %568
        %v570 = vmul.f32 %v569, %v541
        %v571 = vsub.f32 %v534, %v570
        %v572 = vmul.f32 %v571, %v571
        %v573 = vsel %vm537, %v572, 0.0
        %574 = vadd.xlane.f32.xlu0 %v573
        %v575 = vpop.xlane.xlu0 %574
        %v576 = vmul.f32 %v575, %v541
        %v577 = vadd.f32 %v576, 1e-05
        %v578 = vrsqrt.pop %v577
        %v579 = vmul.f32 %v571, %v578
        %v580 = vmul.f32 %v556, %v579
        %v581 = vadd.f32 %v580, %v563
        %v582 = vpack.c.bf16 %v581, %v581
        %s583 = smul.u32 %s34, 8
        %v584 = vlaneseq
        %v585 = vshrl.u32 %v584, 7
        %v586 = vstv %s583
        %v587 = vadd.s32 %v586, %v585
        %v588 = vlaneseq
        %v589 = vand.u32 %v588, 127
        %vm590 = vcmp.gt.s32.totalorder %v589, %v587
        %v591 = vld [vmem:[%s6] sm:$0xf]
        %v592 = vld [vmem:[%s6 + $0x4] sm:$0xf]
        %v593 = vld [vmem:[%s6 + $0x8] sm:$0xf]
        %v594 = vld [vmem:[%s6 + $0xc] sm:$0xf]
        %v599 = vunpack.c.l.b16 %v591
        %v600 = vunpack.c.l.b16 %v592
        %v601 = vunpack.c.l.b16 %v593
        %v602 = vunpack.c.l.b16 %v594
        %v603 = vpack.c.b16 %v600, %v599
        %v604 = vpack.c.b16 %v602, %v601
        %v608 = vsel %vm537, %v566, 0
        %610 = vmatprep.subr.bf16.mxu0 0
        %611 = vmatpush1.bf16.msra.mxu0 %v603
        %612 = vmatprep.subr.bf16.mxu0 0
        %613 = vmatpush1.bf16.msra.mxu0 %v604
        %614 = vmatprep.subr.bf16.mxu0 0
        %615 = vmatpush1.bf16.msra.mxu0 0
        %616 = vmatprep.subr.bf16.mxu0 0
        %617 = vmatpush1.bf16.msra.mxu0 0
        %618 = vmatprep.subr.bf16.mxu0 0
        %619 = vmatpush1.bf16.msra.mxu0 0
        %620 = vmatprep.subr.bf16.mxu0 0
        %621 = vmatpush1.bf16.msra.mxu0 0
        %622 = vmatprep.subr.bf16.mxu0 0
        %623 = vmatpush1.bf16.msra.mxu0 0
        %624 = vmatprep.subr.bf16.mxu0 0
        %625 = vmatpush1.bf16.msra.mxu0 0
        %626 = vmatprep.subr.bf16.mxu0 0
        %627 = vmatpush1.bf16.msra.mxu0 0
        %628 = vmatprep.subr.bf16.mxu0 0
        %629 = vmatpush1.bf16.msra.mxu0 0
        %630 = vmatprep.subr.bf16.mxu0 0
        %631 = vmatpush1.bf16.msra.mxu0 0
        %632 = vmatprep.subr.bf16.mxu0 0
        %633 = vmatpush1.bf16.msra.mxu0 0
        %634 = vmatprep.subr.bf16.mxu0 0
        %635 = vmatpush1.bf16.msra.mxu0 0
        %636 = vmatprep.subr.bf16.mxu0 0
        %637 = vmatpush1.bf16.msra.mxu0 0
        %638 = vmatprep.subr.bf16.mxu0 0
        %639 = vmatpush1.bf16.msra.mxu0 0
        %640 = vmatprep.subr.bf16.mxu0 0
        %641 = vmatpush1.bf16.msra.mxu0 0
        %642 = vmatprep.mubr.bf16.mxu0 0
        %643 = vmatmul.mubr.bf16.gmra.mrb[0].mxu0 %v608
        %v644 = vpop.f32.mrb[0].mxu0
        %v645 = vadd.f32 0.0, %v644
        %v646 = vpop.f32.mrb[0].mxu0
        %v647 = vpop.f32.mrb[0].mxu0
        %v648 = vpop.f32.mrb[0].mxu0
        %649 = vdwg.mxu0
        %v650 = vmul.f32 %v645, 0.35355338
        %v651 = vld [vmem:[%s7] sm:$0xf]
        %v652 = vld [vmem:[%s7 + $0x4] sm:$0xf]
        %v653 = vld [vmem:[%s7 + $0x8] sm:$0xf]
        %v654 = vld [vmem:[%s7 + $0xc] sm:$0xf]
        %v659 = vunpack.c.l.b16 %v651
        %v660 = vunpack.c.l.b16 %v652
        %v661 = vunpack.c.l.b16 %v653
        %v662 = vunpack.c.l.b16 %v654
        %v663 = vpack.c.b16 %v660, %v659
        %v664 = vpack.c.b16 %v662, %v661
        %v668 = vsel %vm537, %v582, 0
        %670 = vmatprep.subr.bf16.mxu0 0
        %671 = vmatpush1.bf16.msra.mxu0 %v663
        %672 = vmatprep.subr.bf16.mxu0 0
        %673 = vmatpush1.bf16.msra.mxu0 %v664
        %674 = vmatprep.subr.bf16.mxu0 0
        %675 = vmatpush1.bf16.msra.mxu0 0
        %676 = vmatprep.subr.bf16.mxu0 0
        %677 = vmatpush1.bf16.msra.mxu0 0
        %678 = vmatprep.subr.bf16.mxu0 0
        %679 = vmatpush1.bf16.msra.mxu0 0
        %680 = vmatprep.subr.bf16.mxu0 0
        %681 = vmatpush1.bf16.msra.mxu0 0
        %682 = vmatprep.subr.bf16.mxu0 0
        %683 = vmatpush1.bf16.msra.mxu0 0
        %684 = vmatprep.subr.bf16.mxu0 0
        %685 = vmatpush1.bf16.msra.mxu0 0
        %686 = vmatprep.subr.bf16.mxu0 0
        %687 = vmatpush1.bf16.msra.mxu0 0
        %688 = vmatprep.subr.bf16.mxu0 0
        %689 = vmatpush1.bf16.msra.mxu0 0
        %690 = vmatprep.subr.bf16.mxu0 0
        %691 = vmatpush1.bf16.msra.mxu0 0
        %692 = vmatprep.subr.bf16.mxu0 0
        %693 = vmatpush1.bf16.msra.mxu0 0
        %694 = vmatprep.subr.bf16.mxu0 0
        %695 = vmatpush1.bf16.msra.mxu0 0
        %696 = vmatprep.subr.bf16.mxu0 0
        %697 = vmatpush1.bf16.msra.mxu0 0
        %698 = vmatprep.subr.bf16.mxu0 0
        %699 = vmatpush1.bf16.msra.mxu0 0
        %700 = vmatprep.subr.bf16.mxu0 0
        %701 = vmatpush1.bf16.msra.mxu0 0
        %702 = vmatprep.mubr.bf16.mxu0 0
        %703 = vmatmul.mubr.bf16.gmra.mrb[0].mxu0 %v668
        %v704 = vpop.f32.mrb[0].mxu0
        %v705 = vadd.f32 0.0, %v704
        %v706 = vpop.f32.mrb[0].mxu0
        %v707 = vpop.f32.mrb[0].mxu0
        %v708 = vpop.f32.mrb[0].mxu0
        %709 = vdwg.mxu0
        %v710 = vld [vmem:[%s8] sm:$0xf]
        %v711 = vld [vmem:[%s8 + $0x4] sm:$0xf]
        %v712 = vld [vmem:[%s8 + $0x8] sm:$0xf]
        %v713 = vld [vmem:[%s8 + $0xc] sm:$0xf]
        %v718 = vunpack.c.l.b16 %v710
        %v719 = vunpack.c.l.b16 %v711
        %v720 = vunpack.c.l.b16 %v712
        %v721 = vunpack.c.l.b16 %v713
        %v722 = vpack.c.b16 %v719, %v718
        %v723 = vpack.c.b16 %v721, %v720
        %726 = vmatprep.subr.bf16.mxu0 0
        %727 = vmatpush1.bf16.msra.mxu0 %v722
        %728 = vmatprep.subr.bf16.mxu0 0
        %729 = vmatpush1.bf16.msra.mxu0 %v723
        %730 = vmatprep.subr.bf16.mxu0 0
        %731 = vmatpush1.bf16.msra.mxu0 0
        %732 = vmatprep.subr.bf16.mxu0 0
        %733 = vmatpush1.bf16.msra.mxu0 0
        %734 = vmatprep.subr.bf16.mxu0 0
        %735 = vmatpush1.bf16.msra.mxu0 0
        %736 = vmatprep.subr.bf16.mxu0 0
        %737 = vmatpush1.bf16.msra.mxu0 0
        %738 = vmatprep.subr.bf16.mxu0 0
        %739 = vmatpush1.bf16.msra.mxu0 0
        %740 = vmatprep.subr.bf16.mxu0 0
        %741 = vmatpush1.bf16.msra.mxu0 0
        %742 = vmatprep.subr.bf16.mxu0 0
        %743 = vmatpush1.bf16.msra.mxu0 0
        %744 = vmatprep.subr.bf16.mxu0 0
        %745 = vmatpush1.bf16.msra.mxu0 0
        %746 = vmatprep.subr.bf16.mxu0 0
        %747 = vmatpush1.bf16.msra.mxu0 0
        %748 = vmatprep.subr.bf16.mxu0 0
        %749 = vmatpush1.bf16.msra.mxu0 0
        %750 = vmatprep.subr.bf16.mxu0 0
        %751 = vmatpush1.bf16.msra.mxu0 0
        %752 = vmatprep.subr.bf16.mxu0 0
        %753 = vmatpush1.bf16.msra.mxu0 0
        %754 = vmatprep.subr.bf16.mxu0 0
        %755 = vmatpush1.bf16.msra.mxu0 0
        %756 = vmatprep.subr.bf16.mxu0 0
        %757 = vmatpush1.bf16.msra.mxu0 0
        %758 = vmatprep.mubr.bf16.mxu0 0
        %759 = vmatmul.mubr.bf16.gmra.mrb[0].mxu0 %v668
        %v760 = vpop.f32.mrb[0].mxu0
        %v761 = vadd.f32 0.0, %v760
        %v762 = vpop.f32.mrb[0].mxu0
        %v763 = vpop.f32.mrb[0].mxu0
        %v764 = vpop.f32.mrb[0].mxu0
        %765 = vdwg.mxu0
        %v766 = vpack.c.bf16 %v650, %v650
        %v767 = vpack.c.bf16 %v705, %v705
        %vm768 = vcmask 64512
        %v770 = vsel %vm768, %v766, 0
        %v773 = vsel %vm768, %v767, 0
        %775 = vmatprep.subr.bf16.mxu0 0
        %776 = vmatpush1.bf16.xpose.msra.mxu0 %v773
        %777 = vmatprep.subr.bf16.mxu0 0
        %778 = vmatpush1.bf16.xpose.msra.mxu0 0
        %779 = vmatprep.subr.bf16.mxu0 0
        %780 = vmatpush1.bf16.xpose.msra.mxu0 0
        %781 = vmatprep.subr.bf16.mxu0 0
        %782 = vmatpush1.bf16.xpose.msra.mxu0 0
        %783 = vmatprep.subr.bf16.mxu0 0
        %784 = vmatpush1.bf16.xpose.msra.mxu0 0
        %785 = vmatprep.subr.bf16.mxu0 0
        %786 = vmatpush1.bf16.xpose.msra.mxu0 0
        %787 = vmatprep.subr.bf16.mxu0 0
        %788 = vmatpush1.bf16.xpose.msra.mxu0 0
        %789 = vmatprep.subr.bf16.mxu0 0
        %790 = vmatpush1.bf16.xpose.msra.mxu0 0
        %791 = vmatprep.subr.bf16.mxu0 0
        %792 = vmatpush1.bf16.xpose.msra.mxu0 0
        %793 = vmatprep.subr.bf16.mxu0 0
        %794 = vmatpush1.bf16.xpose.msra.mxu0 0
        %795 = vmatprep.subr.bf16.mxu0 0
        %796 = vmatpush1.bf16.xpose.msra.mxu0 0
        %797 = vmatprep.subr.bf16.mxu0 0
        %798 = vmatpush1.bf16.xpose.msra.mxu0 0
        %799 = vmatprep.subr.bf16.mxu0 0
        %800 = vmatpush1.bf16.xpose.msra.mxu0 0
        %801 = vmatprep.subr.bf16.mxu0 0
        %802 = vmatpush1.bf16.xpose.msra.mxu0 0
        %803 = vmatprep.subr.bf16.mxu0 0
        %804 = vmatpush1.bf16.xpose.msra.mxu0 0
        %805 = vmatprep.subr.bf16.mxu0 0
        %806 = vmatpush1.bf16.xpose.msra.mxu0 0
        %807 = vmatprep.mubr.bf16.mxu0 0
        %808 = vmatmul.mubr.bf16.gmra.mrb[0].mxu0 %v770
        %v809 = vpop.f32.mrb[0].mxu0
        %v810 = vadd.f32 0.0, %v809
        %v811 = vpop.f32.mrb[0].mxu0
        %v812 = vpop.f32.mrb[0].mxu0
        %v813 = vpop.f32.mrb[0].mxu0
        %814 = vdwg.mxu0
        %v815 = vsel %vm590, -1e+30, %v810
        %v816 = vsel %vm768, %v815, -inf
        %817 = vmax.xlane.f32.xlu0 %v816
        %v818 = vpop.xlane.xlu0 %817
        %v819 = vsub.f32 %v815, %v818
        %v820 = vmul.f32 %v819, 1.442695
        %v821 = vpow.pop %v820
        %v822 = vsel %vm768, %v821, 0.0
        %823 = vadd.xlane.f32.xlu0 %v822
        %v824 = vpop.xlane.xlu0 %823
        %v825 = vrcp.pop %v824
        %v826 = vmul.f32 %v821, %v825
        %v827 = vpack.c.bf16 %v826, %v826
        %v828 = vpack.c.bf16 %v761, %v761
        %v830 = vsel %vm768, %v827, 0
        %vm832 = vcmask 1043456
        %v834 = vsel %vm832, %v828, 0
        %836 = vmatprep.subr.bf16.mxu0 0
        %837 = vmatpush1.bf16.msra.mxu0 %v834
        %838 = vmatprep.subr.bf16.mxu0 0
        %839 = vmatpush1.bf16.msra.mxu0 0
        %840 = vmatprep.subr.bf16.mxu0 0
        %841 = vmatpush1.bf16.msra.mxu0 0
        %842 = vmatprep.subr.bf16.mxu0 0
        %843 = vmatpush1.bf16.msra.mxu0 0
        %844 = vmatprep.subr.bf16.mxu0 0
        %845 = vmatpush1.bf16.msra.mxu0 0
        %846 = vmatprep.subr.bf16.mxu0 0
        %847 = vmatpush1.bf16.msra.mxu0 0
        %848 = vmatprep.subr.bf16.mxu0 0
        %849 = vmatpush1.bf16.msra.mxu0 0
        %850 = vmatprep.subr.bf16.mxu0 0
        %851 = vmatpush1.bf16.msra.mxu0 0
        %852 = vmatprep.subr.bf16.mxu0 0
        %853 = vmatpush1.bf16.msra.mxu0 0
        %854 = vmatprep.subr.bf16.mxu0 0
        %855 = vmatpush1.bf16.msra.mxu0 0
        %856 = vmatprep.subr.bf16.mxu0 0
        %857 = vmatpush1.bf16.msra.mxu0 0
        %858 = vmatprep.subr.bf16.mxu0 0
        %859 = vmatpush1.bf16.msra.mxu0 0
        %860 = vmatprep.subr.bf16.mxu0 0
        %861 = vmatpush1.bf16.msra.mxu0 0
        %862 = vmatprep.subr.bf16.mxu0 0
        %863 = vmatpush1.bf16.msra.mxu0 0
        %864 = vmatprep.subr.bf16.mxu0 0
        %865 = vmatpush1.bf16.msra.mxu0 0
        %866 = vmatprep.subr.bf16.mxu0 0
        %867 = vmatpush1.bf16.msra.mxu0 0
        %868 = vmatprep.mubr.bf16.mxu0 0
        %869 = vmatmul.mubr.bf16.gmra.mrb[0].mxu0 %v830
        %v870 = vpop.f32.mrb[0].mxu0
        %v871 = vadd.f32 0.0, %v870
        %v872 = vpop.f32.mrb[0].mxu0
        %v873 = vpop.f32.mrb[0].mxu0
        %v874 = vpop.f32.mrb[0].mxu0
        %875 = vdwg.mxu0
        %v876 = vpack.c.bf16 %v871, %v871
        %v877 = vld [vmem:[%s9] sm:$0xf]
        %s878 = scalar_lea.vmem %s6, 16
        %v879 = vld [vmem:[%s878] sm:$0xf]
        %v880 = vld [vmem:[%s878 + $0x4] sm:$0xf]
        %v881 = vld [vmem:[%s878 + $0x8] sm:$0xf]
        %v882 = vld [vmem:[%s878 + $0xc] sm:$0xf]
        %v887 = vunpack.c.l.b16 %v879
        %v888 = vunpack.c.l.b16 %v880
        %v889 = vunpack.c.l.b16 %v881
        %v890 = vunpack.c.l.b16 %v882
        %v891 = vpack.c.b16 %v888, %v887
        %v892 = vpack.c.b16 %v890, %v889
        %895 = vmatprep.subr.bf16.mxu0 0
        %896 = vmatpush1.bf16.msra.mxu0 %v891
        %897 = vmatprep.subr.bf16.mxu0 0
        %898 = vmatpush1.bf16.msra.mxu0 %v892
        %899 = vmatprep.subr.bf16.mxu0 0
        %900 = vmatpush1.bf16.msra.mxu0 0
        %901 = vmatprep.subr.bf16.mxu0 0
        %902 = vmatpush1.bf16.msra.mxu0 0
        %903 = vmatprep.subr.bf16.mxu0 0
        %904 = vmatpush1.bf16.msra.mxu0 0
        %905 = vmatprep.subr.bf16.mxu0 0
        %906 = vmatpush1.bf16.msra.mxu0 0
        %907 = vmatprep.subr.bf16.mxu0 0
        %908 = vmatpush1.bf16.msra.mxu0 0
        %909 = vmatprep.subr.bf16.mxu0 0
        %910 = vmatpush1.bf16.msra.mxu0 0
        %911 = vmatprep.subr.bf16.mxu0 0
        %912 = vmatpush1.bf16.msra.mxu0 0
        %913 = vmatprep.subr.bf16.mxu0 0
        %914 = vmatpush1.bf16.msra.mxu0 0
        %915 = vmatprep.subr.bf16.mxu0 0
        %916 = vmatpush1.bf16.msra.mxu0 0
        %917 = vmatprep.subr.bf16.mxu0 0
        %918 = vmatpush1.bf16.msra.mxu0 0
        %919 = vmatprep.subr.bf16.mxu0 0
        %920 = vmatpush1.bf16.msra.mxu0 0
        %921 = vmatprep.subr.bf16.mxu0 0
        %922 = vmatpush1.bf16.msra.mxu0 0
        %923 = vmatprep.subr.bf16.mxu0 0
        %924 = vmatpush1.bf16.msra.mxu0 0
        %925 = vmatprep.subr.bf16.mxu0 0
        %926 = vmatpush1.bf16.msra.mxu0 0
        %927 = vmatprep.mubr.bf16.mxu0 0
        %928 = vmatmul.mubr.bf16.gmra.mrb[0].mxu0 %v608
        %v929 = vpop.f32.mrb[0].mxu0
        %v930 = vadd.f32 0.0, %v929
        %v931 = vpop.f32.mrb[0].mxu0
        %v932 = vpop.f32.mrb[0].mxu0
        %v933 = vpop.f32.mrb[0].mxu0
        %934 = vdwg.mxu0
        %v935 = vmul.f32 %v930, 0.35355338
        %s936 = scalar_lea.vmem %s7, 16
        %v937 = vld [vmem:[%s936] sm:$0xf]
        %v938 = vld [vmem:[%s936 + $0x4] sm:$0xf]
        %v939 = vld [vmem:[%s936 + $0x8] sm:$0xf]
        %v940 = vld [vmem:[%s936 + $0xc] sm:$0xf]
        %v945 = vunpack.c.l.b16 %v937
        %v946 = vunpack.c.l.b16 %v938
        %v947 = vunpack.c.l.b16 %v939
        %v948 = vunpack.c.l.b16 %v940
        %v949 = vpack.c.b16 %v946, %v945
        %v950 = vpack.c.b16 %v948, %v947
        %953 = vmatprep.subr.bf16.mxu0 0
        %954 = vmatpush1.bf16.msra.mxu0 %v949
        %955 = vmatprep.subr.bf16.mxu0 0
        %956 = vmatpush1.bf16.msra.mxu0 %v950
        %957 = vmatprep.subr.bf16.mxu0 0
        %958 = vmatpush1.bf16.msra.mxu0 0
        %959 = vmatprep.subr.bf16.mxu0 0
        %960 = vmatpush1.bf16.msra.mxu0 0
        %961 = vmatprep.subr.bf16.mxu0 0
        %962 = vmatpush1.bf16.msra.mxu0 0
        %963 = vmatprep.subr.bf16.mxu0 0
        %964 = vmatpush1.bf16.msra.mxu0 0
        %965 = vmatprep.subr.bf16.mxu0 0
        %966 = vmatpush1.bf16.msra.mxu0 0
        %967 = vmatprep.subr.bf16.mxu0 0
        %968 = vmatpush1.bf16.msra.mxu0 0
        %969 = vmatprep.subr.bf16.mxu0 0
        %970 = vmatpush1.bf16.msra.mxu0 0
        %971 = vmatprep.subr.bf16.mxu0 0
        %972 = vmatpush1.bf16.msra.mxu0 0
        %973 = vmatprep.subr.bf16.mxu0 0
        %974 = vmatpush1.bf16.msra.mxu0 0
        %975 = vmatprep.subr.bf16.mxu0 0
        %976 = vmatpush1.bf16.msra.mxu0 0
        %977 = vmatprep.subr.bf16.mxu0 0
        %978 = vmatpush1.bf16.msra.mxu0 0
        %979 = vmatprep.subr.bf16.mxu0 0
        %980 = vmatpush1.bf16.msra.mxu0 0
        %981 = vmatprep.subr.bf16.mxu0 0
        %982 = vmatpush1.bf16.msra.mxu0 0
        %983 = vmatprep.subr.bf16.mxu0 0
        %984 = vmatpush1.bf16.msra.mxu0 0
        %985 = vmatprep.mubr.bf16.mxu0 0
        %986 = vmatmul.mubr.bf16.gmra.mrb[0].mxu0 %v668
        %v987 = vpop.f32.mrb[0].mxu0
        %v988 = vadd.f32 0.0, %v987
        %v989 = vpop.f32.mrb[0].mxu0
        %v990 = vpop.f32.mrb[0].mxu0
        %v991 = vpop.f32.mrb[0].mxu0
        %992 = vdwg.mxu0
        %s993 = scalar_lea.vmem %s8, 16
        %v994 = vld [vmem:[%s993] sm:$0xf]
        %v995 = vld [vmem:[%s993 + $0x4] sm:$0xf]
        %v996 = vld [vmem:[%s993 + $0x8] sm:$0xf]
        %v997 = vld [vmem:[%s993 + $0xc] sm:$0xf]
        %v1002 = vunpack.c.l.b16 %v994
        %v1003 = vunpack.c.l.b16 %v995
        %v1004 = vunpack.c.l.b16 %v996
        %v1005 = vunpack.c.l.b16 %v997
        %v1006 = vpack.c.b16 %v1003, %v1002
        %v1007 = vpack.c.b16 %v1005, %v1004
        %1010 = vmatprep.subr.bf16.mxu0 0
        %1011 = vmatpush1.bf16.msra.mxu0 %v1006
        %1012 = vmatprep.subr.bf16.mxu0 0
        %1013 = vmatpush1.bf16.msra.mxu0 %v1007
        %1014 = vmatprep.subr.bf16.mxu0 0
        %1015 = vmatpush1.bf16.msra.mxu0 0
        %1016 = vmatprep.subr.bf16.mxu0 0
        %1017 = vmatpush1.bf16.msra.mxu0 0
        %1018 = vmatprep.subr.bf16.mxu0 0
        %1019 = vmatpush1.bf16.msra.mxu0 0
        %1020 = vmatprep.subr.bf16.mxu0 0
        %1021 = vmatpush1.bf16.msra.mxu0 0
        %1022 = vmatprep.subr.bf16.mxu0 0
        %1023 = vmatpush1.bf16.msra.mxu0 0
        %1024 = vmatprep.subr.bf16.mxu0 0
        %1025 = vmatpush1.bf16.msra.mxu0 0
        %1026 = vmatprep.subr.bf16.mxu0 0
        %1027 = vmatpush1.bf16.msra.mxu0 0
        %1028 = vmatprep.subr.bf16.mxu0 0
        %1029 = vmatpush1.bf16.msra.mxu0 0
        %1030 = vmatprep.subr.bf16.mxu0 0
        %1031 = vmatpush1.bf16.msra.mxu0 0
        %1032 = vmatprep.subr.bf16.mxu0 0
        %1033 = vmatpush1.bf16.msra.mxu0 0
        %1034 = vmatprep.subr.bf16.mxu0 0
        %1035 = vmatpush1.bf16.msra.mxu0 0
        %1036 = vmatprep.subr.bf16.mxu0 0
        %1037 = vmatpush1.bf16.msra.mxu0 0
        %1038 = vmatprep.subr.bf16.mxu0 0
        %1039 = vmatpush1.bf16.msra.mxu0 0
        %1040 = vmatprep.subr.bf16.mxu0 0
        %1041 = vmatpush1.bf16.msra.mxu0 0
        %1042 = vmatprep.mubr.bf16.mxu0 0
        %1043 = vmatmul.mubr.bf16.gmra.mrb[0].mxu0 %v668
        %v1044 = vpop.f32.mrb[0].mxu0
        %v1045 = vadd.f32 0.0, %v1044
        %v1046 = vpop.f32.mrb[0].mxu0
        %v1047 = vpop.f32.mrb[0].mxu0
        %v1048 = vpop.f32.mrb[0].mxu0
        %1049 = vdwg.mxu0
        %v1050 = vpack.c.bf16 %v935, %v935
        %v1051 = vpack.c.bf16 %v988, %v988
        %v1053 = vsel %vm768, %v1050, 0
        %v1056 = vsel %vm768, %v1051, 0
        %1058 = vmatprep.subr.bf16.mxu0 0
        %1059 = vmatpush1.bf16.xpose.msra.mxu0 %v1056
        %1060 = vmatprep.subr.bf16.mxu0 0
        %1061 = vmatpush1.bf16.xpose.msra.mxu0 0
        %1062 = vmatprep.subr.bf16.mxu0 0
        %1063 = vmatpush1.bf16.xpose.msra.mxu0 0
        %1064 = vmatprep.subr.bf16.mxu0 0
        %1065 = vmatpush1.bf16.xpose.msra.mxu0 0
        %1066 = vmatprep.subr.bf16.mxu0 0
        %1067 = vmatpush1.bf16.xpose.msra.mxu0 0
        %1068 = vmatprep.subr.bf16.mxu0 0
        %1069 = vmatpush1.bf16.xpose.msra.mxu0 0
        %1070 = vmatprep.subr.bf16.mxu0 0
        %1071 = vmatpush1.bf16.xpose.msra.mxu0 0
        %1072 = vmatprep.subr.bf16.mxu0 0
        %1073 = vmatpush1.bf16.xpose.msra.mxu0 0
        %1074 = vmatprep.subr.bf16.mxu0 0
        %1075 = vmatpush1.bf16.xpose.msra.mxu0 0
        %1076 = vmatprep.subr.bf16.mxu0 0
        %1077 = vmatpush1.bf16.xpose.msra.mxu0 0
        %1078 = vmatprep.subr.bf16.mxu0 0
        %1079 = vmatpush1.bf16.xpose.msra.mxu0 0
        %1080 = vmatprep.subr.bf16.mxu0 0
        %1081 = vmatpush1.bf16.xpose.msra.mxu0 0
        %1082 = vmatprep.subr.bf16.mxu0 0
        %1083 = vmatpush1.bf16.xpose.msra.mxu0 0
        %1084 = vmatprep.subr.bf16.mxu0 0
        %1085 = vmatpush1.bf16.xpose.msra.mxu0 0
        %1086 = vmatprep.subr.bf16.mxu0 0
        %1087 = vmatpush1.bf16.xpose.msra.mxu0 0
        %1088 = vmatprep.subr.bf16.mxu0 0
        %1089 = vmatpush1.bf16.xpose.msra.mxu0 0
        %1090 = vmatprep.mubr.bf16.mxu0 0
        %1091 = vmatmul.mubr.bf16.gmra.mrb[0].mxu0 %v1053
        %v1092 = vpop.f32.mrb[0].mxu0
        %v1093 = vadd.f32 0.0, %v1092
        %v1094 = vpop.f32.mrb[0].mxu0
        %v1095 = vpop.f32.mrb[0].mxu0
        %v1096 = vpop.f32.mrb[0].mxu0
        %1097 = vdwg.mxu0
        %v1098 = vsel %vm590, -1e+30, %v1093
        %v1099 = vsel %vm768, %v1098, -inf
        %1100 = vmax.xlane.f32.xlu0 %v1099
        %v1101 = vpop.xlane.xlu0 %1100
        %v1102 = vsub.f32 %v1098, %v1101
        %v1103 = vmul.f32 %v1102, 1.442695
        %v1104 = vpow.pop %v1103
        %v1105 = vsel %vm768, %v1104, 0.0
        %1106 = vadd.xlane.f32.xlu0 %v1105
        %v1107 = vpop.xlane.xlu0 %1106
        %v1108 = vrcp.pop %v1107
        %v1109 = vmul.f32 %v1104, %v1108
        %v1110 = vpack.c.bf16 %v1109, %v1109
        %v1111 = vpack.c.bf16 %v1045, %v1045
        %v1113 = vsel %vm768, %v1110, 0
        %v1116 = vsel %vm832, %v1111, 0
        %1118 = vmatprep.subr.bf16.mxu0 0
        %1119 = vmatpush1.bf16.msra.mxu0 %v1116
        %1120 = vmatprep.subr.bf16.mxu0 0
        %1121 = vmatpush1.bf16.msra.mxu0 0
        %1122 = vmatprep.subr.bf16.mxu0 0
        %1123 = vmatpush1.bf16.msra.mxu0 0
        %1124 = vmatprep.subr.bf16.mxu0 0
        %1125 = vmatpush1.bf16.msra.mxu0 0
        %1126 = vmatprep.subr.bf16.mxu0 0
        %1127 = vmatpush1.bf16.msra.mxu0 0
        %1128 = vmatprep.subr.bf16.mxu0 0
        %1129 = vmatpush1.bf16.msra.mxu0 0
        %1130 = vmatprep.subr.bf16.mxu0 0
        %1131 = vmatpush1.bf16.msra.mxu0 0
        %1132 = vmatprep.subr.bf16.mxu0 0
        %1133 = vmatpush1.bf16.msra.mxu0 0
        %1134 = vmatprep.subr.bf16.mxu0 0
        %1135 = vmatpush1.bf16.msra.mxu0 0
        %1136 = vmatprep.subr.bf16.mxu0 0
        %1137 = vmatpush1.bf16.msra.mxu0 0
        %1138 = vmatprep.subr.bf16.mxu0 0
        %1139 = vmatpush1.bf16.msra.mxu0 0
        %1140 = vmatprep.subr.bf16.mxu0 0
        %1141 = vmatpush1.bf16.msra.mxu0 0
        %1142 = vmatprep.subr.bf16.mxu0 0
        %1143 = vmatpush1.bf16.msra.mxu0 0
        %1144 = vmatprep.subr.bf16.mxu0 0
        %1145 = vmatpush1.bf16.msra.mxu0 0
        %1146 = vmatprep.subr.bf16.mxu0 0
        %1147 = vmatpush1.bf16.msra.mxu0 0
        %1148 = vmatprep.subr.bf16.mxu0 0
        %1149 = vmatpush1.bf16.msra.mxu0 0
        %1150 = vmatprep.mubr.bf16.mxu0 0
        %1151 = vmatmul.mubr.bf16.gmra.mrb[0].mxu0 %v1113
        %v1152 = vpop.f32.mrb[0].mxu0
        %v1153 = vadd.f32 0.0, %v1152
        %v1154 = vpop.f32.mrb[0].mxu0
        %v1155 = vpop.f32.mrb[0].mxu0
        %v1156 = vpop.f32.mrb[0].mxu0
        %1157 = vdwg.mxu0
        %v1158 = vpack.c.bf16 %v1153, %v1153
        %s1159 = scalar_lea.vmem %s9, 4
        %v1160 = vld [vmem:[%s1159] sm:$0xf]
        %v1162 = vsel %vm768, %v1158, 0
        %v1165 = vsel %vm832, %v1160, 0
        %1167 = vmatprep.subr.bf16.mxu0 0
        %1168 = vmatpush1.bf16.msra.mxu0 %v1165
        %1169 = vmatprep.subr.bf16.mxu0 0
        %1170 = vmatpush1.bf16.msra.mxu0 0
        %1171 = vmatprep.subr.bf16.mxu0 0
        %1172 = vmatpush1.bf16.msra.mxu0 0
        %1173 = vmatprep.subr.bf16.mxu0 0
        %1174 = vmatpush1.bf16.msra.mxu0 0
        %1175 = vmatprep.subr.bf16.mxu0 0
        %1176 = vmatpush1.bf16.msra.mxu0 0
        %1177 = vmatprep.subr.bf16.mxu0 0
        %1178 = vmatpush1.bf16.msra.mxu0 0
        %1179 = vmatprep.subr.bf16.mxu0 0
        %1180 = vmatpush1.bf16.msra.mxu0 0
        %1181 = vmatprep.subr.bf16.mxu0 0
        %1182 = vmatpush1.bf16.msra.mxu0 0
        %1183 = vmatprep.subr.bf16.mxu0 0
        %1184 = vmatpush1.bf16.msra.mxu0 0
        %1185 = vmatprep.subr.bf16.mxu0 0
        %1186 = vmatpush1.bf16.msra.mxu0 0
        %1187 = vmatprep.subr.bf16.mxu0 0
        %1188 = vmatpush1.bf16.msra.mxu0 0
        %1189 = vmatprep.subr.bf16.mxu0 0
        %1190 = vmatpush1.bf16.msra.mxu0 0
        %1191 = vmatprep.subr.bf16.mxu0 0
        %1192 = vmatpush1.bf16.msra.mxu0 0
        %1193 = vmatprep.subr.bf16.mxu0 0
        %1194 = vmatpush1.bf16.msra.mxu0 0
        %1195 = vmatprep.subr.bf16.mxu0 0
        %1196 = vmatpush1.bf16.msra.mxu0 0
        %1197 = vmatprep.subr.bf16.mxu0 0
        %1198 = vmatpush1.bf16.msra.mxu0 0
        %1199 = vmatprep.mubr.bf16.mxu0 0
        %1200 = vmatmul.mubr.bf16.gmra.mrb[0].mxu0 %v1162
        %v1201 = vpop.f32.mrb[0].mxu0
        %v1202 = vadd.f32 0.0, %v1201
        %v1203 = vpop.f32.mrb[0].mxu0
        %v1204 = vpop.f32.mrb[0].mxu0
        %v1205 = vpop.f32.mrb[0].mxu0
        %1206 = vdwg.mxu0
        %v1208 = vsel %vm768, %v876, 0
        %v1211 = vsel %vm832, %v877, 0
        %1213 = vmatprep.subr.bf16.mxu0 0
        %1214 = vmatpush1.bf16.msra.mxu0 %v1211
        %1215 = vmatprep.subr.bf16.mxu0 0
        %1216 = vmatpush1.bf16.msra.mxu0 0
        %1217 = vmatprep.subr.bf16.mxu0 0
        %1218 = vmatpush1.bf16.msra.mxu0 0
        %1219 = vmatprep.subr.bf16.mxu0 0
        %1220 = vmatpush1.bf16.msra.mxu0 0
        %1221 = vmatprep.subr.bf16.mxu0 0
        %1222 = vmatpush1.bf16.msra.mxu0 0
        %1223 = vmatprep.subr.bf16.mxu0 0
        %1224 = vmatpush1.bf16.msra.mxu0 0
        %1225 = vmatprep.subr.bf16.mxu0 0
        %1226 = vmatpush1.bf16.msra.mxu0 0
        %1227 = vmatprep.subr.bf16.mxu0 0
        %1228 = vmatpush1.bf16.msra.mxu0 0
        %1229 = vmatprep.subr.bf16.mxu0 0
        %1230 = vmatpush1.bf16.msra.mxu0 0
        %1231 = vmatprep.subr.bf16.mxu0 0
        %1232 = vmatpush1.bf16.msra.mxu0 0
        %1233 = vmatprep.subr.bf16.mxu0 0
        %1234 = vmatpush1.bf16.msra.mxu0 0
        %1235 = vmatprep.subr.bf16.mxu0 0
        %1236 = vmatpush1.bf16.msra.mxu0 0
        %1237 = vmatprep.subr.bf16.mxu0 0
        %1238 = vmatpush1.bf16.msra.mxu0 0
        %1239 = vmatprep.subr.bf16.mxu0 0
        %1240 = vmatpush1.bf16.msra.mxu0 0
        %1241 = vmatprep.subr.bf16.mxu0 0
        %1242 = vmatpush1.bf16.msra.mxu0 0
        %1243 = vmatprep.subr.bf16.mxu0 0
        %1244 = vmatpush1.bf16.msra.mxu0 0
        %1245 = vmatprep.mubr.bf16.mxu0 0
        %1246 = vmatmul.mubr.bf16.gmra.mrb[0].mxu0 %v1208
        %v1247 = vpop.f32.mrb[0].mxu0
        %v1248 = vadd.f32 %v1202, %v1247
        %v1249 = vpop.f32.mrb[0].mxu0
        %v1250 = vpop.f32.mrb[0].mxu0
        %v1251 = vpop.f32.mrb[0].mxu0
        %1252 = vdwg.mxu0
        %s1253 = scalar_lea.vmem %s6, 32
        %v1254 = vld [vmem:[%s1253] sm:$0xf]
        %v1255 = vld [vmem:[%s1253 + $0x4] sm:$0xf]
        %v1256 = vld [vmem:[%s1253 + $0x8] sm:$0xf]
        %v1257 = vld [vmem:[%s1253 + $0xc] sm:$0xf]
        %v1262 = vunpack.c.l.b16 %v1254
        %v1263 = vunpack.c.l.b16 %v1255
        %v1264 = vunpack.c.l.b16 %v1256
        %v1265 = vunpack.c.l.b16 %v1257
        %v1266 = vpack.c.b16 %v1263, %v1262
        %v1267 = vpack.c.b16 %v1265, %v1264
        %1270 = vmatprep.subr.bf16.mxu0 0
        %1271 = vmatpush1.bf16.msra.mxu0 %v1266
        %1272 = vmatprep.subr.bf16.mxu0 0
        %1273 = vmatpush1.bf16.msra.mxu0 %v1267
        %1274 = vmatprep.subr.bf16.mxu0 0
        %1275 = vmatpush1.bf16.msra.mxu0 0
        %1276 = vmatprep.subr.bf16.mxu0 0
        %1277 = vmatpush1.bf16.msra.mxu0 0
        %1278 = vmatprep.subr.bf16.mxu0 0
        %1279 = vmatpush1.bf16.msra.mxu0 0
        %1280 = vmatprep.subr.bf16.mxu0 0
        %1281 = vmatpush1.bf16.msra.mxu0 0
        %1282 = vmatprep.subr.bf16.mxu0 0
        %1283 = vmatpush1.bf16.msra.mxu0 0
        %1284 = vmatprep.subr.bf16.mxu0 0
        %1285 = vmatpush1.bf16.msra.mxu0 0
        %1286 = vmatprep.subr.bf16.mxu0 0
        %1287 = vmatpush1.bf16.msra.mxu0 0
        %1288 = vmatprep.subr.bf16.mxu0 0
        %1289 = vmatpush1.bf16.msra.mxu0 0
        %1290 = vmatprep.subr.bf16.mxu0 0
        %1291 = vmatpush1.bf16.msra.mxu0 0
        %1292 = vmatprep.subr.bf16.mxu0 0
        %1293 = vmatpush1.bf16.msra.mxu0 0
        %1294 = vmatprep.subr.bf16.mxu0 0
        %1295 = vmatpush1.bf16.msra.mxu0 0
        %1296 = vmatprep.subr.bf16.mxu0 0
        %1297 = vmatpush1.bf16.msra.mxu0 0
        %1298 = vmatprep.subr.bf16.mxu0 0
        %1299 = vmatpush1.bf16.msra.mxu0 0
        %1300 = vmatprep.subr.bf16.mxu0 0
        %1301 = vmatpush1.bf16.msra.mxu0 0
        %1302 = vmatprep.mubr.bf16.mxu0 0
        %1303 = vmatmul.mubr.bf16.gmra.mrb[0].mxu0 %v608
        %v1304 = vpop.f32.mrb[0].mxu0
        %v1305 = vadd.f32 0.0, %v1304
        %v1306 = vpop.f32.mrb[0].mxu0
        %v1307 = vpop.f32.mrb[0].mxu0
        %v1308 = vpop.f32.mrb[0].mxu0
        %1309 = vdwg.mxu0
        %v1310 = vmul.f32 %v1305, 0.35355338
        %s1311 = scalar_lea.vmem %s7, 32
        %v1312 = vld [vmem:[%s1311] sm:$0xf]
        %v1313 = vld [vmem:[%s1311 + $0x4] sm:$0xf]
        %v1314 = vld [vmem:[%s1311 + $0x8] sm:$0xf]
        %v1315 = vld [vmem:[%s1311 + $0xc] sm:$0xf]
        %v1320 = vunpack.c.l.b16 %v1312
        %v1321 = vunpack.c.l.b16 %v1313
        %v1322 = vunpack.c.l.b16 %v1314
        %v1323 = vunpack.c.l.b16 %v1315
        %v1324 = vpack.c.b16 %v1321, %v1320
        %v1325 = vpack.c.b16 %v1323, %v1322
        %1328 = vmatprep.subr.bf16.mxu0 0
        %1329 = vmatpush1.bf16.msra.mxu0 %v1324
        %1330 = vmatprep.subr.bf16.mxu0 0
        %1331 = vmatpush1.bf16.msra.mxu0 %v1325
        %1332 = vmatprep.subr.bf16.mxu0 0
        %1333 = vmatpush1.bf16.msra.mxu0 0
        %1334 = vmatprep.subr.bf16.mxu0 0
        %1335 = vmatpush1.bf16.msra.mxu0 0
        %1336 = vmatprep.subr.bf16.mxu0 0
        %1337 = vmatpush1.bf16.msra.mxu0 0
        %1338 = vmatprep.subr.bf16.mxu0 0
        %1339 = vmatpush1.bf16.msra.mxu0 0
        %1340 = vmatprep.subr.bf16.mxu0 0
        %1341 = vmatpush1.bf16.msra.mxu0 0
        %1342 = vmatprep.subr.bf16.mxu0 0
        %1343 = vmatpush1.bf16.msra.mxu0 0
        %1344 = vmatprep.subr.bf16.mxu0 0
        %1345 = vmatpush1.bf16.msra.mxu0 0
        %1346 = vmatprep.subr.bf16.mxu0 0
        %1347 = vmatpush1.bf16.msra.mxu0 0
        %1348 = vmatprep.subr.bf16.mxu0 0
        %1349 = vmatpush1.bf16.msra.mxu0 0
        %1350 = vmatprep.subr.bf16.mxu0 0
        %1351 = vmatpush1.bf16.msra.mxu0 0
        %1352 = vmatprep.subr.bf16.mxu0 0
        %1353 = vmatpush1.bf16.msra.mxu0 0
        %1354 = vmatprep.subr.bf16.mxu0 0
        %1355 = vmatpush1.bf16.msra.mxu0 0
        %1356 = vmatprep.subr.bf16.mxu0 0
        %1357 = vmatpush1.bf16.msra.mxu0 0
        %1358 = vmatprep.subr.bf16.mxu0 0
        %1359 = vmatpush1.bf16.msra.mxu0 0
        %1360 = vmatprep.mubr.bf16.mxu0 0
        %1361 = vmatmul.mubr.bf16.gmra.mrb[0].mxu0 %v668
        %v1362 = vpop.f32.mrb[0].mxu0
        %v1363 = vadd.f32 0.0, %v1362
        %v1364 = vpop.f32.mrb[0].mxu0
        %v1365 = vpop.f32.mrb[0].mxu0
        %v1366 = vpop.f32.mrb[0].mxu0
        %1367 = vdwg.mxu0
        %s1368 = scalar_lea.vmem %s8, 32
        %v1369 = vld [vmem:[%s1368] sm:$0xf]
        %v1370 = vld [vmem:[%s1368 + $0x4] sm:$0xf]
        %v1371 = vld [vmem:[%s1368 + $0x8] sm:$0xf]
        %v1372 = vld [vmem:[%s1368 + $0xc] sm:$0xf]
        %v1377 = vunpack.c.l.b16 %v1369
        %v1378 = vunpack.c.l.b16 %v1370
        %v1379 = vunpack.c.l.b16 %v1371
        %v1380 = vunpack.c.l.b16 %v1372
        %v1381 = vpack.c.b16 %v1378, %v1377
        %v1382 = vpack.c.b16 %v1380, %v1379
        %1385 = vmatprep.subr.bf16.mxu0 0
        %1386 = vmatpush1.bf16.msra.mxu0 %v1381
        %1387 = vmatprep.subr.bf16.mxu0 0
        %1388 = vmatpush1.bf16.msra.mxu0 %v1382
        %1389 = vmatprep.subr.bf16.mxu0 0
        %1390 = vmatpush1.bf16.msra.mxu0 0
        %1391 = vmatprep.subr.bf16.mxu0 0
        %1392 = vmatpush1.bf16.msra.mxu0 0
        %1393 = vmatprep.subr.bf16.mxu0 0
        %1394 = vmatpush1.bf16.msra.mxu0 0
        %1395 = vmatprep.subr.bf16.mxu0 0
        %1396 = vmatpush1.bf16.msra.mxu0 0
        %1397 = vmatprep.subr.bf16.mxu0 0
        %1398 = vmatpush1.bf16.msra.mxu0 0
        %1399 = vmatprep.subr.bf16.mxu0 0
        %1400 = vmatpush1.bf16.msra.mxu0 0
        %1401 = vmatprep.subr.bf16.mxu0 0
        %1402 = vmatpush1.bf16.msra.mxu0 0
        %1403 = vmatprep.subr.bf16.mxu0 0
        %1404 = vmatpush1.bf16.msra.mxu0 0
        %1405 = vmatprep.subr.bf16.mxu0 0
        %1406 = vmatpush1.bf16.msra.mxu0 0
        %1407 = vmatprep.subr.bf16.mxu0 0
        %1408 = vmatpush1.bf16.msra.mxu0 0
        %1409 = vmatprep.subr.bf16.mxu0 0
        %1410 = vmatpush1.bf16.msra.mxu0 0
        %1411 = vmatprep.subr.bf16.mxu0 0
        %1412 = vmatpush1.bf16.msra.mxu0 0
        %1413 = vmatprep.subr.bf16.mxu0 0
        %1414 = vmatpush1.bf16.msra.mxu0 0
        %1415 = vmatprep.subr.bf16.mxu0 0
        %1416 = vmatpush1.bf16.msra.mxu0 0
        %1417 = vmatprep.mubr.bf16.mxu0 0
        %1418 = vmatmul.mubr.bf16.gmra.mrb[0].mxu0 %v668
        %v1419 = vpop.f32.mrb[0].mxu0
        %v1420 = vadd.f32 0.0, %v1419
        %v1421 = vpop.f32.mrb[0].mxu0
        %v1422 = vpop.f32.mrb[0].mxu0
        %v1423 = vpop.f32.mrb[0].mxu0
        %1424 = vdwg.mxu0
        %v1425 = vpack.c.bf16 %v1310, %v1310
        %v1426 = vpack.c.bf16 %v1363, %v1363
        %v1428 = vsel %vm768, %v1425, 0
        %v1431 = vsel %vm768, %v1426, 0
        %1433 = vmatprep.subr.bf16.mxu0 0
        %1434 = vmatpush1.bf16.xpose.msra.mxu0 %v1431
        %1435 = vmatprep.subr.bf16.mxu0 0
        %1436 = vmatpush1.bf16.xpose.msra.mxu0 0
        %1437 = vmatprep.subr.bf16.mxu0 0
        %1438 = vmatpush1.bf16.xpose.msra.mxu0 0
        %1439 = vmatprep.subr.bf16.mxu0 0
        %1440 = vmatpush1.bf16.xpose.msra.mxu0 0
        %1441 = vmatprep.subr.bf16.mxu0 0
        %1442 = vmatpush1.bf16.xpose.msra.mxu0 0
        %1443 = vmatprep.subr.bf16.mxu0 0
        %1444 = vmatpush1.bf16.xpose.msra.mxu0 0
        %1445 = vmatprep.subr.bf16.mxu0 0
        %1446 = vmatpush1.bf16.xpose.msra.mxu0 0
        %1447 = vmatprep.subr.bf16.mxu0 0
        %1448 = vmatpush1.bf16.xpose.msra.mxu0 0
        %1449 = vmatprep.subr.bf16.mxu0 0
        %1450 = vmatpush1.bf16.xpose.msra.mxu0 0
        %1451 = vmatprep.subr.bf16.mxu0 0
        %1452 = vmatpush1.bf16.xpose.msra.mxu0 0
        %1453 = vmatprep.subr.bf16.mxu0 0
        %1454 = vmatpush1.bf16.xpose.msra.mxu0 0
        %1455 = vmatprep.subr.bf16.mxu0 0
        %1456 = vmatpush1.bf16.xpose.msra.mxu0 0
        %1457 = vmatprep.subr.bf16.mxu0 0
        %1458 = vmatpush1.bf16.xpose.msra.mxu0 0
        %1459 = vmatprep.subr.bf16.mxu0 0
        %1460 = vmatpush1.bf16.xpose.msra.mxu0 0
        %1461 = vmatprep.subr.bf16.mxu0 0
        %1462 = vmatpush1.bf16.xpose.msra.mxu0 0
        %1463 = vmatprep.subr.bf16.mxu0 0
        %1464 = vmatpush1.bf16.xpose.msra.mxu0 0
        %1465 = vmatprep.mubr.bf16.mxu0 0
        %1466 = vmatmul.mubr.bf16.gmra.mrb[0].mxu0 %v1428
        %v1467 = vpop.f32.mrb[0].mxu0
        %v1468 = vadd.f32 0.0, %v1467
        %v1469 = vpop.f32.mrb[0].mxu0
        %v1470 = vpop.f32.mrb[0].mxu0
        %v1471 = vpop.f32.mrb[0].mxu0
        %1472 = vdwg.mxu0
        %v1473 = vsel %vm590, -1e+30, %v1468
        %v1474 = vsel %vm768, %v1473, -inf
        %1475 = vmax.xlane.f32.xlu0 %v1474
        %v1476 = vpop.xlane.xlu0 %1475
        %v1477 = vsub.f32 %v1473, %v1476
        %v1478 = vmul.f32 %v1477, 1.442695
        %v1479 = vpow.pop %v1478
        %v1480 = vsel %vm768, %v1479, 0.0
        %1481 = vadd.xlane.f32.xlu0 %v1480
        %v1482 = vpop.xlane.xlu0 %1481
        %v1483 = vrcp.pop %v1482
        %v1484 = vmul.f32 %v1479, %v1483
        %v1485 = vpack.c.bf16 %v1484, %v1484
        %v1486 = vpack.c.bf16 %v1420, %v1420
        %v1488 = vsel %vm768, %v1485, 0
        %v1491 = vsel %vm832, %v1486, 0
        %1493 = vmatprep.subr.bf16.mxu0 0
        %1494 = vmatpush1.bf16.msra.mxu0 %v1491
        %1495 = vmatprep.subr.bf16.mxu0 0
        %1496 = vmatpush1.bf16.msra.mxu0 0
        %1497 = vmatprep.subr.bf16.mxu0 0
        %1498 = vmatpush1.bf16.msra.mxu0 0
        %1499 = vmatprep.subr.bf16.mxu0 0
        %1500 = vmatpush1.bf16.msra.mxu0 0
        %1501 = vmatprep.subr.bf16.mxu0 0
        %1502 = vmatpush1.bf16.msra.mxu0 0
        %1503 = vmatprep.subr.bf16.mxu0 0
        %1504 = vmatpush1.bf16.msra.mxu0 0
        %1505 = vmatprep.subr.bf16.mxu0 0
        %1506 = vmatpush1.bf16.msra.mxu0 0
        %1507 = vmatprep.subr.bf16.mxu0 0
        %1508 = vmatpush1.bf16.msra.mxu0 0
        %1509 = vmatprep.subr.bf16.mxu0 0
        %1510 = vmatpush1.bf16.msra.mxu0 0
        %1511 = vmatprep.subr.bf16.mxu0 0
        %1512 = vmatpush1.bf16.msra.mxu0 0
        %1513 = vmatprep.subr.bf16.mxu0 0
        %1514 = vmatpush1.bf16.msra.mxu0 0
        %1515 = vmatprep.subr.bf16.mxu0 0
        %1516 = vmatpush1.bf16.msra.mxu0 0
        %1517 = vmatprep.subr.bf16.mxu0 0
        %1518 = vmatpush1.bf16.msra.mxu0 0
        %1519 = vmatprep.subr.bf16.mxu0 0
        %1520 = vmatpush1.bf16.msra.mxu0 0
        %1521 = vmatprep.subr.bf16.mxu0 0
        %1522 = vmatpush1.bf16.msra.mxu0 0
        %1523 = vmatprep.subr.bf16.mxu0 0
        %1524 = vmatpush1.bf16.msra.mxu0 0
        %1525 = vmatprep.mubr.bf16.mxu0 0
        %1526 = vmatmul.mubr.bf16.gmra.mrb[0].mxu0 %v1488
        %v1527 = vpop.f32.mrb[0].mxu0
        %v1528 = vadd.f32 0.0, %v1527
        %v1529 = vpop.f32.mrb[0].mxu0
        %v1530 = vpop.f32.mrb[0].mxu0
        %v1531 = vpop.f32.mrb[0].mxu0
        %1532 = vdwg.mxu0
        %v1533 = vpack.c.bf16 %v1528, %v1528
        %s1534 = scalar_lea.vmem %s9, 8
        %v1535 = vld [vmem:[%s1534] sm:$0xf]
        %v1537 = vsel %vm768, %v1533, 0
        %v1540 = vsel %vm832, %v1535, 0
        %1542 = vmatprep.subr.bf16.mxu0 0
        %1543 = vmatpush1.bf16.msra.mxu0 %v1540
        %1544 = vmatprep.subr.bf16.mxu0 0
        %1545 = vmatpush1.bf16.msra.mxu0 0
        %1546 = vmatprep.subr.bf16.mxu0 0
        %1547 = vmatpush1.bf16.msra.mxu0 0
        %1548 = vmatprep.subr.bf16.mxu0 0
        %1549 = vmatpush1.bf16.msra.mxu0 0
        %1550 = vmatprep.subr.bf16.mxu0 0
        %1551 = vmatpush1.bf16.msra.mxu0 0
        %1552 = vmatprep.subr.bf16.mxu0 0
        %1553 = vmatpush1.bf16.msra.mxu0 0
        %1554 = vmatprep.subr.bf16.mxu0 0
        %1555 = vmatpush1.bf16.msra.mxu0 0
        %1556 = vmatprep.subr.bf16.mxu0 0
        %1557 = vmatpush1.bf16.msra.mxu0 0
        %1558 = vmatprep.subr.bf16.mxu0 0
        %1559 = vmatpush1.bf16.msra.mxu0 0
        %1560 = vmatprep.subr.bf16.mxu0 0
        %1561 = vmatpush1.bf16.msra.mxu0 0
        %1562 = vmatprep.subr.bf16.mxu0 0
        %1563 = vmatpush1.bf16.msra.mxu0 0
        %1564 = vmatprep.subr.bf16.mxu0 0
        %1565 = vmatpush1.bf16.msra.mxu0 0
        %1566 = vmatprep.subr.bf16.mxu0 0
        %1567 = vmatpush1.bf16.msra.mxu0 0
        %1568 = vmatprep.subr.bf16.mxu0 0
        %1569 = vmatpush1.bf16.msra.mxu0 0
        %1570 = vmatprep.subr.bf16.mxu0 0
        %1571 = vmatpush1.bf16.msra.mxu0 0
        %1572 = vmatprep.subr.bf16.mxu0 0
        %1573 = vmatpush1.bf16.msra.mxu0 0
        %1574 = vmatprep.mubr.bf16.mxu0 0
        %1575 = vmatmul.mubr.bf16.gmra.mrb[0].mxu0 %v1537
        %v1576 = vpop.f32.mrb[0].mxu0
        %v1577 = vadd.f32 0.0, %v1576
        %v1578 = vpop.f32.mrb[0].mxu0
        %v1579 = vpop.f32.mrb[0].mxu0
        %v1580 = vpop.f32.mrb[0].mxu0
        %1581 = vdwg.mxu0
        %v1582 = vadd.f32 %v1248, %v1577
        %s1583 = scalar_lea.vmem %s6, 48
        %v1584 = vld [vmem:[%s1583] sm:$0xf]
        %v1585 = vld [vmem:[%s1583 + $0x4] sm:$0xf]
        %v1586 = vld [vmem:[%s1583 + $0x8] sm:$0xf]
        %v1587 = vld [vmem:[%s1583 + $0xc] sm:$0xf]
        %v1592 = vunpack.c.l.b16 %v1584
        %v1593 = vunpack.c.l.b16 %v1585
        %v1594 = vunpack.c.l.b16 %v1586
        %v1595 = vunpack.c.l.b16 %v1587
        %v1596 = vpack.c.b16 %v1593, %v1592
        %v1597 = vpack.c.b16 %v1595, %v1594
        %1600 = vmatprep.subr.bf16.mxu0 0
        %1601 = vmatpush1.bf16.msra.mxu0 %v1596
        %1602 = vmatprep.subr.bf16.mxu0 0
        %1603 = vmatpush1.bf16.msra.mxu0 %v1597
        %1604 = vmatprep.subr.bf16.mxu0 0
        %1605 = vmatpush1.bf16.msra.mxu0 0
        %1606 = vmatprep.subr.bf16.mxu0 0
        %1607 = vmatpush1.bf16.msra.mxu0 0
        %1608 = vmatprep.subr.bf16.mxu0 0
        %1609 = vmatpush1.bf16.msra.mxu0 0
        %1610 = vmatprep.subr.bf16.mxu0 0
        %1611 = vmatpush1.bf16.msra.mxu0 0
        %1612 = vmatprep.subr.bf16.mxu0 0
        %1613 = vmatpush1.bf16.msra.mxu0 0
        %1614 = vmatprep.subr.bf16.mxu0 0
        %1615 = vmatpush1.bf16.msra.mxu0 0
        %1616 = vmatprep.subr.bf16.mxu0 0
        %1617 = vmatpush1.bf16.msra.mxu0 0
        %1618 = vmatprep.subr.bf16.mxu0 0
        %1619 = vmatpush1.bf16.msra.mxu0 0
        %1620 = vmatprep.subr.bf16.mxu0 0
        %1621 = vmatpush1.bf16.msra.mxu0 0
        %1622 = vmatprep.subr.bf16.mxu0 0
        %1623 = vmatpush1.bf16.msra.mxu0 0
        %1624 = vmatprep.subr.bf16.mxu0 0
        %1625 = vmatpush1.bf16.msra.mxu0 0
        %1626 = vmatprep.subr.bf16.mxu0 0
        %1627 = vmatpush1.bf16.msra.mxu0 0
        %1628 = vmatprep.subr.bf16.mxu0 0
        %1629 = vmatpush1.bf16.msra.mxu0 0
        %1630 = vmatprep.subr.bf16.mxu0 0
        %1631 = vmatpush1.bf16.msra.mxu0 0
        %1632 = vmatprep.mubr.bf16.mxu0 0
        %1633 = vmatmul.mubr.bf16.gmra.mrb[0].mxu0 %v608
        %v1634 = vpop.f32.mrb[0].mxu0
        %v1635 = vadd.f32 0.0, %v1634
        %v1636 = vpop.f32.mrb[0].mxu0
        %v1637 = vpop.f32.mrb[0].mxu0
        %v1638 = vpop.f32.mrb[0].mxu0
        %1639 = vdwg.mxu0
        %v1640 = vmul.f32 %v1635, 0.35355338
        %s1641 = scalar_lea.vmem %s7, 48
        %v1642 = vld [vmem:[%s1641] sm:$0xf]
        %v1643 = vld [vmem:[%s1641 + $0x4] sm:$0xf]
        %v1644 = vld [vmem:[%s1641 + $0x8] sm:$0xf]
        %v1645 = vld [vmem:[%s1641 + $0xc] sm:$0xf]
        %v1650 = vunpack.c.l.b16 %v1642
        %v1651 = vunpack.c.l.b16 %v1643
        %v1652 = vunpack.c.l.b16 %v1644
        %v1653 = vunpack.c.l.b16 %v1645
        %v1654 = vpack.c.b16 %v1651, %v1650
        %v1655 = vpack.c.b16 %v1653, %v1652
        %1658 = vmatprep.subr.bf16.mxu0 0
        %1659 = vmatpush1.bf16.msra.mxu0 %v1654
        %1660 = vmatprep.subr.bf16.mxu0 0
        %1661 = vmatpush1.bf16.msra.mxu0 %v1655
        %1662 = vmatprep.subr.bf16.mxu0 0
        %1663 = vmatpush1.bf16.msra.mxu0 0
        %1664 = vmatprep.subr.bf16.mxu0 0
        %1665 = vmatpush1.bf16.msra.mxu0 0
        %1666 = vmatprep.subr.bf16.mxu0 0
        %1667 = vmatpush1.bf16.msra.mxu0 0
        %1668 = vmatprep.subr.bf16.mxu0 0
        %1669 = vmatpush1.bf16.msra.mxu0 0
        %1670 = vmatprep.subr.bf16.mxu0 0
        %1671 = vmatpush1.bf16.msra.mxu0 0
        %1672 = vmatprep.subr.bf16.mxu0 0
        %1673 = vmatpush1.bf16.msra.mxu0 0
        %1674 = vmatprep.subr.bf16.mxu0 0
        %1675 = vmatpush1.bf16.msra.mxu0 0
        %1676 = vmatprep.subr.bf16.mxu0 0
        %1677 = vmatpush1.bf16.msra.mxu0 0
        %1678 = vmatprep.subr.bf16.mxu0 0
        %1679 = vmatpush1.bf16.msra.mxu0 0
        %1680 = vmatprep.subr.bf16.mxu0 0
        %1681 = vmatpush1.bf16.msra.mxu0 0
        %1682 = vmatprep.subr.bf16.mxu0 0
        %1683 = vmatpush1.bf16.msra.mxu0 0
        %1684 = vmatprep.subr.bf16.mxu0 0
        %1685 = vmatpush1.bf16.msra.mxu0 0
        %1686 = vmatprep.subr.bf16.mxu0 0
        %1687 = vmatpush1.bf16.msra.mxu0 0
        %1688 = vmatprep.subr.bf16.mxu0 0
        %1689 = vmatpush1.bf16.msra.mxu0 0
        %1690 = vmatprep.mubr.bf16.mxu0 0
        %1691 = vmatmul.mubr.bf16.gmra.mrb[0].mxu0 %v668
        %v1692 = vpop.f32.mrb[0].mxu0
        %v1693 = vadd.f32 0.0, %v1692
        %v1694 = vpop.f32.mrb[0].mxu0
        %v1695 = vpop.f32.mrb[0].mxu0
        %v1696 = vpop.f32.mrb[0].mxu0
        %1697 = vdwg.mxu0
        %s1698 = scalar_lea.vmem %s8, 48
        %v1699 = vld [vmem:[%s1698] sm:$0xf]
        %v1700 = vld [vmem:[%s1698 + $0x4] sm:$0xf]
        %v1701 = vld [vmem:[%s1698 + $0x8] sm:$0xf]
        %v1702 = vld [vmem:[%s1698 + $0xc] sm:$0xf]
        %v1707 = vunpack.c.l.b16 %v1699
        %v1708 = vunpack.c.l.b16 %v1700
        %v1709 = vunpack.c.l.b16 %v1701
        %v1710 = vunpack.c.l.b16 %v1702
        %v1711 = vpack.c.b16 %v1708, %v1707
        %v1712 = vpack.c.b16 %v1710, %v1709
        %1715 = vmatprep.subr.bf16.mxu0 0
        %1716 = vmatpush1.bf16.msra.mxu0 %v1711
        %1717 = vmatprep.subr.bf16.mxu0 0
        %1718 = vmatpush1.bf16.msra.mxu0 %v1712
        %1719 = vmatprep.subr.bf16.mxu0 0
        %1720 = vmatpush1.bf16.msra.mxu0 0
        %1721 = vmatprep.subr.bf16.mxu0 0
        %1722 = vmatpush1.bf16.msra.mxu0 0
        %1723 = vmatprep.subr.bf16.mxu0 0
        %1724 = vmatpush1.bf16.msra.mxu0 0
        %1725 = vmatprep.subr.bf16.mxu0 0
        %1726 = vmatpush1.bf16.msra.mxu0 0
        %1727 = vmatprep.subr.bf16.mxu0 0
        %1728 = vmatpush1.bf16.msra.mxu0 0
        %1729 = vmatprep.subr.bf16.mxu0 0
        %1730 = vmatpush1.bf16.msra.mxu0 0
        %1731 = vmatprep.subr.bf16.mxu0 0
        %1732 = vmatpush1.bf16.msra.mxu0 0
        %1733 = vmatprep.subr.bf16.mxu0 0
        %1734 = vmatpush1.bf16.msra.mxu0 0
        %1735 = vmatprep.subr.bf16.mxu0 0
        %1736 = vmatpush1.bf16.msra.mxu0 0
        %1737 = vmatprep.subr.bf16.mxu0 0
        %1738 = vmatpush1.bf16.msra.mxu0 0
        %1739 = vmatprep.subr.bf16.mxu0 0
        %1740 = vmatpush1.bf16.msra.mxu0 0
        %1741 = vmatprep.subr.bf16.mxu0 0
        %1742 = vmatpush1.bf16.msra.mxu0 0
        %1743 = vmatprep.subr.bf16.mxu0 0
        %1744 = vmatpush1.bf16.msra.mxu0 0
        %1745 = vmatprep.subr.bf16.mxu0 0
        %1746 = vmatpush1.bf16.msra.mxu0 0
        %1747 = vmatprep.mubr.bf16.mxu0 0
        %1748 = vmatmul.mubr.bf16.gmra.mrb[0].mxu0 %v668
        %v1749 = vpop.f32.mrb[0].mxu0
        %v1750 = vadd.f32 0.0, %v1749
        %v1751 = vpop.f32.mrb[0].mxu0
        %v1752 = vpop.f32.mrb[0].mxu0
        %v1753 = vpop.f32.mrb[0].mxu0
        %1754 = vdwg.mxu0
        %v1755 = vpack.c.bf16 %v1640, %v1640
        %v1756 = vpack.c.bf16 %v1693, %v1693
        %v1758 = vsel %vm768, %v1755, 0
        %v1761 = vsel %vm768, %v1756, 0
        %1763 = vmatprep.subr.bf16.mxu0 0
        %1764 = vmatpush1.bf16.xpose.msra.mxu0 %v1761
        %1765 = vmatprep.subr.bf16.mxu0 0
        %1766 = vmatpush1.bf16.xpose.msra.mxu0 0
        %1767 = vmatprep.subr.bf16.mxu0 0
        %1768 = vmatpush1.bf16.xpose.msra.mxu0 0
        %1769 = vmatprep.subr.bf16.mxu0 0
        %1770 = vmatpush1.bf16.xpose.msra.mxu0 0
        %1771 = vmatprep.subr.bf16.mxu0 0
        %1772 = vmatpush1.bf16.xpose.msra.mxu0 0
        %1773 = vmatprep.subr.bf16.mxu0 0
        %1774 = vmatpush1.bf16.xpose.msra.mxu0 0
        %1775 = vmatprep.subr.bf16.mxu0 0
        %1776 = vmatpush1.bf16.xpose.msra.mxu0 0
        %1777 = vmatprep.subr.bf16.mxu0 0
        %1778 = vmatpush1.bf16.xpose.msra.mxu0 0
        %1779 = vmatprep.subr.bf16.mxu0 0
        %1780 = vmatpush1.bf16.xpose.msra.mxu0 0
        %1781 = vmatprep.subr.bf16.mxu0 0
        %1782 = vmatpush1.bf16.xpose.msra.mxu0 0
        %1783 = vmatprep.subr.bf16.mxu0 0
        %1784 = vmatpush1.bf16.xpose.msra.mxu0 0
        %1785 = vmatprep.subr.bf16.mxu0 0
        %1786 = vmatpush1.bf16.xpose.msra.mxu0 0
        %1787 = vmatprep.subr.bf16.mxu0 0
        %1788 = vmatpush1.bf16.xpose.msra.mxu0 0
        %1789 = vmatprep.subr.bf16.mxu0 0
        %1790 = vmatpush1.bf16.xpose.msra.mxu0 0
        %1791 = vmatprep.subr.bf16.mxu0 0
        %1792 = vmatpush1.bf16.xpose.msra.mxu0 0
        %1793 = vmatprep.subr.bf16.mxu0 0
        %1794 = vmatpush1.bf16.xpose.msra.mxu0 0
        %1795 = vmatprep.mubr.bf16.mxu0 0
        %1796 = vmatmul.mubr.bf16.gmra.mrb[0].mxu0 %v1758
        %v1797 = vpop.f32.mrb[0].mxu0
        %v1798 = vadd.f32 0.0, %v1797
        %v1799 = vpop.f32.mrb[0].mxu0
        %v1800 = vpop.f32.mrb[0].mxu0
        %v1801 = vpop.f32.mrb[0].mxu0
        %1802 = vdwg.mxu0
        %v1803 = vsel %vm590, -1e+30, %v1798
        %v1804 = vsel %vm768, %v1803, -inf
        %1805 = vmax.xlane.f32.xlu0 %v1804
        %v1806 = vpop.xlane.xlu0 %1805
        %v1807 = vsub.f32 %v1803, %v1806
        %v1808 = vmul.f32 %v1807, 1.442695
        %v1809 = vpow.pop %v1808
        %v1810 = vsel %vm768, %v1809, 0.0
        %1811 = vadd.xlane.f32.xlu0 %v1810
        %v1812 = vpop.xlane.xlu0 %1811
        %v1813 = vrcp.pop %v1812
        %v1814 = vmul.f32 %v1809, %v1813
        %v1815 = vpack.c.bf16 %v1814, %v1814
        %v1816 = vpack.c.bf16 %v1750, %v1750
        %v1818 = vsel %vm768, %v1815, 0
        %v1821 = vsel %vm832, %v1816, 0
        %1823 = vmatprep.subr.bf16.mxu0 0
        %1824 = vmatpush1.bf16.msra.mxu0 %v1821
        %1825 = vmatprep.subr.bf16.mxu0 0
        %1826 = vmatpush1.bf16.msra.mxu0 0
        %1827 = vmatprep.subr.bf16.mxu0 0
        %1828 = vmatpush1.bf16.msra.mxu0 0
        %1829 = vmatprep.subr.bf16.mxu0 0
        %1830 = vmatpush1.bf16.msra.mxu0 0
        %1831 = vmatprep.subr.bf16.mxu0 0
        %1832 = vmatpush1.bf16.msra.mxu0 0
        %1833 = vmatprep.subr.bf16.mxu0 0
        %1834 = vmatpush1.bf16.msra.mxu0 0
        %1835 = vmatprep.subr.bf16.mxu0 0
        %1836 = vmatpush1.bf16.msra.mxu0 0
        %1837 = vmatprep.subr.bf16.mxu0 0
        %1838 = vmatpush1.bf16.msra.mxu0 0
        %1839 = vmatprep.subr.bf16.mxu0 0
        %1840 = vmatpush1.bf16.msra.mxu0 0
        %1841 = vmatprep.subr.bf16.mxu0 0
        %1842 = vmatpush1.bf16.msra.mxu0 0
        %1843 = vmatprep.subr.bf16.mxu0 0
        %1844 = vmatpush1.bf16.msra.mxu0 0
        %1845 = vmatprep.subr.bf16.mxu0 0
        %1846 = vmatpush1.bf16.msra.mxu0 0
        %1847 = vmatprep.subr.bf16.mxu0 0
        %1848 = vmatpush1.bf16.msra.mxu0 0
        %1849 = vmatprep.subr.bf16.mxu0 0
        %1850 = vmatpush1.bf16.msra.mxu0 0
        %1851 = vmatprep.subr.bf16.mxu0 0
        %1852 = vmatpush1.bf16.msra.mxu0 0
        %1853 = vmatprep.subr.bf16.mxu0 0
        %1854 = vmatpush1.bf16.msra.mxu0 0
        %1855 = vmatprep.mubr.bf16.mxu0 0
        %1856 = vmatmul.mubr.bf16.gmra.mrb[0].mxu0 %v1818
        %v1857 = vpop.f32.mrb[0].mxu0
        %v1858 = vadd.f32 0.0, %v1857
        %v1859 = vpop.f32.mrb[0].mxu0
        %v1860 = vpop.f32.mrb[0].mxu0
        %v1861 = vpop.f32.mrb[0].mxu0
        %1862 = vdwg.mxu0
        %v1863 = vpack.c.bf16 %v1858, %v1858
        %s1864 = scalar_lea.vmem %s9, 12
        %v1865 = vld [vmem:[%s1864] sm:$0xf]
        %v1867 = vsel %vm768, %v1863, 0
        %v1870 = vsel %vm832, %v1865, 0
        %1872 = vmatprep.subr.bf16.mxu0 0
        %1873 = vmatpush1.bf16.msra.mxu0 %v1870
        %1874 = vmatprep.subr.bf16.mxu0 0
        %1875 = vmatpush1.bf16.msra.mxu0 0
        %1876 = vmatprep.subr.bf16.mxu0 0
        %1877 = vmatpush1.bf16.msra.mxu0 0
        %1878 = vmatprep.subr.bf16.mxu0 0
        %1879 = vmatpush1.bf16.msra.mxu0 0
        %1880 = vmatprep.subr.bf16.mxu0 0
        %1881 = vmatpush1.bf16.msra.mxu0 0
        %1882 = vmatprep.subr.bf16.mxu0 0
        %1883 = vmatpush1.bf16.msra.mxu0 0
        %1884 = vmatprep.subr.bf16.mxu0 0
        %1885 = vmatpush1.bf16.msra.mxu0 0
        %1886 = vmatprep.subr.bf16.mxu0 0
        %1887 = vmatpush1.bf16.msra.mxu0 0
        %1888 = vmatprep.subr.bf16.mxu0 0
        %1889 = vmatpush1.bf16.msra.mxu0 0
        %1890 = vmatprep.subr.bf16.mxu0 0
        %1891 = vmatpush1.bf16.msra.mxu0 0
        %1892 = vmatprep.subr.bf16.mxu0 0
        %1893 = vmatpush1.bf16.msra.mxu0 0
        %1894 = vmatprep.subr.bf16.mxu0 0
        %1895 = vmatpush1.bf16.msra.mxu0 0
        %1896 = vmatprep.subr.bf16.mxu0 0
        %1897 = vmatpush1.bf16.msra.mxu0 0
        %1898 = vmatprep.subr.bf16.mxu0 0
        %1899 = vmatpush1.bf16.msra.mxu0 0
        %1900 = vmatprep.subr.bf16.mxu0 0
        %1901 = vmatpush1.bf16.msra.mxu0 0
        %1902 = vmatprep.subr.bf16.mxu0 0
        %1903 = vmatpush1.bf16.msra.mxu0 0
        %1904 = vmatprep.mubr.bf16.mxu0 0
        %1905 = vmatmul.mubr.bf16.gmra.mrb[0].mxu0 %v1867
        %v1906 = vpop.f32.mrb[0].mxu0
        %v1907 = vadd.f32 0.0, %v1906
        %v1908 = vpop.f32.mrb[0].mxu0
        %v1909 = vpop.f32.mrb[0].mxu0
        %v1910 = vpop.f32.mrb[0].mxu0
        %1911 = vdwg.mxu0
        %v1912 = vadd.f32 %v1582, %v1907
        %v1913 = vld [vmem:[%s10] sm:$0x1]
        %v1915 = vlaneseq
        %v1916 = vshrl.u32 %v1915, 7
        %v1917 = vsub.s32 0, %v1916
        %v1918 = vrot.slane %v1913, %v1917
        %v1920 = vadd.f32 %v1912, %v1918
        %v1921 = vadd.f32 %v533, %v1920
        %v1922 = vld [vmem:[%s4] sm:$0x1]
        %v1923 = vld [vmem:[%s5] sm:$0x1]
        %v1924 = vsel %vm537, %v1921, 0.0
        %1925 = vadd.xlane.f32.xlu0 %v1924
        %v1926 = vpop.xlane.xlu0 %1925
        %v1927 = vmul.f32 %v1926, %v541
        %v1928 = vsub.f32 %v1921, %v1927
        %v1929 = vmul.f32 %v1928, %v1928
        %v1930 = vsel %vm537, %v1929, 0.0
        %1931 = vadd.xlane.f32.xlu0 %v1930
        %v1932 = vpop.xlane.xlu0 %1931
        %v1933 = vmul.f32 %v1932, %v541
        %v1934 = vadd.f32 %v1933, 1e-05
        %v1935 = vrsqrt.pop %v1934
        %v1936 = vmul.f32 %v1928, %v1935
        %v1938 = vlaneseq
        %v1939 = vshrl.u32 %v1938, 7
        %v1940 = vsub.s32 0, %v1939
        %v1941 = vrot.slane %v1922, %v1940
        %v1943 = vmul.f32 %v1941, %v1936
        %v1945 = vlaneseq
        %v1946 = vshrl.u32 %v1945, 7
        %v1947 = vsub.s32 0, %v1946
        %v1948 = vrot.slane %v1923, %v1947
        %v1950 = vadd.f32 %v1943, %v1948
        %v1951 = vpack.c.bf16 %v1950, %v1950
        %v1952 = vld [vmem:[%s11] sm:$0xf]
        %v1953 = vld [vmem:[%s11 + $0x4] sm:$0xf]
        %v1954 = vld [vmem:[%s11 + $0x8] sm:$0xf]
        %v1955 = vld [vmem:[%s11 + $0xc] sm:$0xf]
        %v1956 = vld [vmem:[%s12] sm:$0x1]
        %v1958 = vlaneseq
        %v1959 = vshrl.u32 %v1958, 7
        %v1960 = vsub.s32 0, %v1959
        %v1961 = vrot.slane %v1956, %v1960
        %v1967 = vunpack.c.l.b16 %v1952
        %v1968 = vunpack.c.l.b16 %v1953
        %v1969 = vunpack.c.l.b16 %v1954
        %v1970 = vunpack.c.l.b16 %v1955
        %v1971 = vpack.c.b16 %v1968, %v1967
        %v1972 = vpack.c.b16 %v1970, %v1969
        %v1976 = vsel %vm537, %v1951, 0
        %1978 = vmatprep.subr.bf16.mxu0 0
        %1979 = vmatpush1.bf16.msra.mxu0 %v1971
        %1980 = vmatprep.subr.bf16.mxu0 0
        %1981 = vmatpush1.bf16.msra.mxu0 %v1972
        %1982 = vmatprep.subr.bf16.mxu0 0
        %1983 = vmatpush1.bf16.msra.mxu0 0
        %1984 = vmatprep.subr.bf16.mxu0 0
        %1985 = vmatpush1.bf16.msra.mxu0 0
        %1986 = vmatprep.subr.bf16.mxu0 0
        %1987 = vmatpush1.bf16.msra.mxu0 0
        %1988 = vmatprep.subr.bf16.mxu0 0
        %1989 = vmatpush1.bf16.msra.mxu0 0
        %1990 = vmatprep.subr.bf16.mxu0 0
        %1991 = vmatpush1.bf16.msra.mxu0 0
        %1992 = vmatprep.subr.bf16.mxu0 0
        %1993 = vmatpush1.bf16.msra.mxu0 0
        %1994 = vmatprep.subr.bf16.mxu0 0
        %1995 = vmatpush1.bf16.msra.mxu0 0
        %1996 = vmatprep.subr.bf16.mxu0 0
        %1997 = vmatpush1.bf16.msra.mxu0 0
        %1998 = vmatprep.subr.bf16.mxu0 0
        %1999 = vmatpush1.bf16.msra.mxu0 0
        %2000 = vmatprep.subr.bf16.mxu0 0
        %2001 = vmatpush1.bf16.msra.mxu0 0
        %2002 = vmatprep.subr.bf16.mxu0 0
        %2003 = vmatpush1.bf16.msra.mxu0 0
        %2004 = vmatprep.subr.bf16.mxu0 0
        %2005 = vmatpush1.bf16.msra.mxu0 0
        %2006 = vmatprep.subr.bf16.mxu0 0
        %2007 = vmatpush1.bf16.msra.mxu0 0
        %2008 = vmatprep.subr.bf16.mxu0 0
        %2009 = vmatpush1.bf16.msra.mxu0 0
        %2010 = vmatprep.mubr.bf16.mxu0 0
        %2011 = vmatmul.mubr.bf16.gmra.mrb[0].mxu0 %v1976
        %v2012 = vpop.f32.mrb[0].mxu0
        %v2013 = vadd.f32 %v1961, %v2012
        %v2014 = vpop.f32.mrb[0].mxu0
        %v2015 = vpop.f32.mrb[0].mxu0
        %v2016 = vpop.f32.mrb[0].mxu0
        %2017 = vdwg.mxu0
        %v2018 = vmul.f32 %v2013, 0.8
        %v2019 = vmul.f32 %v2013, 0.044715
        %v2020 = vmul.f32 %v2019, %v2013
        %v2021 = vmul.f32 %v2020, %v2013
        %v2022 = vadd.f32 %v2013, %v2021
        %v2023 = vmul.f32 %v2022, 0.7978845
        %v2024 = vtanh.pop %v2023
        %v2025 = vadd.f32 %v2024, 1.0
        %v2026 = vmul.f32 %v2018, %v2025
        %v2027 = vpack.c.bf16 %v2026, %v2026
        %v2028 = vld [vmem:[%s13] sm:$0xf]
        %v2029 = vld [vmem:[%s13 + $0x4] sm:$0xf]
        %v2030 = vld [vmem:[%s13 + $0x8] sm:$0xf]
        %v2031 = vld [vmem:[%s13 + $0xc] sm:$0xf]
        %v2032 = vld [vmem:[%s13 + $0x10] sm:$0xf]
        %v2033 = vld [vmem:[%s13 + $0x14] sm:$0xf]
        %v2034 = vld [vmem:[%s13 + $0x18] sm:$0xf]
        %v2035 = vld [vmem:[%s13 + $0x1c] sm:$0xf]
        %v2036 = vld [vmem:[%s13 + $0x20] sm:$0xf]
        %v2037 = vld [vmem:[%s13 + $0x24] sm:$0xf]
        %v2038 = vld [vmem:[%s13 + $0x28] sm:$0xf]
        %v2039 = vld [vmem:[%s13 + $0x2c] sm:$0xf]
        %v2040 = vld [vmem:[%s13 + $0x30] sm:$0xf]
        %v2041 = vld [vmem:[%s13 + $0x34] sm:$0xf]
        %v2042 = vld [vmem:[%s13 + $0x38] sm:$0xf]
        %v2043 = vld [vmem:[%s13 + $0x3c] sm:$0xf]
        %v2044 = vld [vmem:[%s14] sm:$0x1]
        %v2046 = vlaneseq
        %v2047 = vshrl.u32 %v2046, 7
        %v2048 = vsub.s32 0, %v2047
        %v2049 = vrot.slane %v2044, %v2048
        %v2067 = vunpack.c.l.b16 %v2028
        %v2068 = vunpack.c.l.b16 %v2029
        %v2069 = vunpack.c.l.b16 %v2030
        %v2070 = vunpack.c.l.b16 %v2031
        %v2071 = vunpack.c.l.b16 %v2032
        %v2072 = vunpack.c.l.b16 %v2033
        %v2073 = vunpack.c.l.b16 %v2034
        %v2074 = vunpack.c.l.b16 %v2035
        %v2075 = vunpack.c.l.b16 %v2036
        %v2076 = vunpack.c.l.b16 %v2037
        %v2077 = vunpack.c.l.b16 %v2038
        %v2078 = vunpack.c.l.b16 %v2039
        %v2079 = vunpack.c.l.b16 %v2040
        %v2080 = vunpack.c.l.b16 %v2041
        %v2081 = vunpack.c.l.b16 %v2042
        %v2082 = vunpack.c.l.b16 %v2043
        %v2083 = vpack.c.b16 %v2068, %v2067
        %v2084 = vpack.c.b16 %v2070, %v2069
        %v2085 = vpack.c.b16 %v2072, %v2071
        %v2086 = vpack.c.b16 %v2074, %v2073
        %v2087 = vpack.c.b16 %v2076, %v2075
        %v2088 = vpack.c.b16 %v2078, %v2077
        %v2089 = vpack.c.b16 %v2080, %v2079
        %v2090 = vpack.c.b16 %v2082, %v2081
        %2099 = vmatprep.subr.bf16.mxu0 0
        %2100 = vmatpush1.bf16.msra.mxu0 %v2083
        %2101 = vmatprep.subr.bf16.mxu0 0
        %2102 = vmatpush1.bf16.msra.mxu0 %v2084
        %2103 = vmatprep.subr.bf16.mxu0 0
        %2104 = vmatpush1.bf16.msra.mxu0 %v2085
        %2105 = vmatprep.subr.bf16.mxu0 0
        %2106 = vmatpush1.bf16.msra.mxu0 %v2086
        %2107 = vmatprep.subr.bf16.mxu0 0
        %2108 = vmatpush1.bf16.msra.mxu0 %v2087
        %2109 = vmatprep.subr.bf16.mxu0 0
        %2110 = vmatpush1.bf16.msra.mxu0 %v2088
        %2111 = vmatprep.subr.bf16.mxu0 0
        %2112 = vmatpush1.bf16.msra.mxu0 %v2089
        %2113 = vmatprep.subr.bf16.mxu0 0
        %2114 = vmatpush1.bf16.msra.mxu0 %v2090
        %2115 = vmatprep.subr.bf16.mxu0 0
        %2116 = vmatpush1.bf16.msra.mxu0 0
        %2117 = vmatprep.subr.bf16.mxu0 0
        %2118 = vmatpush1.bf16.msra.mxu0 0
        %2119 = vmatprep.subr.bf16.mxu0 0
        %2120 = vmatpush1.bf16.msra.mxu0 0
        %2121 = vmatprep.subr.bf16.mxu0 0
        %2122 = vmatpush1.bf16.msra.mxu0 0
        %2123 = vmatprep.subr.bf16.mxu0 0
        %2124 = vmatpush1.bf16.msra.mxu0 0
        %2125 = vmatprep.subr.bf16.mxu0 0
        %2126 = vmatpush1.bf16.msra.mxu0 0
        %2127 = vmatprep.subr.bf16.mxu0 0
        %2128 = vmatpush1.bf16.msra.mxu0 0
        %2129 = vmatprep.subr.bf16.mxu0 0
        %2130 = vmatpush1.bf16.msra.mxu0 0
        %2131 = vmatprep.mubr.bf16.mxu0 0
        %2132 = vmatmul.mubr.bf16.gmra.mrb[0].mxu0 %v2027
        %v2133 = vpop.f32.mrb[0].mxu0
        %v2134 = vadd.f32 %v2049, %v2133
        %v2135 = vpop.f32.mrb[0].mxu0
        %v2136 = vpop.f32.mrb[0].mxu0
        %v2137 = vpop.f32.mrb[0].mxu0
        %2138 = vdwg.mxu0
        %v2139 = vadd.f32 %v1921, %v2134
        %2140 = vst.msk [vmem:[%s520] sm:$0xff] %vm537, %v2139
        %s2141 = sand.u32 %s378, 1
        %s2142 = scalar_lea.sflag [#allocation3], %s2141
        %s2143 = sand.u32 %s378, 1
        %s2144 = smul.addr %s2143, 8
        %s2145 = scalar_lea.vmem [#allocation2], %s2144
        // Predicated region
        $region81: #{tpu_custom_call.1} parent=79 // pred_check
          %p2146 = pneg %p388
        $region82: #{tpu_custom_call.1} parent=79 // pred_check_branch
          %2148 = sbr.rel (%p2146) target = $region84
        $region83: #{tpu_custom_call.1} parent=79 // pred_region
          %s2150 = ssub.s32 128, 128
          %2151 = vsyncadd %s2142, %s2150
          %s2152 = sadd.s32 %s34, %s33
          %s2153 = smul.addr %s2152, 128
          %s2154 = scalar_lea.hbm %s15, %s2153
          %s2156 = sshll.u32 %s2145, 4
          %s2157 = int_to_ptr.vmem [resolvable:$true] %s2156
          %2159 = dma.vmem_to_hbm [thread:$0]  %s2157, 128, %s2154, %s2142
        $region84: #{tpu_custom_call.1} parent=79 // pred_fallthru
          _
      $region80: #{tpu_custom_call.1} parent=5 // pred_fallthru
        _
      %p2160 = scmp.le.s32.totalorder 2, %s24
      // Predicated region
      $region85: #{tpu_custom_call.1} parent=5 // pred_check
        %p2161 = pneg %p2160
      $region86: #{tpu_custom_call.1} parent=5 // pred_check_branch
        %2163 = sbr.rel (%p2161) target = $region88
      $region87: #{tpu_custom_call.1} parent=5 // pred_region
        %s2164 = ssub.s32 %s24, 2
        // Predicated region
        $region89: #{tpu_custom_call.1} parent=87 // pred_check
          %p2165 = pneg %p394
        $region90: #{tpu_custom_call.1} parent=87 // pred_check_branch
          %2167 = sbr.rel (%p2165) target = $region92
        $region91: #{tpu_custom_call.1} parent=87 // pred_region
          %s2168 = sand.u32 %s379, 1
          %s2169 = scalar_lea.sflag [#allocation3], %s2168
          %s2170 = sand.u32 %s379, 1
          %s2171 = smul.addr %s2170, 8
          %s2172 = scalar_lea.vmem [#allocation2], %s2171
          %2173 = dma.done %s2169, 128
        $region92: #{tpu_custom_call.1} parent=87 // pred_fallthru
          _
      $region88: #{tpu_custom_call.1} parent=5 // pred_fallthru
        _
    $region6: #{tpu_custom_call.1} parent=1 // loop_footer
      %s28 = sadd.s32 1, %s24
    $region7: #{tpu_custom_call.1} parent=1 // loop_footer_branch
      %23 = sbr.rel target = $region3
    $region8: #{tpu_custom_call.1} parent=1 // loop_exit
      _
    %2174 = vsyncpa [#allocation3], 1
    %s2175 = scalar_lea.sflag [#allocation3], 1
    %2176 = vsyncpa %s2175, 1

// kernel: tpu_custom_call.1
$region0: #{tpu_custom_call.1}
  #allocation0 [shape = 'u32[]', space=smem, size = 0x4, offset = 0x4, fixed_abs, tag = 'smem constant byte address 0x4 - core index']
  #allocation1 [shape = 'u32[144,128]{1,0:T(1,128)}', space=vmem, size = 0x12000, scoped, tag = 'internal scratch']
  %s0 = inlined_call_operand.vmem [shape: f32[2,8,32], index: 0, kind: input, shape index: {}]
  %s1 = inlined_call_operand.vmem [shape: f32[2,8,32], index: 1, kind: input, shape index: {}]
  %s2 = inlined_call_operand.vmem [shape: f32[1,32], index: 2, kind: input, shape index: {}]
  %s3 = inlined_call_operand.vmem [shape: f32[1,32], index: 3, kind: input, shape index: {}]
  %s4 = inlined_call_operand.vmem [shape: f32[1,32], index: 4, kind: input, shape index: {}]
  %s5 = inlined_call_operand.vmem [shape: f32[1,32], index: 5, kind: input, shape index: {}]
  %s6 = inlined_call_operand.vmem [shape: bf16[4,32,8], index: 6, kind: input, shape index: {}]
  %s7 = inlined_call_operand.vmem [shape: bf16[4,32,8], index: 7, kind: input, shape index: {}]
  %s8 = inlined_call_operand.vmem [shape: bf16[4,32,8], index: 8, kind: input, shape index: {}]
  %s9 = inlined_call_operand.vmem [shape: bf16[4,8,32], index: 9, kind: input, shape index: {}]
  %s10 = inlined_call_operand.vmem [shape: f32[1,32], index: 10, kind: input, shape index: {}]
  %s11 = inlined_call_operand.vmem [shape: bf16[32,128], index: 11, kind: input, shape index: {}]
  %s12 = inlined_call_operand.vmem [shape: f32[1,128], index: 12, kind: input, shape index: {}]
  %s13 = inlined_call_operand.vmem [shape: bf16[128,32], index: 13, kind: input, shape index: {}]
  %s14 = inlined_call_operand.vmem [shape: f32[1,32], index: 14, kind: input, shape index: {}]
  %s15 = inlined_call_operand.hbm [shape: f32[2,8,32], index: 15, kind: output, shape index: {}]
  %s16 = sld [smem:[#allocation0]]
  $region93: #{tpu_custom_call.1} parent=0
    _
  %s18 = ssub.s32 1, %s16
  %s19 = scalar_select 0, %s18, %s16
  $region1: #{tpu_custom_call.1} parent=0
    #allocation2 [shape = 'u8[8192]{0}', space=vmem, size = 0x2000, scoped, tag = 'output window, operand 0']
    #allocation3 [shape = 's32[2]{0}', space=sflag, size = 0x8, scoped, tag = 'scoped memory for tpu_custom_call.1']
    %20 = vsyncpa [#allocation3], 0
    %s21 = scalar_lea.sflag [#allocation3], 1
    %22 = vsyncpa %s21, 0
    loop: start=0, step=1, limit=4
    $region2: #{tpu_custom_call.1} parent=1 // loop_pre_header
      _
    $region3: #{tpu_custom_call.1} parent=1 // loop_header
      %s24 = sphi 0, %s28
      %p25 = scmp.ge.s32.totalorder %s24, 4
      %s31 = sphi 0, %s43
      %s32 = sphi 0, %s39
      %s33 = sphi 0, %s31
      %s34 = sphi 0, %s32
      %s35 = sphi 0, %s33
      %s36 = sphi 0, %s34
      %s48 = sphi 0, %s50
      %s51 = sphi 0, %s48
      %s52 = sphi 0, %s51
      %s68 = sphi 0, %s52
      %s74 = sphi 0, %s76
      %s77 = sphi 0, %s74
      %s78 = sphi 0, %s77
      %s94 = sphi 0, %s78
      %s98 = sphi 0, %s98
      %s100 = sphi 0, %s98
      %s101 = sphi 0, %s100
      %s115 = sphi 0, %s101
      %s119 = sphi 0, %s119
      %s121 = sphi 0, %s119
      %s122 = sphi 0, %s121
      %s136 = sphi 0, %s122
      %s140 = sphi 0, %s140
      %s142 = sphi 0, %s140
      %s143 = sphi 0, %s142
      %s157 = sphi 0, %s143
      %s161 = sphi 0, %s161
      %s163 = sphi 0, %s161
      %s164 = sphi 0, %s163
      %s178 = sphi 0, %s164
      %s182 = sphi 0, %s182
      %s184 = sphi 0, %s182
      %s185 = sphi 0, %s184
      %s199 = sphi 0, %s185
      %s203 = sphi 0, %s203
      %s205 = sphi 0, %s203
      %s206 = sphi 0, %s205
      %s220 = sphi 0, %s206
      %s224 = sphi 0, %s224
      %s226 = sphi 0, %s224
      %s227 = sphi 0, %s226
      %s241 = sphi 0, %s227
      %s245 = sphi 0, %s245
      %s247 = sphi 0, %s245
      %s248 = sphi 0, %s247
      %s262 = sphi 0, %s248
      %s266 = sphi 0, %s266
      %s268 = sphi 0, %s266
      %s269 = sphi 0, %s268
      %s283 = sphi 0, %s269
      %s287 = sphi 0, %s287
      %s289 = sphi 0, %s287
      %s290 = sphi 0, %s289
      %s304 = sphi 0, %s290
      %s308 = sphi 0, %s308
      %s310 = sphi 0, %s308
      %s311 = sphi 0, %s310
      %s325 = sphi 0, %s311
      %s329 = sphi 0, %s329
      %s331 = sphi 0, %s329
      %s332 = sphi 0, %s331
      %s346 = sphi 0, %s332
      %s350 = sphi 0, %s350
      %s352 = sphi 0, %s350
      %s353 = sphi 0, %s352
      %s367 = sphi 0, %s353
      %s375 = sphi 0, %s377
      %s378 = sphi 0, %s375
      %s379 = sphi 0, %s378
      %s395 = sphi 0, %s379
    $region4: #{tpu_custom_call.1} parent=1 // loop_header_branch
      %27 = sbr.rel (%p25) target = $region8
    $region5: #{tpu_custom_call.1} parent=1 // loop_body
      %s29 = ssub.s32 %s24, 1
      %s30 = ssub.s32 %s24, 2
      %s37 = sadd.s32 1, %s32
      %p38 = scmp.ge.s32.totalorder %s37, 1
      %s39 = scalar_select %p38, 0, %s37
      %s40 = sadd.s32 1, %s31
      %s41 = scalar_select %p38, %s40, %s31
      %p42 = scmp.ge.s32.totalorder %s41, 2
      %s43 = scalar_select %p42, 0, %s41
      %s44 = ssub.s32 %s31, %s43
      %s45 = ssub.s32 %s32, %s39
      %s46 = sor.u32 %s44, %s45
      %p47 = scmp.eq.s32.totalorder %s46, 0
      %s49 = sadd.s32 %s48, 1
      %s50 = scalar_select %p47, %s48, %s49
      %p53 = pneg %p47
      %p54 = scmp.eq.s32.totalorder %s24, 1
      %p55 = por %p53, %p54
      %p56 = scmp.ne.s32.totalorder %s48, %s51
      %p57 = scmp.eq.s32.totalorder %s24, 0
      %p58 = por %p56, %p57
      %p59 = scmp.ne.s32.totalorder %s48, %s51
      %p60 = scmp.eq.s32.totalorder %s29, 1
      %p61 = por %p59, %p60
      %p62 = scmp.ne.s32.totalorder %s51, %s52
      %p63 = scmp.eq.s32.totalorder %s29, 0
      %p64 = por %p62, %p63
      %p65 = scmp.ne.s32.totalorder %s51, %s52
      %p66 = scmp.eq.s32.totalorder %s30, 1
      %p67 = por %p65, %p66
      %p69 = scmp.ne.s32.totalorder %s52, %s68
      %p70 = scmp.eq.s32.totalorder %s30, 0
      %p71 = por %p69, %p70
      %s72 = ssub.s32 %s31, %s43
      %p73 = scmp.eq.s32.totalorder %s72, 0
      %s75 = sadd.s32 %s74, 1
      %s76 = scalar_select %p73, %s74, %s75
      %p79 = pneg %p73
      %p80 = scmp.eq.s32.totalorder %s24, 1
      %p81 = por %p79, %p80
      %p82 = scmp.ne.s32.totalorder %s74, %s77
      %p83 = scmp.eq.s32.totalorder %s24, 0
      %p84 = por %p82, %p83
      %p85 = scmp.ne.s32.totalorder %s74, %s77
      %p86 = scmp.eq.s32.totalorder %s29, 1
      %p87 = por %p85, %p86
      %p88 = scmp.ne.s32.totalorder %s77, %s78
      %p89 = scmp.eq.s32.totalorder %s29, 0
      %p90 = por %p88, %p89
      %p91 = scmp.ne.s32.totalorder %s77, %s78
      %p92 = scmp.eq.s32.totalorder %s30, 1
      %p93 = por %p91, %p92
      %p95 = scmp.ne.s32.totalorder %s78, %s94
      %p96 = scmp.eq.s32.totalorder %s30, 0
      %p97 = por %p95, %p96
      %s99 = sadd.s32 %s98, 1
      %p102 = scmp.eq.s32.totalorder %s24, 1
      %p103 = scmp.ne.s32.totalorder %s98, %s100
      %p104 = scmp.eq.s32.totalorder %s24, 0
      %p105 = por %p103, %p104
      %p106 = scmp.ne.s32.totalorder %s98, %s100
      %p107 = scmp.eq.s32.totalorder %s29, 1
      %p108 = por %p106, %p107
      %p109 = scmp.ne.s32.totalorder %s100, %s101
      %p110 = scmp.eq.s32.totalorder %s29, 0
      %p111 = por %p109, %p110
      %p112 = scmp.ne.s32.totalorder %s100, %s101
      %p113 = scmp.eq.s32.totalorder %s30, 1
      %p114 = por %p112, %p113
      %p116 = scmp.ne.s32.totalorder %s101, %s115
      %p117 = scmp.eq.s32.totalorder %s30, 0
      %p118 = por %p116, %p117
      %s120 = sadd.s32 %s119, 1
      %p123 = scmp.eq.s32.totalorder %s24, 1
      %p124 = scmp.ne.s32.totalorder %s119, %s121
      %p125 = scmp.eq.s32.totalorder %s24, 0
      %p126 = por %p124, %p125
      %p127 = scmp.ne.s32.totalorder %s119, %s121
      %p128 = scmp.eq.s32.totalorder %s29, 1
      %p129 = por %p127, %p128
      %p130 = scmp.ne.s32.totalorder %s121, %s122
      %p131 = scmp.eq.s32.totalorder %s29, 0
      %p132 = por %p130, %p131
      %p133 = scmp.ne.s32.totalorder %s121, %s122
      %p134 = scmp.eq.s32.totalorder %s30, 1
      %p135 = por %p133, %p134
      %p137 = scmp.ne.s32.totalorder %s122, %s136
      %p138 = scmp.eq.s32.totalorder %s30, 0
      %p139 = por %p137, %p138
      %s141 = sadd.s32 %s140, 1
      %p144 = scmp.eq.s32.totalorder %s24, 1
      %p145 = scmp.ne.s32.totalorder %s140, %s142
      %p146 = scmp.eq.s32.totalorder %s24, 0
      %p147 = por %p145, %p146
      %p148 = scmp.ne.s32.totalorder %s140, %s142
      %p149 = scmp.eq.s32.totalorder %s29, 1
      %p150 = por %p148, %p149
      %p151 = scmp.ne.s32.totalorder %s142, %s143
      %p152 = scmp.eq.s32.totalorder %s29, 0
      %p153 = por %p151, %p152
      %p154 = scmp.ne.s32.totalorder %s142, %s143
      %p155 = scmp.eq.s32.totalorder %s30, 1
      %p156 = por %p154, %p155
      %p158 = scmp.ne.s32.totalorder %s143, %s157
      %p159 = scmp.eq.s32.totalorder %s30, 0
      %p160 = por %p158, %p159
      %s162 = sadd.s32 %s161, 1
      %p165 = scmp.eq.s32.totalorder %s24, 1
      %p166 = scmp.ne.s32.totalorder %s161, %s163
      %p167 = scmp.eq.s32.totalorder %s24, 0
      %p168 = por %p166, %p167
      %p169 = scmp.ne.s32.totalorder %s161, %s163
      %p170 = scmp.eq.s32.totalorder %s29, 1
      %p171 = por %p169, %p170
      %p172 = scmp.ne.s32.totalorder %s163, %s164
      %p173 = scmp.eq.s32.totalorder %s29, 0
      %p174 = por %p172, %p173
      %p175 = scmp.ne.s32.totalorder %s163, %s164
      %p176 = scmp.eq.s32.totalorder %s30, 1
      %p177 = por %p175, %p176
      %p179 = scmp.ne.s32.totalorder %s164, %s178
      %p180 = scmp.eq.s32.totalorder %s30, 0
      %p181 = por %p179, %p180
      %s183 = sadd.s32 %s182, 1
      %p186 = scmp.eq.s32.totalorder %s24, 1
      %p187 = scmp.ne.s32.totalorder %s182, %s184
      %p188 = scmp.eq.s32.totalorder %s24, 0
      %p189 = por %p187, %p188
      %p190 = scmp.ne.s32.totalorder %s182, %s184
      %p191 = scmp.eq.s32.totalorder %s29, 1
      %p192 = por %p190, %p191
      %p193 = scmp.ne.s32.totalorder %s184, %s185
      %p194 = scmp.eq.s32.totalorder %s29, 0
      %p195 = por %p193, %p194
      %p196 = scmp.ne.s32.totalorder %s184, %s185
      %p197 = scmp.eq.s32.totalorder %s30, 1
      %p198 = por %p196, %p197
      %p200 = scmp.ne.s32.totalorder %s185, %s199
      %p201 = scmp.eq.s32.totalorder %s30, 0
      %p202 = por %p200, %p201
      %s204 = sadd.s32 %s203, 1
      %p207 = scmp.eq.s32.totalorder %s24, 1
      %p208 = scmp.ne.s32.totalorder %s203, %s205
      %p209 = scmp.eq.s32.totalorder %s24, 0
      %p210 = por %p208, %p209
      %p211 = scmp.ne.s32.totalorder %s203, %s205
      %p212 = scmp.eq.s32.totalorder %s29, 1
      %p213 = por %p211, %p212
      %p214 = scmp.ne.s32.totalorder %s205, %s206
      %p215 = scmp.eq.s32.totalorder %s29, 0
      %p216 = por %p214, %p215
      %p217 = scmp.ne.s32.totalorder %s205, %s206
      %p218 = scmp.eq.s32.totalorder %s30, 1
      %p219 = por %p217, %p218
      %p221 = scmp.ne.s32.totalorder %s206, %s220
      %p222 = scmp.eq.s32.totalorder %s30, 0
      %p223 = por %p221, %p222
      %s225 = sadd.s32 %s224, 1
      %p228 = scmp.eq.s32.totalorder %s24, 1
      %p229 = scmp.ne.s32.totalorder %s224, %s226
      %p230 = scmp.eq.s32.totalorder %s24, 0
      %p231 = por %p229, %p230
      %p232 = scmp.ne.s32.totalorder %s224, %s226
      %p233 = scmp.eq.s32.totalorder %s29, 1
      %p234 = por %p232, %p233
      %p235 = scmp.ne.s32.totalorder %s226, %s227
      %p236 = scmp.eq.s32.totalorder %s29, 0
      %p237 = por %p235, %p236
      %p238 = scmp.ne.s32.totalorder %s226, %s227
      %p239 = scmp.eq.s32.totalorder %s30, 1
      %p240 = por %p238, %p239
      %p242 = scmp.ne.s32.totalorder %s227, %s241
      %p243 = scmp.eq.s32.totalorder %s30, 0
      %p244 = por %p242, %p243
      %s246 = sadd.s32 %s245, 1
      %p249 = scmp.eq.s32.totalorder %s24, 1
      %p250 = scmp.ne.s32.totalorder %s245, %s247
      %p251 = scmp.eq.s32.totalorder %s24, 0
      %p252 = por %p250, %p251
      %p253 = scmp.ne.s32.totalorder %s245, %s247
      %p254 = scmp.eq.s32.totalorder %s29, 1
      %p255 = por %p253, %p254
      %p256 = scmp.ne.s32.totalorder %s247, %s248
      %p257 = scmp.eq.s32.totalorder %s29, 0
      %p258 = por %p256, %p257
      %p259 = scmp.ne.s32.totalorder %s247, %s248
      %p260 = scmp.eq.s32.totalorder %s30, 1
      %p261 = por %p259, %p260
      %p263 = scmp.ne.s32.totalorder %s248, %s262
      %p264 = scmp.eq.s32.totalorder %s30, 0
      %p265 = por %p263, %p264
      %s267 = sadd.s32 %s266, 1
      %p270 = scmp.eq.s32.totalorder %s24, 1
      %p271 = scmp.ne.s32.totalorder %s266, %s268
      %p272 = scmp.eq.s32.totalorder %s24, 0
      %p273 = por %p271, %p272
      %p274 = scmp.ne.s32.totalorder %s266, %s268
      %p275 = scmp.eq.s32.totalorder %s29, 1
      %p276 = por %p274, %p275
      %p277 = scmp.ne.s32.totalorder %s268, %s269
      %p278 = scmp.eq.s32.totalorder %s29, 0
      %p279 = por %p277, %p278
      %p280 = scmp.ne.s32.totalorder %s268, %s269
      %p281 = scmp.eq.s32.totalorder %s30, 1
      %p282 = por %p280, %p281
      %p284 = scmp.ne.s32.totalorder %s269, %s283
      %p285 = scmp.eq.s32.totalorder %s30, 0
      %p286 = por %p284, %p285
      %s288 = sadd.s32 %s287, 1
      %p291 = scmp.eq.s32.totalorder %s24, 1
      %p292 = scmp.ne.s32.totalorder %s287, %s289
      %p293 = scmp.eq.s32.totalorder %s24, 0
      %p294 = por %p292, %p293
      %p295 = scmp.ne.s32.totalorder %s287, %s289
      %p296 = scmp.eq.s32.totalorder %s29, 1
      %p297 = por %p295, %p296
      %p298 = scmp.ne.s32.totalorder %s289, %s290
      %p299 = scmp.eq.s32.totalorder %s29, 0
      %p300 = por %p298, %p299
      %p301 = scmp.ne.s32.totalorder %s289, %s290
      %p302 = scmp.eq.s32.totalorder %s30, 1
      %p303 = por %p301, %p302
      %p305 = scmp.ne.s32.totalorder %s290, %s304
      %p306 = scmp.eq.s32.totalorder %s30, 0
      %p307 = por %p305, %p306
      %s309 = sadd.s32 %s308, 1
      %p312 = scmp.eq.s32.totalorder %s24, 1
      %p313 = scmp.ne.s32.totalorder %s308, %s310
      %p314 = scmp.eq.s32.totalorder %s24, 0
      %p315 = por %p313, %p314
      %p316 = scmp.ne.s32.totalorder %s308, %s310
      %p317 = scmp.eq.s32.totalorder %s29, 1
      %p318 = por %p316, %p317
      %p319 = scmp.ne.s32.totalorder %s310, %s311
      %p320 = scmp.eq.s32.totalorder %s29, 0
      %p321 = por %p319, %p320
      %p322 = scmp.ne.s32.totalorder %s310, %s311
      %p323 = scmp.eq.s32.totalorder %s30, 1
      %p324 = por %p322, %p323
      %p326 = scmp.ne.s32.totalorder %s311, %s325
      %p327 = scmp.eq.s32.totalorder %s30, 0
      %p328 = por %p326, %p327
      %s330 = sadd.s32 %s329, 1
      %p333 = scmp.eq.s32.totalorder %s24, 1
      %p334 = scmp.ne.s32.totalorder %s329, %s331
      %p335 = scmp.eq.s32.totalorder %s24, 0
      %p336 = por %p334, %p335
      %p337 = scmp.ne.s32.totalorder %s329, %s331
      %p338 = scmp.eq.s32.totalorder %s29, 1
      %p339 = por %p337, %p338
      %p340 = scmp.ne.s32.totalorder %s331, %s332
      %p341 = scmp.eq.s32.totalorder %s29, 0
      %p342 = por %p340, %p341
      %p343 = scmp.ne.s32.totalorder %s331, %s332
      %p344 = scmp.eq.s32.totalorder %s30, 1
      %p345 = por %p343, %p344
      %p347 = scmp.ne.s32.totalorder %s332, %s346
      %p348 = scmp.eq.s32.totalorder %s30, 0
      %p349 = por %p347, %p348
      %s351 = sadd.s32 %s350, 1
      %p354 = scmp.eq.s32.totalorder %s24, 1
      %p355 = scmp.ne.s32.totalorder %s350, %s352
      %p356 = scmp.eq.s32.totalorder %s24, 0
      %p357 = por %p355, %p356
      %p358 = scmp.ne.s32.totalorder %s350, %s352
      %p359 = scmp.eq.s32.totalorder %s29, 1
      %p360 = por %p358, %p359
      %p361 = scmp.ne.s32.totalorder %s352, %s353
      %p362 = scmp.eq.s32.totalorder %s29, 0
      %p363 = por %p361, %p362
      %p364 = scmp.ne.s32.totalorder %s352, %s353
      %p365 = scmp.eq.s32.totalorder %s30, 1
      %p366 = por %p364, %p365
      %p368 = scmp.ne.s32.totalorder %s353, %s367
      %p369 = scmp.eq.s32.totalorder %s30, 0
      %p370 = por %p368, %p369
      %s371 = ssub.s32 %s31, %s43
      %s372 = ssub.s32 %s32, %s39
      %s373 = sor.u32 %s371, %s372
      %p374 = scmp.eq.s32.totalorder %s373, 0
      %s376 = sadd.s32 %s375, 1
      %s377 = scalar_select %p374, %s375, %s376
      %p380 = pneg %p374
      %p381 = scmp.eq.s32.totalorder %s24, 1
      %p382 = por %p380, %p381
      %p383 = scmp.ne.s32.totalorder %s375, %s378
      %p384 = scmp.eq.s32.totalorder %s24, 0
      %p385 = por %p383, %p384
      %p386 = scmp.ne.s32.totalorder %s375, %s378
      %p387 = scmp.eq.s32.totalorder %s29, 1
      %p388 = por %p386, %p387
      %p389 = scmp.ne.s32.totalorder %s378, %s379
      %p390 = scmp.eq.s32.totalorder %s29, 0
      %p391 = por %p389, %p390
      %p392 = scmp.ne.s32.totalorder %s378, %s379
      %p393 = scmp.eq.s32.totalorder %s30, 1
      %p394 = por %p392, %p393
      %p396 = scmp.ne.s32.totalorder %s379, %s395
      %p397 = scmp.eq.s32.totalorder %s30, 0
      %p398 = por %p396, %p397
      %p399 = scmp.le.s32.totalorder 1, %s24
      %p400 = scmp.lt.s32.totalorder %s24, 3
      %p401 = pnand %p399, %p400
      %p402 = pneg %p401
      // Predicated region
      $region9: #{tpu_custom_call.1} parent=5 // pred_check
        _
      $region10: #{tpu_custom_call.1} parent=5 // pred_check_branch
        %404 = sbr.rel (%p401) target = $region12
      $region11: #{tpu_custom_call.1} parent=5 // pred_region
        %s405 = ssub.s32 %s24, 1
        // Predicated region
        $region13: #{tpu_custom_call.1} parent=11 // pred_check
          %p406 = pneg %p111
        $region14: #{tpu_custom_call.1} parent=11 // pred_check_branch
          %408 = sbr.rel (%p406) target = $region16
        $region15: #{tpu_custom_call.1} parent=11 // pred_region
          _
        $region16: #{tpu_custom_call.1} parent=11 // pred_fallthru
          _
        // Predicated region
        $region17: #{tpu_custom_call.1} parent=11 // pred_check
          %p409 = pneg %p132
        $region18: #{tpu_custom_call.1} parent=11 // pred_check_branch
          %411 = sbr.rel (%p409) target = $region20
        $region19: #{tpu_custom_call.1} parent=11 // pred_region
          _
        $region20: #{tpu_custom_call.1} parent=11 // pred_fallthru
          _
        // Predicated region
        $region21: #{tpu_custom_call.1} parent=11 // pred_check
          %p412 = pneg %p153
        $region22: #{tpu_custom_call.1} parent=11 // pred_check_branch
          %414 = sbr.rel (%p412) target = $region24
        $region23: #{tpu_custom_call.1} parent=11 // pred_region
          _
        $region24: #{tpu_custom_call.1} parent=11 // pred_fallthru
          _
        // Predicated region
        $region25: #{tpu_custom_call.1} parent=11 // pred_check
          %p415 = pneg %p174
        $region26: #{tpu_custom_call.1} parent=11 // pred_check_branch
          %417 = sbr.rel (%p415) target = $region28
        $region27: #{tpu_custom_call.1} parent=11 // pred_region
          _
        $region28: #{tpu_custom_call.1} parent=11 // pred_fallthru
          _
        // Predicated region
        $region29: #{tpu_custom_call.1} parent=11 // pred_check
          %p418 = pneg %p195
        $region30: #{tpu_custom_call.1} parent=11 // pred_check_branch
          %420 = sbr.rel (%p418) target = $region32
        $region31: #{tpu_custom_call.1} parent=11 // pred_region
          _
        $region32: #{tpu_custom_call.1} parent=11 // pred_fallthru
          _
        // Predicated region
        $region33: #{tpu_custom_call.1} parent=11 // pred_check
          %p421 = pneg %p216
        $region34: #{tpu_custom_call.1} parent=11 // pred_check_branch
          %423 = sbr.rel (%p421) target = $region36
        $region35: #{tpu_custom_call.1} parent=11 // pred_region
          _
        $region36: #{tpu_custom_call.1} parent=11 // pred_fallthru
          _
        // Predicated region
        $region37: #{tpu_custom_call.1} parent=11 // pred_check
          %p424 = pneg %p237
        $region38: #{tpu_custom_call.1} parent=11 // pred_check_branch
          %426 = sbr.rel (%p424) target = $region40
        $region39: #{tpu_custom_call.1} parent=11 // pred_region
          _
        $region40: #{tpu_custom_call.1} parent=11 // pred_fallthru
          _
        // Predicated region
        $region41: #{tpu_custom_call.1} parent=11 // pred_check
          %p427 = pneg %p258
        $region42: #{tpu_custom_call.1} parent=11 // pred_check_branch
          %429 = sbr.rel (%p427) target = $region44
        $region43: #{tpu_custom_call.1} parent=11 // pred_region
          _
        $region44: #{tpu_custom_call.1} parent=11 // pred_fallthru
          _
        // Predicated region
        $region45: #{tpu_custom_call.1} parent=11 // pred_check
          %p430 = pneg %p279
        $region46: #{tpu_custom_call.1} parent=11 // pred_check_branch
          %432 = sbr.rel (%p430) target = $region48
        $region47: #{tpu_custom_call.1} parent=11 // pred_region
          _
        $region48: #{tpu_custom_call.1} parent=11 // pred_fallthru
          _
        // Predicated region
        $region49: #{tpu_custom_call.1} parent=11 // pred_check
          %p433 = pneg %p300
        $region50: #{tpu_custom_call.1} parent=11 // pred_check_branch
          %435 = sbr.rel (%p433) target = $region52
        $region51: #{tpu_custom_call.1} parent=11 // pred_region
          _
        $region52: #{tpu_custom_call.1} parent=11 // pred_fallthru
          _
        // Predicated region
        $region53: #{tpu_custom_call.1} parent=11 // pred_check
          %p436 = pneg %p321
        $region54: #{tpu_custom_call.1} parent=11 // pred_check_branch
          %438 = sbr.rel (%p436) target = $region56
        $region55: #{tpu_custom_call.1} parent=11 // pred_region
          _
        $region56: #{tpu_custom_call.1} parent=11 // pred_fallthru
          _
        // Predicated region
        $region57: #{tpu_custom_call.1} parent=11 // pred_check
          %p439 = pneg %p342
        $region58: #{tpu_custom_call.1} parent=11 // pred_check_branch
          %441 = sbr.rel (%p439) target = $region60
        $region59: #{tpu_custom_call.1} parent=11 // pred_region
          _
        $region60: #{tpu_custom_call.1} parent=11 // pred_fallthru
          _
        // Predicated region
        $region61: #{tpu_custom_call.1} parent=11 // pred_check
          %p442 = pneg %p363
        $region62: #{tpu_custom_call.1} parent=11 // pred_check_branch
          %444 = sbr.rel (%p442) target = $region64
        $region63: #{tpu_custom_call.1} parent=11 // pred_region
          _
        $region64: #{tpu_custom_call.1} parent=11 // pred_fallthru
          _
      $region12: #{tpu_custom_call.1} parent=5 // pred_fallthru
        _
      %p445 = scmp.lt.s32.totalorder %s24, 2
      // Predicated region
      $region65: #{tpu_custom_call.1} parent=5 // pred_check
        %p446 = pneg %p445
      $region66: #{tpu_custom_call.1} parent=5 // pred_check_branch
        %448 = sbr.rel (%p446) target = $region68
      $region67: #{tpu_custom_call.1} parent=5 // pred_region
        // Predicated region
        $region69: #{tpu_custom_call.1} parent=67 // pred_check
          %p449 = pneg %p58
        $region70: #{tpu_custom_call.1} parent=67 // pred_check_branch
          %451 = sbr.rel (%p449) target = $region72
        $region71: #{tpu_custom_call.1} parent=67 // pred_region
          %p452 = scmp.lt.s32.totalorder %s31, 1
          %s453 = scalar_select %p452, %s31, 1
          %p454 = scmp.lt.s32.totalorder %s32, 0
          %s455 = scalar_select %p454, %s32, 0
          %s456 = sadd.s32 %s455, %s453
          %s457 = smul.addr %s456, 8
          %s458 = scalar_lea.vmem %s0, %s457
        $region72: #{tpu_custom_call.1} parent=67 // pred_fallthru
          _
        // Predicated region
        $region73: #{tpu_custom_call.1} parent=67 // pred_check
          %p459 = pneg %p84
        $region74: #{tpu_custom_call.1} parent=67 // pred_check_branch
          %461 = sbr.rel (%p459) target = $region76
        $region75: #{tpu_custom_call.1} parent=67 // pred_region
          %p462 = scmp.lt.s32.totalorder %s31, 1
          %s463 = scalar_select %p462, %s31, 1
          %s464 = smul.addr %s463, 8
          %s465 = scalar_lea.vmem %s1, %s464
        $region76: #{tpu_custom_call.1} parent=67 // pred_fallthru
          _
      $region68: #{tpu_custom_call.1} parent=5 // pred_fallthru
        _
      %p466 = scmp.le.s32.totalorder 1, %s24
      %p467 = scmp.lt.s32.totalorder %s24, 3
      %p468 = pnand %p466, %p467
      %p469 = pneg %p468
      // Predicated region
      $region77: #{tpu_custom_call.1} parent=5 // pred_check
        _
      $region78: #{tpu_custom_call.1} parent=5 // pred_check_branch
        %471 = sbr.rel (%p468) target = $region80
      $region79: #{tpu_custom_call.1} parent=5 // pred_region
        %s472 = ssub.s32 %s24, 1
        %p473 = scmp.lt.s32.totalorder %s33, 1
        %s474 = scalar_select %p473, %s33, 1
        %p475 = scmp.lt.s32.totalorder %s34, 0
        %s476 = scalar_select %p475, %s34, 0
        %s477 = sadd.s32 %s476, %s474
        %s478 = smul.addr %s477, 8
        %s479 = scalar_lea.vmem %s0, %s478
        %p480 = pneg %p64
        %p481 = pneg %p61
        %p482 = scmp.lt.s32.totalorder %s33, 1
        %s483 = scalar_select %p482, %s33, 1
        %s484 = smul.addr %s483, 8
        %s485 = scalar_lea.vmem %s1, %s484
        %p486 = pneg %p90
        %p487 = pneg %p87
        %p488 = pneg %p111
        %p489 = pneg %p108
        %p490 = pneg %p132
        %p491 = pneg %p129
        %p492 = pneg %p153
        %p493 = pneg %p150
        %p494 = pneg %p174
        %p495 = pneg %p171
        %p496 = pneg %p195
        %p497 = pneg %p192
        %p498 = pneg %p216
        %p499 = pneg %p213
        %p500 = pneg %p237
        %p501 = pneg %p234
        %p502 = pneg %p258
        %p503 = pneg %p255
        %p504 = pneg %p279
        %p505 = pneg %p276
        %p506 = pneg %p300
        %p507 = pneg %p297
        %p508 = pneg %p321
        %p509 = pneg %p318
        %p510 = pneg %p342
        %p511 = pneg %p339
        %p512 = pneg %p363
        %p513 = pneg %p360
        %p514 = pneg %p391
        %p515 = pneg %p388
        %s516 = sand.u32 %s378, 1
        %s517 = scalar_lea.sflag [#allocation3], %s516
        %s518 = sand.u32 %s378, 1
        %s519 = smul.addr %s518, 8
        %s520 = scalar_lea.vmem [#allocation2], %s519
        %p521 = scmp.lt.s32.totalorder %s33, 1
        %s522 = scalar_select %p521, %s33, 1
        %p523 = scmp.lt.s32.totalorder %s34, 0
        %s524 = scalar_select %p523, %s34, 0
        %s525 = sadd.s32 %s524, %s522
        %s526 = smul.addr %s525, 8
        %s527 = scalar_lea.vmem %s0, %s526
        %p528 = scmp.lt.s32.totalorder %s33, 1
        %s529 = scalar_select %p528, %s33, 1
        %s530 = smul.addr %s529, 8
        %s531 = scalar_lea.vmem %s1, %s530
        %v533 = vld [vmem:[%s527] sm:$0xff]
        %v534 = vld [vmem:[%s531] sm:$0xff]
        %v535 = vld [vmem:[%s2] sm:$0x1]
        %v536 = vld [vmem:[%s3] sm:$0x1]
        %vm537 = vcmask 261120
        %v538 = vsel %vm537, %v533, 0.0
        %539 = vadd.xlane.f32.xlu0 %v538
        %v540 = vpop.xlane.xlu0 %539
        %v541 = vrcp.pop 32.0
        %v542 = vmul.f32 %v540, %v541
        %v543 = vsub.f32 %v533, %v542
        %v544 = vmul.f32 %v543, %v543
        %v545 = vsel %vm537, %v544, 0.0
        %546 = vadd.xlane.f32.xlu0 %v545
        %v547 = vpop.xlane.xlu0 %546
        %v548 = vmul.f32 %v547, %v541
        %v549 = vadd.f32 %v548, 1e-05
        %v550 = vrsqrt.pop %v549
        %v551 = vmul.f32 %v543, %v550
        %v553 = vlaneseq
        %v554 = vshrl.u32 %v553, 7
        %v555 = vsub.s32 0, %v554
        %v556 = vrot.slane %v535, %v555
        %v558 = vmul.f32 %v556, %v551
        %v560 = vlaneseq
        %v561 = vshrl.u32 %v560, 7
        %v562 = vsub.s32 0, %v561
        %v563 = vrot.slane %v536, %v562
        %v565 = vadd.f32 %v558, %v563
        %v566 = vpack.c.bf16 %v565, %v565
        %v567 = vsel %vm537, %v534, 0.0
        %568 = vadd.xlane.f32.xlu0 %v567
        %v569 = vpop.xlane.xlu0 %568
        %v570 = vmul.f32 %v569, %v541
        %v571 = vsub.f32 %v534, %v570
        %v572 = vmul.f32 %v571, %v571
        %v573 = vsel %vm537, %v572, 0.0
        %574 = vadd.xlane.f32.xlu0 %v573
        %v575 = vpop.xlane.xlu0 %574
        %v576 = vmul.f32 %v575, %v541
        %v577 = vadd.f32 %v576, 1e-05
        %v578 = vrsqrt.pop %v577
        %v579 = vmul.f32 %v571, %v578
        %v580 = vmul.f32 %v556, %v579
        %v581 = vadd.f32 %v580, %v563
        %v582 = vpack.c.bf16 %v581, %v581
        %s583 = smul.u32 %s34, 8
        %v584 = vlaneseq
        %v585 = vshrl.u32 %v584, 7
        %v586 = vstv %s583
        %v587 = vadd.s32 %v586, %v585
        %v588 = vlaneseq
        %v589 = vand.u32 %v588, 127
        %vm590 = vcmp.gt.s32.totalorder %v589, %v587
        %v591 = vld [vmem:[%s6] sm:$0xf]
        %v592 = vld [vmem:[%s6 + $0x4] sm:$0xf]
        %v593 = vld [vmem:[%s6 + $0x8] sm:$0xf]
        %v594 = vld [vmem:[%s6 + $0xc] sm:$0xf]
        %v599 = vunpack.c.l.b16 %v591
        %v600 = vunpack.c.l.b16 %v592
        %v601 = vunpack.c.l.b16 %v593
        %v602 = vunpack.c.l.b16 %v594
        %v603 = vpack.c.b16 %v600, %v599
        %v604 = vpack.c.b16 %v602, %v601
        %v608 = vsel %vm537, %v566, 0
        %610 = vmatprep.subr.bf16.mxu0 0
        %611 = vmatpush1.bf16.msra.mxu0 %v603
        %612 = vmatprep.subr.bf16.mxu0 0
        %613 = vmatpush1.bf16.msra.mxu0 %v604
        %614 = vmatprep.subr.bf16.mxu0 0
        %615 = vmatpush1.bf16.msra.mxu0 0
        %616 = vmatprep.subr.bf16.mxu0 0
        %617 = vmatpush1.bf16.msra.mxu0 0
        %618 = vmatprep.subr.bf16.mxu0 0
        %619 = vmatpush1.bf16.msra.mxu0 0
        %620 = vmatprep.subr.bf16.mxu0 0
        %621 = vmatpush1.bf16.msra.mxu0 0
        %622 = vmatprep.subr.bf16.mxu0 0
        %623 = vmatpush1.bf16.msra.mxu0 0
        %624 = vmatprep.subr.bf16.mxu0 0
        %625 = vmatpush1.bf16.msra.mxu0 0
        %626 = vmatprep.subr.bf16.mxu0 0
        %627 = vmatpush1.bf16.msra.mxu0 0
        %628 = vmatprep.subr.bf16.mxu0 0
        %629 = vmatpush1.bf16.msra.mxu0 0
        %630 = vmatprep.subr.bf16.mxu0 0
        %631 = vmatpush1.bf16.msra.mxu0 0
        %632 = vmatprep.subr.bf16.mxu0 0
        %633 = vmatpush1.bf16.msra.mxu0 0
        %634 = vmatprep.subr.bf16.mxu0 0
        %635 = vmatpush1.bf16.msra.mxu0 0
        %636 = vmatprep.subr.bf16.mxu0 0
        %637 = vmatpush1.bf16.msra.mxu0 0
        %638 = vmatprep.subr.bf16.mxu0 0
        %639 = vmatpush1.bf16.msra.mxu0 0
        %640 = vmatprep.subr.bf16.mxu0 0
        %641 = vmatpush1.bf16.msra.mxu0 0
        %642 = vmatprep.mubr.bf16.mxu0 0
        %643 = vmatmul.mubr.bf16.gmra.mrb[0].mxu0 %v608
        %v644 = vpop.f32.mrb[0].mxu0
        %v645 = vadd.f32 0.0, %v644
        %v646 = vpop.f32.mrb[0].mxu0
        %v647 = vpop.f32.mrb[0].mxu0
        %v648 = vpop.f32.mrb[0].mxu0
        %649 = vdwg.mxu0
        %v650 = vmul.f32 %v645, 0.35355338
        %v651 = vld [vmem:[%s7] sm:$0xf]
        %v652 = vld [vmem:[%s7 + $0x4] sm:$0xf]
        %v653 = vld [vmem:[%s7 + $0x8] sm:$0xf]
        %v654 = vld [vmem:[%s7 + $0xc] sm:$0xf]
        %v659 = vunpack.c.l.b16 %v651
        %v660 = vunpack.c.l.b16 %v652
        %v661 = vunpack.c.l.b16 %v653
        %v662 = vunpack.c.l.b16 %v654
        %v663 = vpack.c.b16 %v660, %v659
        %v664 = vpack.c.b16 %v662, %v661
        %v668 = vsel %vm537, %v582, 0
        %670 = vmatprep.subr.bf16.mxu0 0
        %671 = vmatpush1.bf16.msra.mxu0 %v663
        %672 = vmatprep.subr.bf16.mxu0 0
        %673 = vmatpush1.bf16.msra.mxu0 %v664
        %674 = vmatprep.subr.bf16.mxu0 0
        %675 = vmatpush1.bf16.msra.mxu0 0
        %676 = vmatprep.subr.bf16.mxu0 0
        %677 = vmatpush1.bf16.msra.mxu0 0
        %678 = vmatprep.subr.bf16.mxu0 0
        %679 = vmatpush1.bf16.msra.mxu0 0
        %680 = vmatprep.subr.bf16.mxu0 0
        %681 = vmatpush1.bf16.msra.mxu0 0
        %682 = vmatprep.subr.bf16.mxu0 0
        %683 = vmatpush1.bf16.msra.mxu0 0
        %684 = vmatprep.subr.bf16.mxu0 0
        %685 = vmatpush1.bf16.msra.mxu0 0
        %686 = vmatprep.subr.bf16.mxu0 0
        %687 = vmatpush1.bf16.msra.mxu0 0
        %688 = vmatprep.subr.bf16.mxu0 0
        %689 = vmatpush1.bf16.msra.mxu0 0
        %690 = vmatprep.subr.bf16.mxu0 0
        %691 = vmatpush1.bf16.msra.mxu0 0
        %692 = vmatprep.subr.bf16.mxu0 0
        %693 = vmatpush1.bf16.msra.mxu0 0
        %694 = vmatprep.subr.bf16.mxu0 0
        %695 = vmatpush1.bf16.msra.mxu0 0
        %696 = vmatprep.subr.bf16.mxu0 0
        %697 = vmatpush1.bf16.msra.mxu0 0
        %698 = vmatprep.subr.bf16.mxu0 0
        %699 = vmatpush1.bf16.msra.mxu0 0
        %700 = vmatprep.subr.bf16.mxu0 0
        %701 = vmatpush1.bf16.msra.mxu0 0
        %702 = vmatprep.mubr.bf16.mxu0 0
        %703 = vmatmul.mubr.bf16.gmra.mrb[0].mxu0 %v668
        %v704 = vpop.f32.mrb[0].mxu0
        %v705 = vadd.f32 0.0, %v704
        %v706 = vpop.f32.mrb[0].mxu0
        %v707 = vpop.f32.mrb[0].mxu0
        %v708 = vpop.f32.mrb[0].mxu0
        %709 = vdwg.mxu0
        %v710 = vld [vmem:[%s8] sm:$0xf]
        %v711 = vld [vmem:[%s8 + $0x4] sm:$0xf]
        %v712 = vld [vmem:[%s8 + $0x8] sm:$0xf]
        %v713 = vld [vmem:[%s8 + $0xc] sm:$0xf]
        %v718 = vunpack.c.l.b16 %v710
        %v719 = vunpack.c.l.b16 %v711
        %v720 = vunpack.c.l.b16 %v712
        %v721 = vunpack.c.l.b16 %v713
        %v722 = vpack.c.b16 %v719, %v718
        %v723 = vpack.c.b16 %v721, %v720
        %726 = vmatprep.subr.bf16.mxu0 0
        %727 = vmatpush1.bf16.msra.mxu0 %v722
        %728 = vmatprep.subr.bf16.mxu0 0
        %729 = vmatpush1.bf16.msra.mxu0 %v723
        %730 = vmatprep.subr.bf16.mxu0 0
        %731 = vmatpush1.bf16.msra.mxu0 0
        %732 = vmatprep.subr.bf16.mxu0 0
        %733 = vmatpush1.bf16.msra.mxu0 0
        %734 = vmatprep.subr.bf16.mxu0 0
        %735 = vmatpush1.bf16.msra.mxu0 0
        %736 = vmatprep.subr.bf16.mxu0 0
        %737 = vmatpush1.bf16.msra.mxu0 0
        %738 = vmatprep.subr.bf16.mxu0 0
        %739 = vmatpush1.bf16.msra.mxu0 0
        %740 = vmatprep.subr.bf16.mxu0 0
        %741 = vmatpush1.bf16.msra.mxu0 0
        %742 = vmatprep.subr.bf16.mxu0 0
        %743 = vmatpush1.bf16.msra.mxu0 0
        %744 = vmatprep.subr.bf16.mxu0 0
        %745 = vmatpush1.bf16.msra.mxu0 0
        %746 = vmatprep.subr.bf16.mxu0 0
        %747 = vmatpush1.bf16.msra.mxu0 0
        %748 = vmatprep.subr.bf16.mxu0 0
        %749 = vmatpush1.bf16.msra.mxu0 0
        %750 = vmatprep.subr.bf16.mxu0 0
        %751 = vmatpush1.bf16.msra.mxu0 0
        %752 = vmatprep.subr.bf16.mxu0 0
        %753 = vmatpush1.bf16.msra.mxu0 0
        %754 = vmatprep.subr.bf16.mxu0 0
        %755 = vmatpush1.bf16.msra.mxu0 0
        %756 = vmatprep.subr.bf16.mxu0 0
        %757 = vmatpush1.bf16.msra.mxu0 0
        %758 = vmatprep.mubr.bf16.mxu0 0
        %759 = vmatmul.mubr.bf16.gmra.mrb[0].mxu0 %v668
        %v760 = vpop.f32.mrb[0].mxu0
        %v761 = vadd.f32 0.0, %v760
        %v762 = vpop.f32.mrb[0].mxu0
        %v763 = vpop.f32.mrb[0].mxu0
        %v764 = vpop.f32.mrb[0].mxu0
        %765 = vdwg.mxu0
        %v766 = vpack.c.bf16 %v650, %v650
        %v767 = vpack.c.bf16 %v705, %v705
        %vm768 = vcmask 64512
        %v770 = vsel %vm768, %v766, 0
        %v773 = vsel %vm768, %v767, 0
        %775 = vmatprep.subr.bf16.mxu0 0
        %776 = vmatpush1.bf16.xpose.msra.mxu0 %v773
        %777 = vmatprep.subr.bf16.mxu0 0
        %778 = vmatpush1.bf16.xpose.msra.mxu0 0
        %779 = vmatprep.subr.bf16.mxu0 0
        %780 = vmatpush1.bf16.xpose.msra.mxu0 0
        %781 = vmatprep.subr.bf16.mxu0 0
        %782 = vmatpush1.bf16.xpose.msra.mxu0 0
        %783 = vmatprep.subr.bf16.mxu0 0
        %784 = vmatpush1.bf16.xpose.msra.mxu0 0
        %785 = vmatprep.subr.bf16.mxu0 0
        %786 = vmatpush1.bf16.xpose.msra.mxu0 0
        %787 = vmatprep.subr.bf16.mxu0 0
        %788 = vmatpush1.bf16.xpose.msra.mxu0 0
        %789 = vmatprep.subr.bf16.mxu0 0
        %790 = vmatpush1.bf16.xpose.msra.mxu0 0
        %791 = vmatprep.subr.bf16.mxu0 0
        %792 = vmatpush1.bf16.xpose.msra.mxu0 0
        %793 = vmatprep.subr.bf16.mxu0 0
        %794 = vmatpush1.bf16.xpose.msra.mxu0 0
        %795 = vmatprep.subr.bf16.mxu0 0
        %796 = vmatpush1.bf16.xpose.msra.mxu0 0
        %797 = vmatprep.subr.bf16.mxu0 0
        %798 = vmatpush1.bf16.xpose.msra.mxu0 0
        %799 = vmatprep.subr.bf16.mxu0 0
        %800 = vmatpush1.bf16.xpose.msra.mxu0 0
        %801 = vmatprep.subr.bf16.mxu0 0
        %802 = vmatpush1.bf16.xpose.msra.mxu0 0
        %803 = vmatprep.subr.bf16.mxu0 0
        %804 = vmatpush1.bf16.xpose.msra.mxu0 0
        %805 = vmatprep.subr.bf16.mxu0 0
        %806 = vmatpush1.bf16.xpose.msra.mxu0 0
        %807 = vmatprep.mubr.bf16.mxu0 0
        %808 = vmatmul.mubr.bf16.gmra.mrb[0].mxu0 %v770
        %v809 = vpop.f32.mrb[0].mxu0
        %v810 = vadd.f32 0.0, %v809
        %v811 = vpop.f32.mrb[0].mxu0
        %v812 = vpop.f32.mrb[0].mxu0
        %v813 = vpop.f32.mrb[0].mxu0
        %814 = vdwg.mxu0
        %v815 = vsel %vm590, -1e+30, %v810
        %v816 = vsel %vm768, %v815, -inf
        %817 = vmax.xlane.f32.xlu0 %v816
        %v818 = vpop.xlane.xlu0 %817
        %v819 = vsub.f32 %v815, %v818
        %v820 = vmul.f32 %v819, 1.442695
        %v821 = vpow.pop %v820
        %v822 = vsel %vm768, %v821, 0.0
        %823 = vadd.xlane.f32.xlu0 %v822
        %v824 = vpop.xlane.xlu0 %823
        %v825 = vrcp.pop %v824
        %v826 = vmul.f32 %v821, %v825
        %v827 = vpack.c.bf16 %v826, %v826
        %v828 = vpack.c.bf16 %v761, %v761
        %v830 = vsel %vm768, %v827, 0
        %vm832 = vcmask 1043456
        %v834 = vsel %vm832, %v828, 0
        %836 = vmatprep.subr.bf16.mxu0 0
        %837 = vmatpush1.bf16.msra.mxu0 %v834
        %838 = vmatprep.subr.bf16.mxu0 0
        %839 = vmatpush1.bf16.msra.mxu0 0
        %840 = vmatprep.subr.bf16.mxu0 0
        %841 = vmatpush1.bf16.msra.mxu0 0
        %842 = vmatprep.subr.bf16.mxu0 0
        %843 = vmatpush1.bf16.msra.mxu0 0
        %844 = vmatprep.subr.bf16.mxu0 0
        %845 = vmatpush1.bf16.msra.mxu0 0
        %846 = vmatprep.subr.bf16.mxu0 0
        %847 = vmatpush1.bf16.msra.mxu0 0
        %848 = vmatprep.subr.bf16.mxu0 0
        %849 = vmatpush1.bf16.msra.mxu0 0
        %850 = vmatprep.subr.bf16.mxu0 0
        %851 = vmatpush1.bf16.msra.mxu0 0
        %852 = vmatprep.subr.bf16.mxu0 0
        %853 = vmatpush1.bf16.msra.mxu0 0
        %854 = vmatprep.subr.bf16.mxu0 0
        %855 = vmatpush1.bf16.msra.mxu0 0
        %856 = vmatprep.subr.bf16.mxu0 0
        %857 = vmatpush1.bf16.msra.mxu0 0
        %858 = vmatprep.subr.bf16.mxu0 0
        %859 = vmatpush1.bf16.msra.mxu0 0
        %860 = vmatprep.subr.bf16.mxu0 0
        %861 = vmatpush1.bf16.msra.mxu0 0
        %862 = vmatprep.subr.bf16.mxu0 0
        %863 = vmatpush1.bf16.msra.mxu0 0
        %864 = vmatprep.subr.bf16.mxu0 0
        %865 = vmatpush1.bf16.msra.mxu0 0
        %866 = vmatprep.subr.bf16.mxu0 0
        %867 = vmatpush1.bf16.msra.mxu0 0
        %868 = vmatprep.mubr.bf16.mxu0 0
        %869 = vmatmul.mubr.bf16.gmra.mrb[0].mxu0 %v830
        %v870 = vpop.f32.mrb[0].mxu0
        %v871 = vadd.f32 0.0, %v870
        %v872 = vpop.f32.mrb[0].mxu0
        %v873 = vpop.f32.mrb[0].mxu0
        %v874 = vpop.f32.mrb[0].mxu0
        %875 = vdwg.mxu0
        %v876 = vpack.c.bf16 %v871, %v871
        %v877 = vld [vmem:[%s9] sm:$0xf]
        %s878 = scalar_lea.vmem %s6, 16
        %v879 = vld [vmem:[%s878] sm:$0xf]
        %v880 = vld [vmem:[%s878 + $0x4] sm:$0xf]
        %v881 = vld [vmem:[%s878 + $0x8] sm:$0xf]
        %v882 = vld [vmem:[%s878 + $0xc] sm:$0xf]
        %v887 = vunpack.c.l.b16 %v879
        %v888 = vunpack.c.l.b16 %v880
        %v889 = vunpack.c.l.b16 %v881
        %v890 = vunpack.c.l.b16 %v882
        %v891 = vpack.c.b16 %v888, %v887
        %v892 = vpack.c.b16 %v890, %v889
        %895 = vmatprep.subr.bf16.mxu0 0
        %896 = vmatpush1.bf16.msra.mxu0 %v891
        %897 = vmatprep.subr.bf16.mxu0 0
        %898 = vmatpush1.bf16.msra.mxu0 %v892
        %899 = vmatprep.subr.bf16.mxu0 0
        %900 = vmatpush1.bf16.msra.mxu0 0
        %901 = vmatprep.subr.bf16.mxu0 0
        %902 = vmatpush1.bf16.msra.mxu0 0
        %903 = vmatprep.subr.bf16.mxu0 0
        %904 = vmatpush1.bf16.msra.mxu0 0
        %905 = vmatprep.subr.bf16.mxu0 0
        %906 = vmatpush1.bf16.msra.mxu0 0
        %907 = vmatprep.subr.bf16.mxu0 0
        %908 = vmatpush1.bf16.msra.mxu0 0
        %909 = vmatprep.subr.bf16.mxu0 0
        %910 = vmatpush1.bf16.msra.mxu0 0
        %911 = vmatprep.subr.bf16.mxu0 0
        %912 = vmatpush1.bf16.msra.mxu0 0
        %913 = vmatprep.subr.bf16.mxu0 0
        %914 = vmatpush1.bf16.msra.mxu0 0
        %915 = vmatprep.subr.bf16.mxu0 0
        %916 = vmatpush1.bf16.msra.mxu0 0
        %917 = vmatprep.subr.bf16.mxu0 0
        %918 = vmatpush1.bf16.msra.mxu0 0
        %919 = vmatprep.subr.bf16.mxu0 0
        %920 = vmatpush1.bf16.msra.mxu0 0
        %921 = vmatprep.subr.bf16.mxu0 0
        %922 = vmatpush1.bf16.msra.mxu0 0
        %923 = vmatprep.subr.bf16.mxu0 0
        %924 = vmatpush1.bf16.msra.mxu0 0
        %925 = vmatprep.subr.bf16.mxu0 0
        %926 = vmatpush1.bf16.msra.mxu0 0
        %927 = vmatprep.mubr.bf16.mxu0 0
        %928 = vmatmul.mubr.bf16.gmra.mrb[0].mxu0 %v608
        %v929 = vpop.f32.mrb[0].mxu0
        %v930 = vadd.f32 0.0, %v929
        %v931 = vpop.f32.mrb[0].mxu0
        %v932 = vpop.f32.mrb[0].mxu0
        %v933 = vpop.f32.mrb[0].mxu0
        %934 = vdwg.mxu0
        %v935 = vmul.f32 %v930, 0.35355338
        %s936 = scalar_lea.vmem %s7, 16
        %v937 = vld [vmem:[%s936] sm:$0xf]
        %v938 = vld [vmem:[%s936 + $0x4] sm:$0xf]
        %v939 = vld [vmem:[%s936 + $0x8] sm:$0xf]
        %v940 = vld [vmem:[%s936 + $0xc] sm:$0xf]
        %v945 = vunpack.c.l.b16 %v937
        %v946 = vunpack.c.l.b16 %v938
        %v947 = vunpack.c.l.b16 %v939
        %v948 = vunpack.c.l.b16 %v940
        %v949 = vpack.c.b16 %v946, %v945
        %v950 = vpack.c.b16 %v948, %v947
        %953 = vmatprep.subr.bf16.mxu0 0
        %954 = vmatpush1.bf16.msra.mxu0 %v949
        %955 = vmatprep.subr.bf16.mxu0 0
        %956 = vmatpush1.bf16.msra.mxu0 %v950
        %957 = vmatprep.subr.bf16.mxu0 0
        %958 = vmatpush1.bf16.msra.mxu0 0
        %959 = vmatprep.subr.bf16.mxu0 0
        %960 = vmatpush1.bf16.msra.mxu0 0
        %961 = vmatprep.subr.bf16.mxu0 0
        %962 = vmatpush1.bf16.msra.mxu0 0
        %963 = vmatprep.subr.bf16.mxu0 0
        %964 = vmatpush1.bf16.msra.mxu0 0
        %965 = vmatprep.subr.bf16.mxu0 0
        %966 = vmatpush1.bf16.msra.mxu0 0
        %967 = vmatprep.subr.bf16.mxu0 0
        %968 = vmatpush1.bf16.msra.mxu0 0
        %969 = vmatprep.subr.bf16.mxu0 0
        %970 = vmatpush1.bf16.msra.mxu0 0
        %971 = vmatprep.subr.bf16.mxu0 0
        %972 = vmatpush1.bf16.msra.mxu0 0
        %973 = vmatprep.subr.bf16.mxu0 0
        %974 = vmatpush1.bf16.msra.mxu0 0
        %975 = vmatprep.subr.bf16.mxu0 0
        %976 = vmatpush1.bf16.msra.mxu0 0
        %977 = vmatprep.subr.bf16.mxu0 0
        %978 = vmatpush1.bf16.msra.mxu0 0
        %979 = vmatprep.subr.bf16.mxu0 0
        %980 = vmatpush1.bf16.msra.mxu0 0
        %981 = vmatprep.subr.bf16.mxu0 0
        %982 = vmatpush1.bf16.msra.mxu0 0
        %983 = vmatprep.subr.bf16.mxu0 0
        %984 = vmatpush1.bf16.msra.mxu0 0
        %985 = vmatprep.mubr.bf16.mxu0 0
        %986 = vmatmul.mubr.bf16.gmra.mrb[0].mxu0 %v668
        %v987 = vpop.f32.mrb[0].mxu0
        %v988 = vadd.f32 0.0, %v987
        %v989 = vpop.f32.mrb[0].mxu0
        %v990 = vpop.f32.mrb[0].mxu0
        %v991 = vpop.f32.mrb[0].mxu0
        %992 = vdwg.mxu0
        %s993 = scalar_lea.vmem %s8, 16
        %v994 = vld [vmem:[%s993] sm:$0xf]
        %v995 = vld [vmem:[%s993 + $0x4] sm:$0xf]
        %v996 = vld [vmem:[%s993 + $0x8] sm:$0xf]
        %v997 = vld [vmem:[%s993 + $0xc] sm:$0xf]
        %v1002 = vunpack.c.l.b16 %v994
        %v1003 = vunpack.c.l.b16 %v995
        %v1004 = vunpack.c.l.b16 %v996
        %v1005 = vunpack.c.l.b16 %v997
        %v1006 = vpack.c.b16 %v1003, %v1002
        %v1007 = vpack.c.b16 %v1005, %v1004
        %1010 = vmatprep.subr.bf16.mxu0 0
        %1011 = vmatpush1.bf16.msra.mxu0 %v1006
        %1012 = vmatprep.subr.bf16.mxu0 0
        %1013 = vmatpush1.bf16.msra.mxu0 %v1007
        %1014 = vmatprep.subr.bf16.mxu0 0
        %1015 = vmatpush1.bf16.msra.mxu0 0
        %1016 = vmatprep.subr.bf16.mxu0 0
        %1017 = vmatpush1.bf16.msra.mxu0 0
        %1018 = vmatprep.subr.bf16.mxu0 0
        %1019 = vmatpush1.bf16.msra.mxu0 0
        %1020 = vmatprep.subr.bf16.mxu0 0
        %1021 = vmatpush1.bf16.msra.mxu0 0
        %1022 = vmatprep.subr.bf16.mxu0 0
        %1023 = vmatpush1.bf16.msra.mxu0 0
        %1024 = vmatprep.subr.bf16.mxu0 0
        %1025 = vmatpush1.bf16.msra.mxu0 0
        %1026 = vmatprep.subr.bf16.mxu0 0
        %1027 = vmatpush1.bf16.msra.mxu0 0
        %1028 = vmatprep.subr.bf16.mxu0 0
        %1029 = vmatpush1.bf16.msra.mxu0 0
        %1030 = vmatprep.subr.bf16.mxu0 0
        %1031 = vmatpush1.bf16.msra.mxu0 0
        %1032 = vmatprep.subr.bf16.mxu0 0
        %1033 = vmatpush1.bf16.msra.mxu0 0
        %1034 = vmatprep.subr.bf16.mxu0 0
        %1035 = vmatpush1.bf16.msra.mxu0 0
        %1036 = vmatprep.subr.bf16.mxu0 0
        %1037 = vmatpush1.bf16.msra.mxu0 0
        %1038 = vmatprep.subr.bf16.mxu0 0
        %1039 = vmatpush1.bf16.msra.mxu0 0
        %1040 = vmatprep.subr.bf16.mxu0 0
        %1041 = vmatpush1.bf16.msra.mxu0 0
        %1042 = vmatprep.mubr.bf16.mxu0 0
        %1043 = vmatmul.mubr.bf16.gmra.mrb[0].mxu0 %v668
        %v1044 = vpop.f32.mrb[0].mxu0
        %v1045 = vadd.f32 0.0, %v1044
        %v1046 = vpop.f32.mrb[0].mxu0
        %v1047 = vpop.f32.mrb[0].mxu0
        %v1048 = vpop.f32.mrb[0].mxu0
        %1049 = vdwg.mxu0
        %v1050 = vpack.c.bf16 %v935, %v935
        %v1051 = vpack.c.bf16 %v988, %v988
        %v1053 = vsel %vm768, %v1050, 0
        %v1056 = vsel %vm768, %v1051, 0
        %1058 = vmatprep.subr.bf16.mxu0 0
        %1059 = vmatpush1.bf16.xpose.msra.mxu0 %v1056
        %1060 = vmatprep.subr.bf16.mxu0 0
        %1061 = vmatpush1.bf16.xpose.msra.mxu0 0
        %1062 = vmatprep.subr.bf16.mxu0 0
        %1063 = vmatpush1.bf16.xpose.msra.mxu0 0
        %1064 = vmatprep.subr.bf16.mxu0 0
        %1065 = vmatpush1.bf16.xpose.msra.mxu0 0
        %1066 = vmatprep.subr.bf16.mxu0 0
        %1067 = vmatpush1.bf16.xpose.msra.mxu0 0
        %1068 = vmatprep.subr.bf16.mxu0 0
        %1069 = vmatpush1.bf16.xpose.msra.mxu0 0
        %1070 = vmatprep.subr.bf16.mxu0 0
        %1071 = vmatpush1.bf16.xpose.msra.mxu0 0
        %1072 = vmatprep.subr.bf16.mxu0 0
        %1073 = vmatpush1.bf16.xpose.msra.mxu0 0
        %1074 = vmatprep.subr.bf16.mxu0 0
        %1075 = vmatpush1.bf16.xpose.msra.mxu0 0
        %1076 = vmatprep.subr.bf16.mxu0 0
        %1077 = vmatpush1.bf16.xpose.msra.mxu0 0
        %1078 = vmatprep.subr.bf16.mxu0 0
        %1079 = vmatpush1.bf16.xpose.msra.mxu0 0
        %1080 = vmatprep.subr.bf16.mxu0 0
        %1081 = vmatpush1.bf16.xpose.msra.mxu0 0
        %1082 = vmatprep.subr.bf16.mxu0 0
        %1083 = vmatpush1.bf16.xpose.msra.mxu0 0
        %1084 = vmatprep.subr.bf16.mxu0 0
        %1085 = vmatpush1.bf16.xpose.msra.mxu0 0
        %1086 = vmatprep.subr.bf16.mxu0 0
        %1087 = vmatpush1.bf16.xpose.msra.mxu0 0
        %1088 = vmatprep.subr.bf16.mxu0 0
        %1089 = vmatpush1.bf16.xpose.msra.mxu0 0
        %1090 = vmatprep.mubr.bf16.mxu0 0
        %1091 = vmatmul.mubr.bf16.gmra.mrb[0].mxu0 %v1053
        %v1092 = vpop.f32.mrb[0].mxu0
        %v1093 = vadd.f32 0.0, %v1092
        %v1094 = vpop.f32.mrb[0].mxu0
        %v1095 = vpop.f32.mrb[0].mxu0
        %v1096 = vpop.f32.mrb[0].mxu0
        %1097 = vdwg.mxu0
        %v1098 = vsel %vm590, -1e+30, %v1093
        %v1099 = vsel %vm768, %v1098, -inf
        %1100 = vmax.xlane.f32.xlu0 %v1099
        %v1101 = vpop.xlane.xlu0 %1100
        %v1102 = vsub.f32 %v1098, %v1101
        %v1103 = vmul.f32 %v1102, 1.442695
        %v1104 = vpow.pop %v1103
        %v1105 = vsel %vm768, %v1104, 0.0
        %1106 = vadd.xlane.f32.xlu0 %v1105
        %v1107 = vpop.xlane.xlu0 %1106
        %v1108 = vrcp.pop %v1107
        %v1109 = vmul.f32 %v1104, %v1108
        %v1110 = vpack.c.bf16 %v1109, %v1109
        %v1111 = vpack.c.bf16 %v1045, %v1045
        %v1113 = vsel %vm768, %v1110, 0
        %v1116 = vsel %vm832, %v1111, 0
        %1118 = vmatprep.subr.bf16.mxu0 0
        %1119 = vmatpush1.bf16.msra.mxu0 %v1116
        %1120 = vmatprep.subr.bf16.mxu0 0
        %1121 = vmatpush1.bf16.msra.mxu0 0
        %1122 = vmatprep.subr.bf16.mxu0 0
        %1123 = vmatpush1.bf16.msra.mxu0 0
        %1124 = vmatprep.subr.bf16.mxu0 0
        %1125 = vmatpush1.bf16.msra.mxu0 0
        %1126 = vmatprep.subr.bf16.mxu0 0
        %1127 = vmatpush1.bf16.msra.mxu0 0
        %1128 = vmatprep.subr.bf16.mxu0 0
        %1129 = vmatpush1.bf16.msra.mxu0 0
        %1130 = vmatprep.subr.bf16.mxu0 0
        %1131 = vmatpush1.bf16.msra.mxu0 0
        %1132 = vmatprep.subr.bf16.mxu0 0
        %1133 = vmatpush1.bf16.msra.mxu0 0
        %1134 = vmatprep.subr.bf16.mxu0 0
        %1135 = vmatpush1.bf16.msra.mxu0 0
        %1136 = vmatprep.subr.bf16.mxu0 0
        %1137 = vmatpush1.bf16.msra.mxu0 0
        %1138 = vmatprep.subr.bf16.mxu0 0
        %1139 = vmatpush1.bf16.msra.mxu0 0
        %1140 = vmatprep.subr.bf16.mxu0 0
        %1141 = vmatpush1.bf16.msra.mxu0 0
        %1142 = vmatprep.subr.bf16.mxu0 0
        %1143 = vmatpush1.bf16.msra.mxu0 0
        %1144 = vmatprep.subr.bf16.mxu0 0
        %1145 = vmatpush1.bf16.msra.mxu0 0
        %1146 = vmatprep.subr.bf16.mxu0 0
        %1147 = vmatpush1.bf16.msra.mxu0 0
        %1148 = vmatprep.subr.bf16.mxu0 0
        %1149 = vmatpush1.bf16.msra.mxu0 0
        %1150 = vmatprep.mubr.bf16.mxu0 0
        %1151 = vmatmul.mubr.bf16.gmra.mrb[0].mxu0 %v1113
        %v1152 = vpop.f32.mrb[0].mxu0
        %v1153 = vadd.f32 0.0, %v1152
        %v1154 = vpop.f32.mrb[0].mxu0
        %v1155 = vpop.f32.mrb[0].mxu0
        %v1156 = vpop.f32.mrb[0].mxu0
        %1157 = vdwg.mxu0
        %v1158 = vpack.c.bf16 %v1153, %v1153
        %s1159 = scalar_lea.vmem %s9, 4
        %v1160 = vld [vmem:[%s1159] sm:$0xf]
        %v1162 = vsel %vm768, %v1158, 0
        %v1165 = vsel %vm832, %v1160, 0
        %1167 = vmatprep.subr.bf16.mxu0 0
        %1168 = vmatpush1.bf16.msra.mxu0 %v1165
        %1169 = vmatprep.subr.bf16.mxu0 0
        %1170 = vmatpush1.bf16.msra.mxu0 0
        %1171 = vmatprep.subr.bf16.mxu0 0
        %1172 = vmatpush1.bf16.msra.mxu0 0
        %1173 = vmatprep.subr.bf16.mxu0 0
        %1174 = vmatpush1.bf16.msra.mxu0 0
        %1175 = vmatprep.subr.bf16.mxu0 0
        %1176 = vmatpush1.bf16.msra.mxu0 0
        %1177 = vmatprep.subr.bf16.mxu0 0
        %1178 = vmatpush1.bf16.msra.mxu0 0
        %1179 = vmatprep.subr.bf16.mxu0 0
        %1180 = vmatpush1.bf16.msra.mxu0 0
        %1181 = vmatprep.subr.bf16.mxu0 0
        %1182 = vmatpush1.bf16.msra.mxu0 0
        %1183 = vmatprep.subr.bf16.mxu0 0
        %1184 = vmatpush1.bf16.msra.mxu0 0
        %1185 = vmatprep.subr.bf16.mxu0 0
        %1186 = vmatpush1.bf16.msra.mxu0 0
        %1187 = vmatprep.subr.bf16.mxu0 0
        %1188 = vmatpush1.bf16.msra.mxu0 0
        %1189 = vmatprep.subr.bf16.mxu0 0
        %1190 = vmatpush1.bf16.msra.mxu0 0
        %1191 = vmatprep.subr.bf16.mxu0 0
        %1192 = vmatpush1.bf16.msra.mxu0 0
        %1193 = vmatprep.subr.bf16.mxu0 0
        %1194 = vmatpush1.bf16.msra.mxu0 0
        %1195 = vmatprep.subr.bf16.mxu0 0
        %1196 = vmatpush1.bf16.msra.mxu0 0
        %1197 = vmatprep.subr.bf16.mxu0 0
        %1198 = vmatpush1.bf16.msra.mxu0 0
        %1199 = vmatprep.mubr.bf16.mxu0 0
        %1200 = vmatmul.mubr.bf16.gmra.mrb[0].mxu0 %v1162
        %v1201 = vpop.f32.mrb[0].mxu0
        %v1202 = vadd.f32 0.0, %v1201
        %v1203 = vpop.f32.mrb[0].mxu0
        %v1204 = vpop.f32.mrb[0].mxu0
        %v1205 = vpop.f32.mrb[0].mxu0
        %1206 = vdwg.mxu0
        %v1208 = vsel %vm768, %v876, 0
        %v1211 = vsel %vm832, %v877, 0
        %1213 = vmatprep.subr.bf16.mxu0 0
        %1214 = vmatpush1.bf16.msra.mxu0 %v1211
        %1215 = vmatprep.subr.bf16.mxu0 0
        %1216 = vmatpush1.bf16.msra.mxu0 0
        %1217 = vmatprep.subr.bf16.mxu0 0
        %1218 = vmatpush1.bf16.msra.mxu0 0
        %1219 = vmatprep.subr.bf16.mxu0 0
        %1220 = vmatpush1.bf16.msra.mxu0 0
        %1221 = vmatprep.subr.bf16.mxu0 0
        %1222 = vmatpush1.bf16.msra.mxu0 0
        %1223 = vmatprep.subr.bf16.mxu0 0
        %1224 = vmatpush1.bf16.msra.mxu0 0
        %1225 = vmatprep.subr.bf16.mxu0 0
        %1226 = vmatpush1.bf16.msra.mxu0 0
        %1227 = vmatprep.subr.bf16.mxu0 0
        %1228 = vmatpush1.bf16.msra.mxu0 0
        %1229 = vmatprep.subr.bf16.mxu0 0
        %1230 = vmatpush1.bf16.msra.mxu0 0
        %1231 = vmatprep.subr.bf16.mxu0 0
        %1232 = vmatpush1.bf16.msra.mxu0 0
        %1233 = vmatprep.subr.bf16.mxu0 0
        %1234 = vmatpush1.bf16.msra.mxu0 0
        %1235 = vmatprep.subr.bf16.mxu0 0
        %1236 = vmatpush1.bf16.msra.mxu0 0
        %1237 = vmatprep.subr.bf16.mxu0 0
        %1238 = vmatpush1.bf16.msra.mxu0 0
        %1239 = vmatprep.subr.bf16.mxu0 0
        %1240 = vmatpush1.bf16.msra.mxu0 0
        %1241 = vmatprep.subr.bf16.mxu0 0
        %1242 = vmatpush1.bf16.msra.mxu0 0
        %1243 = vmatprep.subr.bf16.mxu0 0
        %1244 = vmatpush1.bf16.msra.mxu0 0
        %1245 = vmatprep.mubr.bf16.mxu0 0
        %1246 = vmatmul.mubr.bf16.gmra.mrb[0].mxu0 %v1208
        %v1247 = vpop.f32.mrb[0].mxu0
        %v1248 = vadd.f32 %v1202, %v1247
        %v1249 = vpop.f32.mrb[0].mxu0
        %v1250 = vpop.f32.mrb[0].mxu0
        %v1251 = vpop.f32.mrb[0].mxu0
        %1252 = vdwg.mxu0
        %s1253 = scalar_lea.vmem %s6, 32
        %v1254 = vld [vmem:[%s1253] sm:$0xf]
        %v1255 = vld [vmem:[%s1253 + $0x4] sm:$0xf]
        %v1256 = vld [vmem:[%s1253 + $0x8] sm:$0xf]
        %v1257 = vld [vmem:[%s1253 + $0xc] sm:$0xf]
        %v1262 = vunpack.c.l.b16 %v1254
        %v1263 = vunpack.c.l.b16 %v1255
        %v1264 = vunpack.c.l.b16 %v1256
        %v1265 = vunpack.c.l.b16 %v1257
        %v1266 = vpack.c.b16 %v1263, %v1262
        %v1267 = vpack.c.b16 %v1265, %v1264
        %1270 = vmatprep.subr.bf16.mxu0 0
        %1271 = vmatpush1.bf16.msra.mxu0 %v1266
        %1272 = vmatprep.subr.bf16.mxu0 0
        %1273 = vmatpush1.bf16.msra.mxu0 %v1267
        %1274 = vmatprep.subr.bf16.mxu0 0
        %1275 = vmatpush1.bf16.msra.mxu0 0
        %1276 = vmatprep.subr.bf16.mxu0 0
        %1277 = vmatpush1.bf16.msra.mxu0 0
        %1278 = vmatprep.subr.bf16.mxu0 0
        %1279 = vmatpush1.bf16.msra.mxu0 0
        %1280 = vmatprep.subr.bf16.mxu0 0
        %1281 = vmatpush1.bf16.msra.mxu0 0
        %1282 = vmatprep.subr.bf16.mxu0 0
        %1283 = vmatpush1.bf16.msra.mxu0 0
        %1284 = vmatprep.subr.bf16.mxu0 0
        %1285 = vmatpush1.bf16.msra.mxu0 0
        %1286 = vmatprep.subr.bf16.mxu0 0
        %1287 = vmatpush1.bf16.msra.mxu0 0
        %1288 = vmatprep.subr.bf16.mxu0 0
        %1289 = vmatpush1.bf16.msra.mxu0 0
        %1290 = vmatprep.subr.bf16.mxu0 0
        %1291 = vmatpush1.bf16.msra.mxu0 0
        %1292 = vmatprep.subr.bf16.mxu0 0
        %1293 = vmatpush1.bf16.msra.mxu0 0
        %1294 = vmatprep.subr.bf16.mxu0 0
        %1295 = vmatpush1.bf16.msra.mxu0 0
        %1296 = vmatprep.subr.bf16.mxu0 0
        %1297 = vmatpush1.bf16.msra.mxu0 0
        %1298 = vmatprep.subr.bf16.mxu0 0
        %1299 = vmatpush1.bf16.msra.mxu0 0
        %1300 = vmatprep.subr.bf16.mxu0 0
        %1301 = vmatpush1.bf16.msra.mxu0 0
        %1302 = vmatprep.mubr.bf16.mxu0 0
        %1303 = vmatmul.mubr.bf16.gmra.mrb[0].mxu0 %v608
        %v1304 = vpop.f32.mrb[0].mxu0
        %v1305 = vadd.f32 0.0, %v1304
        %v1306 = vpop.f32.mrb[0].mxu0
        %v1307 = vpop.f32.mrb[0].mxu0
        %v1308 = vpop.f32.mrb[0].mxu0
        %1309 = vdwg.mxu0
        %v1310 = vmul.f32 %v1305, 0.35355338
        %s1311 = scalar_lea.vmem %s7, 32
        %v1312 = vld [vmem:[%s1311] sm:$0xf]
        %v1313 = vld [vmem:[%s1311 + $0x4] sm:$0xf]
        %v1314 = vld [vmem:[%s1311 + $0x8] sm:$0xf]
        %v1315 = vld [vmem:[%s1311 + $0xc] sm:$0xf]
        %v1320 = vunpack.c.l.b16 %v1312
        %v1321 = vunpack.c.l.b16 %v1313
        %v1322 = vunpack.c.l.b16 %v1314
        %v1323 = vunpack.c.l.b16 %v1315
        %v1324 = vpack.c.b16 %v1321, %v1320
        %v1325 = vpack.c.b16 %v1323, %v1322
        %1328 = vmatprep.subr.bf16.mxu0 0
        %1329 = vmatpush1.bf16.msra.mxu0 %v1324
        %1330 = vmatprep.subr.bf16.mxu0 0
        %1331 = vmatpush1.bf16.msra.mxu0 %v1325
        %1332 = vmatprep.subr.bf16.mxu0 0
        %1333 = vmatpush1.bf16.msra.mxu0 0
        %1334 = vmatprep.subr.bf16.mxu0 0
        %1335 = vmatpush1.bf16.msra.mxu0 0
        %1336 = vmatprep.subr.bf16.mxu0 0
        %1337 = vmatpush1.bf16.msra.mxu0 0
        %1338 = vmatprep.subr.bf16.mxu0 0
        %1339 = vmatpush1.bf16.msra.mxu0 0
        %1340 = vmatprep.subr.bf16.mxu0 0
        %1341 = vmatpush1.bf16.msra.mxu0 0
        %1342 = vmatprep.subr.bf16.mxu0 0
        %1343 = vmatpush1.bf16.msra.mxu0 0
        %1344 = vmatprep.subr.bf16.mxu0 0
        %1345 = vmatpush1.bf16.msra.mxu0 0
        %1346 = vmatprep.subr.bf16.mxu0 0
        %1347 = vmatpush1.bf16.msra.mxu0 0
        %1348 = vmatprep.subr.bf16.mxu0 0
        %1349 = vmatpush1.bf16.msra.mxu0 0
        %1350 = vmatprep.subr.bf16.mxu0 0
        %1351 = vmatpush1.bf16.msra.mxu0 0
        %1352 = vmatprep.subr.bf16.mxu0 0
        %1353 = vmatpush1.bf16.msra.mxu0 0
        %1354 = vmatprep.subr.bf16.mxu0 0
        %1355 = vmatpush1.bf16.msra.mxu0 0
        %1356 = vmatprep.subr.bf16.mxu0 0
        %1357 = vmatpush1.bf16.msra.mxu0 0
        %1358 = vmatprep.subr.bf16.mxu0 0
        %1359 = vmatpush1.bf16.msra.mxu0 0
        %1360 = vmatprep.mubr.bf16.mxu0 0
        %1361 = vmatmul.mubr.bf16.gmra.mrb[0].mxu0 %v668
        %v1362 = vpop.f32.mrb[0].mxu0
        %v1363 = vadd.f32 0.0, %v1362
        %v1364 = vpop.f32.mrb[0].mxu0
        %v1365 = vpop.f32.mrb[0].mxu0
        %v1366 = vpop.f32.mrb[0].mxu0
        %1367 = vdwg.mxu0
        %s1368 = scalar_lea.vmem %s8, 32
        %v1369 = vld [vmem:[%s1368] sm:$0xf]
        %v1370 = vld [vmem:[%s1368 + $0x4] sm:$0xf]
        %v1371 = vld [vmem:[%s1368 + $0x8] sm:$0xf]
        %v1372 = vld [vmem:[%s1368 + $0xc] sm:$0xf]
        %v1377 = vunpack.c.l.b16 %v1369
        %v1378 = vunpack.c.l.b16 %v1370
        %v1379 = vunpack.c.l.b16 %v1371
        %v1380 = vunpack.c.l.b16 %v1372
        %v1381 = vpack.c.b16 %v1378, %v1377
        %v1382 = vpack.c.b16 %v1380, %v1379
        %1385 = vmatprep.subr.bf16.mxu0 0
        %1386 = vmatpush1.bf16.msra.mxu0 %v1381
        %1387 = vmatprep.subr.bf16.mxu0 0
        %1388 = vmatpush1.bf16.msra.mxu0 %v1382
        %1389 = vmatprep.subr.bf16.mxu0 0
        %1390 = vmatpush1.bf16.msra.mxu0 0
        %1391 = vmatprep.subr.bf16.mxu0 0
        %1392 = vmatpush1.bf16.msra.mxu0 0
        %1393 = vmatprep.subr.bf16.mxu0 0
        %1394 = vmatpush1.bf16.msra.mxu0 0
        %1395 = vmatprep.subr.bf16.mxu0 0
        %1396 = vmatpush1.bf16.msra.mxu0 0
        %1397 = vmatprep.subr.bf16.mxu0 0
        %1398 = vmatpush1.bf16.msra.mxu0 0
        %1399 = vmatprep.subr.bf16.mxu0 0
        %1400 = vmatpush1.bf16.msra.mxu0 0
        %1401 = vmatprep.subr.bf16.mxu0 0
        %1402 = vmatpush1.bf16.msra.mxu0 0
        %1403 = vmatprep.subr.bf16.mxu0 0
        %1404 = vmatpush1.bf16.msra.mxu0 0
        %1405 = vmatprep.subr.bf16.mxu0 0
        %1406 = vmatpush1.bf16.msra.mxu0 0
        %1407 = vmatprep.subr.bf16.mxu0 0
        %1408 = vmatpush1.bf16.msra.mxu0 0
        %1409 = vmatprep.subr.bf16.mxu0 0
        %1410 = vmatpush1.bf16.msra.mxu0 0
        %1411 = vmatprep.subr.bf16.mxu0 0
        %1412 = vmatpush1.bf16.msra.mxu0 0
        %1413 = vmatprep.subr.bf16.mxu0 0
        %1414 = vmatpush1.bf16.msra.mxu0 0
        %1415 = vmatprep.subr.bf16.mxu0 0
        %1416 = vmatpush1.bf16.msra.mxu0 0
        %1417 = vmatprep.mubr.bf16.mxu0 0
        %1418 = vmatmul.mubr.bf16.gmra.mrb[0].mxu0 %v668
        %v1419 = vpop.f32.mrb[0].mxu0
        %v1420 = vadd.f32 0.0, %v1419
        %v1421 = vpop.f32.mrb[0].mxu0
        %v1422 = vpop.f32.mrb[0].mxu0
        %v1423 = vpop.f32.mrb[0].mxu0
        %1424 = vdwg.mxu0
        %v1425 = vpack.c.bf16 %v1310, %v1310
        %v1426 = vpack.c.bf16 %v1363, %v1363
        %v1428 = vsel %vm768, %v1425, 0
        %v1431 = vsel %vm768, %v1426, 0
        %1433 = vmatprep.subr.bf16.mxu0 0
        %1434 = vmatpush1.bf16.xpose.msra.mxu0 %v1431
        %1435 = vmatprep.subr.bf16.mxu0 0
        %1436 = vmatpush1.bf16.xpose.msra.mxu0 0
        %1437 = vmatprep.subr.bf16.mxu0 0
        %1438 = vmatpush1.bf16.xpose.msra.mxu0 0
        %1439 = vmatprep.subr.bf16.mxu0 0
        %1440 = vmatpush1.bf16.xpose.msra.mxu0 0
        %1441 = vmatprep.subr.bf16.mxu0 0
        %1442 = vmatpush1.bf16.xpose.msra.mxu0 0
        %1443 = vmatprep.subr.bf16.mxu0 0
        %1444 = vmatpush1.bf16.xpose.msra.mxu0 0
        %1445 = vmatprep.subr.bf16.mxu0 0
        %1446 = vmatpush1.bf16.xpose.msra.mxu0 0
        %1447 = vmatprep.subr.bf16.mxu0 0
        %1448 = vmatpush1.bf16.xpose.msra.mxu0 0
        %1449 = vmatprep.subr.bf16.mxu0 0
        %1450 = vmatpush1.bf16.xpose.msra.mxu0 0
        %1451 = vmatprep.subr.bf16.mxu0 0
        %1452 = vmatpush1.bf16.xpose.msra.mxu0 0
        %1453 = vmatprep.subr.bf16.mxu0 0
        %1454 = vmatpush1.bf16.xpose.msra.mxu0 0
        %1455 = vmatprep.subr.bf16.mxu0 0
        %1456 = vmatpush1.bf16.xpose.msra.mxu0 0
        %1457 = vmatprep.subr.bf16.mxu0 0
        %1458 = vmatpush1.bf16.xpose.msra.mxu0 0
        %1459 = vmatprep.subr.bf16.mxu0 0
        %1460 = vmatpush1.bf16.xpose.msra.mxu0 0
        %1461 = vmatprep.subr.bf16.mxu0 0
        %1462 = vmatpush1.bf16.xpose.msra.mxu0 0
        %1463 = vmatprep.subr.bf16.mxu0 0
        %1464 = vmatpush1.bf16.xpose.msra.mxu0 0
        %1465 = vmatprep.mubr.bf16.mxu0 0
        %1466 = vmatmul.mubr.bf16.gmra.mrb[0].mxu0 %v1428
        %v1467 = vpop.f32.mrb[0].mxu0
        %v1468 = vadd.f32 0.0, %v1467
        %v1469 = vpop.f32.mrb[0].mxu0
        %v1470 = vpop.f32.mrb[0].mxu0
        %v1471 = vpop.f32.mrb[0].mxu0
        %1472 = vdwg.mxu0
        %v1473 = vsel %vm590, -1e+30, %v1468
        %v1474 = vsel %vm768, %v1473, -inf
        %1475 = vmax.xlane.f32.xlu0 %v1474
        %v1476 = vpop.xlane.xlu0 %1475
        %v1477 = vsub.f32 %v1473, %v1476
        %v1478 = vmul.f32 %v1477, 1.442695
        %v1479 = vpow.pop %v1478
        %v1480 = vsel %vm768, %v1479, 0.0
        %1481 = vadd.xlane.f32.xlu0 %v1480
        %v1482 = vpop.xlane.xlu0 %1481
        %v1483 = vrcp.pop %v1482
        %v1484 = vmul.f32 %v1479, %v1483
        %v1485 = vpack.c.bf16 %v1484, %v1484
        %v1486 = vpack.c.bf16 %v1420, %v1420
        %v1488 = vsel %vm768, %v1485, 0
        %v1491 = vsel %vm832, %v1486, 0
        %1493 = vmatprep.subr.bf16.mxu0 0
        %1494 = vmatpush1.bf16.msra.mxu0 %v1491
        %1495 = vmatprep.subr.bf16.mxu0 0
        %1496 = vmatpush1.bf16.msra.mxu0 0
        %1497 = vmatprep.subr.bf16.mxu0 0
        %1498 = vmatpush1.bf16.msra.mxu0 0
        %1499 = vmatprep.subr.bf16.mxu0 0
        %1500 = vmatpush1.bf16.msra.mxu0 0
        %1501 = vmatprep.subr.bf16.mxu0 0
        %1502 = vmatpush1.bf16.msra.mxu0 0
        %1503 = vmatprep.subr.bf16.mxu0 0
        %1504 = vmatpush1.bf16.msra.mxu0 0
        %1505 = vmatprep.subr.bf16.mxu0 0
        %1506 = vmatpush1.bf16.msra.mxu0 0
        %1507 = vmatprep.subr.bf16.mxu0 0
        %1508 = vmatpush1.bf16.msra.mxu0 0
        %1509 = vmatprep.subr.bf16.mxu0 0
        %1510 = vmatpush1.bf16.msra.mxu0 0
        %1511 = vmatprep.subr.bf16.mxu0 0
        %1512 = vmatpush1.bf16.msra.mxu0 0
        %1513 = vmatprep.subr.bf16.mxu0 0
        %1514 = vmatpush1.bf16.msra.mxu0 0
        %1515 = vmatprep.subr.bf16.mxu0 0
        %1516 = vmatpush1.bf16.msra.mxu0 0
        %1517 = vmatprep.subr.bf16.mxu0 0
        %1518 = vmatpush1.bf16.msra.mxu0 0
        %1519 = vmatprep.subr.bf16.mxu0 0
        %1520 = vmatpush1.bf16.msra.mxu0 0
        %1521 = vmatprep.subr.bf16.mxu0 0
        %1522 = vmatpush1.bf16.msra.mxu0 0
        %1523 = vmatprep.subr.bf16.mxu0 0
        %1524 = vmatpush1.bf16.msra.mxu0 0
        %1525 = vmatprep.mubr.bf16.mxu0 0
        %1526 = vmatmul.mubr.bf16.gmra.mrb[0].mxu0 %v1488
        %v1527 = vpop.f32.mrb[0].mxu0
        %v1528 = vadd.f32 0.0, %v1527
        %v1529 = vpop.f32.mrb[0].mxu0
        %v1530 = vpop.f32.mrb[0].mxu0
        %v1531 = vpop.f32.mrb[0].mxu0
        %1532 = vdwg.mxu0
        %v1533 = vpack.c.bf16 %v1528, %v1528
        %s1534 = scalar_lea.vmem %s9, 8
        %v1535 = vld [vmem:[%s1534] sm:$0xf]
        %v1537 = vsel %vm768, %v1533, 0
        %v1540 = vsel %vm832, %v1535, 0
        %1542 = vmatprep.subr.bf16.mxu0 0
        %1543 = vmatpush1.bf16.msra.mxu0 %v1540
        %1544 = vmatprep.subr.bf16.mxu0 0
        %1545 = vmatpush1.bf16.msra.mxu0 0
        %1546 = vmatprep.subr.bf16.mxu0 0
        %1547 = vmatpush1.bf16.msra.mxu0 0
        %1548 = vmatprep.subr.bf16.mxu0 0
        %1549 = vmatpush1.bf16.msra.mxu0 0
        %1550 = vmatprep.subr.bf16.mxu0 0
        %1551 = vmatpush1.bf16.msra.mxu0 0
        %1552 = vmatprep.subr.bf16.mxu0 0
        %1553 = vmatpush1.bf16.msra.mxu0 0
        %1554 = vmatprep.subr.bf16.mxu0 0
        %1555 = vmatpush1.bf16.msra.mxu0 0
        %1556 = vmatprep.subr.bf16.mxu0 0
        %1557 = vmatpush1.bf16.msra.mxu0 0
        %1558 = vmatprep.subr.bf16.mxu0 0
        %1559 = vmatpush1.bf16.msra.mxu0 0
        %1560 = vmatprep.subr.bf16.mxu0 0
        %1561 = vmatpush1.bf16.msra.mxu0 0
        %1562 = vmatprep.subr.bf16.mxu0 0
        %1563 = vmatpush1.bf16.msra.mxu0 0
        %1564 = vmatprep.subr.bf16.mxu0 0
        %1565 = vmatpush1.bf16.msra.mxu0 0
        %1566 = vmatprep.subr.bf16.mxu0 0
        %1567 = vmatpush1.bf16.msra.mxu0 0
        %1568 = vmatprep.subr.bf16.mxu0 0
        %1569 = vmatpush1.bf16.msra.mxu0 0
        %1570 = vmatprep.subr.bf16.mxu0 0
        %1571 = vmatpush1.bf16.msra.mxu0 0
        %1572 = vmatprep.subr.bf16.mxu0 0
        %1573 = vmatpush1.bf16.msra.mxu0 0
        %1574 = vmatprep.mubr.bf16.mxu0 0
        %1575 = vmatmul.mubr.bf16.gmra.mrb[0].mxu0 %v1537
        %v1576 = vpop.f32.mrb[0].mxu0
        %v1577 = vadd.f32 0.0, %v1576
        %v1578 = vpop.f32.mrb[0].mxu0
        %v1579 = vpop.f32.mrb[0].mxu0
        %v1580 = vpop.f32.mrb[0].mxu0
        %1581 = vdwg.mxu0
        %v1582 = vadd.f32 %v1248, %v1577
        %s1583 = scalar_lea.vmem %s6, 48
        %v1584 = vld [vmem:[%s1583] sm:$0xf]
        %v1585 = vld [vmem:[%s1583 + $0x4] sm:$0xf]
        %v1586 = vld [vmem:[%s1583 + $0x8] sm:$0xf]
        %v1587 = vld [vmem:[%s1583 + $0xc] sm:$0xf]
        %v1592 = vunpack.c.l.b16 %v1584
        %v1593 = vunpack.c.l.b16 %v1585
        %v1594 = vunpack.c.l.b16 %v1586
        %v1595 = vunpack.c.l.b16 %v1587
        %v1596 = vpack.c.b16 %v1593, %v1592
        %v1597 = vpack.c.b16 %v1595, %v1594
        %1600 = vmatprep.subr.bf16.mxu0 0
        %1601 = vmatpush1.bf16.msra.mxu0 %v1596
        %1602 = vmatprep.subr.bf16.mxu0 0
        %1603 = vmatpush1.bf16.msra.mxu0 %v1597
        %1604 = vmatprep.subr.bf16.mxu0 0
        %1605 = vmatpush1.bf16.msra.mxu0 0
        %1606 = vmatprep.subr.bf16.mxu0 0
        %1607 = vmatpush1.bf16.msra.mxu0 0
        %1608 = vmatprep.subr.bf16.mxu0 0
        %1609 = vmatpush1.bf16.msra.mxu0 0
        %1610 = vmatprep.subr.bf16.mxu0 0
        %1611 = vmatpush1.bf16.msra.mxu0 0
        %1612 = vmatprep.subr.bf16.mxu0 0
        %1613 = vmatpush1.bf16.msra.mxu0 0
        %1614 = vmatprep.subr.bf16.mxu0 0
        %1615 = vmatpush1.bf16.msra.mxu0 0
        %1616 = vmatprep.subr.bf16.mxu0 0
        %1617 = vmatpush1.bf16.msra.mxu0 0
        %1618 = vmatprep.subr.bf16.mxu0 0
        %1619 = vmatpush1.bf16.msra.mxu0 0
        %1620 = vmatprep.subr.bf16.mxu0 0
        %1621 = vmatpush1.bf16.msra.mxu0 0
        %1622 = vmatprep.subr.bf16.mxu0 0
        %1623 = vmatpush1.bf16.msra.mxu0 0
        %1624 = vmatprep.subr.bf16.mxu0 0
        %1625 = vmatpush1.bf16.msra.mxu0 0
        %1626 = vmatprep.subr.bf16.mxu0 0
        %1627 = vmatpush1.bf16.msra.mxu0 0
        %1628 = vmatprep.subr.bf16.mxu0 0
        %1629 = vmatpush1.bf16.msra.mxu0 0
        %1630 = vmatprep.subr.bf16.mxu0 0
        %1631 = vmatpush1.bf16.msra.mxu0 0
        %1632 = vmatprep.mubr.bf16.mxu0 0
        %1633 = vmatmul.mubr.bf16.gmra.mrb[0].mxu0 %v608
        %v1634 = vpop.f32.mrb[0].mxu0
        %v1635 = vadd.f32 0.0, %v1634
        %v1636 = vpop.f32.mrb[0].mxu0
        %v1637 = vpop.f32.mrb[0].mxu0
        %v1638 = vpop.f32.mrb[0].mxu0
        %1639 = vdwg.mxu0
        %v1640 = vmul.f32 %v1635, 0.35355338
        %s1641 = scalar_lea.vmem %s7, 48
        %v1642 = vld [vmem:[%s1641] sm:$0xf]
        %v1643 = vld [vmem:[%s1641 + $0x4] sm:$0xf]
        %v1644 = vld [vmem:[%s1641 + $0x8] sm:$0xf]
        %v1645 = vld [vmem:[%s1641 + $0xc] sm:$0xf]
        %v1650 = vunpack.c.l.b16 %v1642
        %v1651 = vunpack.c.l.b16 %v1643
        %v1652 = vunpack.c.l.b16 %v1644
        %v1653 = vunpack.c.l.b16 %v1645
        %v1654 = vpack.c.b16 %v1651, %v1650
        %v1655 = vpack.c.b16 %v1653, %v1652
        %1658 = vmatprep.subr.bf16.mxu0 0
        %1659 = vmatpush1.bf16.msra.mxu0 %v1654
        %1660 = vmatprep.subr.bf16.mxu0 0
        %1661 = vmatpush1.bf16.msra.mxu0 %v1655
        %1662 = vmatprep.subr.bf16.mxu0 0
        %1663 = vmatpush1.bf16.msra.mxu0 0
        %1664 = vmatprep.subr.bf16.mxu0 0
        %1665 = vmatpush1.bf16.msra.mxu0 0
        %1666 = vmatprep.subr.bf16.mxu0 0
        %1667 = vmatpush1.bf16.msra.mxu0 0
        %1668 = vmatprep.subr.bf16.mxu0 0
        %1669 = vmatpush1.bf16.msra.mxu0 0
        %1670 = vmatprep.subr.bf16.mxu0 0
        %1671 = vmatpush1.bf16.msra.mxu0 0
        %1672 = vmatprep.subr.bf16.mxu0 0
        %1673 = vmatpush1.bf16.msra.mxu0 0
        %1674 = vmatprep.subr.bf16.mxu0 0
        %1675 = vmatpush1.bf16.msra.mxu0 0
        %1676 = vmatprep.subr.bf16.mxu0 0
        %1677 = vmatpush1.bf16.msra.mxu0 0
        %1678 = vmatprep.subr.bf16.mxu0 0
        %1679 = vmatpush1.bf16.msra.mxu0 0
        %1680 = vmatprep.subr.bf16.mxu0 0
        %1681 = vmatpush1.bf16.msra.mxu0 0
        %1682 = vmatprep.subr.bf16.mxu0 0
        %1683 = vmatpush1.bf16.msra.mxu0 0
        %1684 = vmatprep.subr.bf16.mxu0 0
        %1685 = vmatpush1.bf16.msra.mxu0 0
        %1686 = vmatprep.subr.bf16.mxu0 0
        %1687 = vmatpush1.bf16.msra.mxu0 0
        %1688 = vmatprep.subr.bf16.mxu0 0
        %1689 = vmatpush1.bf16.msra.mxu0 0
        %1690 = vmatprep.mubr.bf16.mxu0 0
        %1691 = vmatmul.mubr.bf16.gmra.mrb[0].mxu0 %v668
        %v1692 = vpop.f32.mrb[0].mxu0
        %v1693 = vadd.f32 0.0, %v1692
        %v1694 = vpop.f32.mrb[0].mxu0
        %v1695 = vpop.f32.mrb[0].mxu0
        %v1696 = vpop.f32.mrb[0].mxu0
        %1697 = vdwg.mxu0
        %s1698 = scalar_lea.vmem %s8, 48
        %v1699 = vld [vmem:[%s1698] sm:$0xf]
        %v1700 = vld [vmem:[%s1698 + $0x4] sm:$0xf]
        %v1701 = vld [vmem:[%s1698 + $0x8] sm:$0xf]
        %v1702 = vld [vmem:[%s1698 + $0xc] sm:$0xf]
        %v1707 = vunpack.c.l.b16 %v1699
        %v1708 = vunpack.c.l.b16 %v1700
        %v1709 = vunpack.c.l.b16 %v1701
        %v1710 = vunpack.c.l.b16 %v1702
        %v1711 = vpack.c.b16 %v1708, %v1707
        %v1712 = vpack.c.b16 %v1710, %v1709
        %1715 = vmatprep.subr.bf16.mxu0 0
        %1716 = vmatpush1.bf16.msra.mxu0 %v1711
        %1717 = vmatprep.subr.bf16.mxu0 0
        %1718 = vmatpush1.bf16.msra.mxu0 %v1712
        %1719 = vmatprep.subr.bf16.mxu0 0
        %1720 = vmatpush1.bf16.msra.mxu0 0
        %1721 = vmatprep.subr.bf16.mxu0 0
        %1722 = vmatpush1.bf16.msra.mxu0 0
        %1723 = vmatprep.subr.bf16.mxu0 0
        %1724 = vmatpush1.bf16.msra.mxu0 0
        %1725 = vmatprep.subr.bf16.mxu0 0
        %1726 = vmatpush1.bf16.msra.mxu0 0
        %1727 = vmatprep.subr.bf16.mxu0 0
        %1728 = vmatpush1.bf16.msra.mxu0 0
        %1729 = vmatprep.subr.bf16.mxu0 0
        %1730 = vmatpush1.bf16.msra.mxu0 0
        %1731 = vmatprep.subr.bf16.mxu0 0
        %1732 = vmatpush1.bf16.msra.mxu0 0
        %1733 = vmatprep.subr.bf16.mxu0 0
        %1734 = vmatpush1.bf16.msra.mxu0 0
        %1735 = vmatprep.subr.bf16.mxu0 0
        %1736 = vmatpush1.bf16.msra.mxu0 0
        %1737 = vmatprep.subr.bf16.mxu0 0
        %1738 = vmatpush1.bf16.msra.mxu0 0
        %1739 = vmatprep.subr.bf16.mxu0 0
        %1740 = vmatpush1.bf16.msra.mxu0 0
        %1741 = vmatprep.subr.bf16.mxu0 0
        %1742 = vmatpush1.bf16.msra.mxu0 0
        %1743 = vmatprep.subr.bf16.mxu0 0
        %1744 = vmatpush1.bf16.msra.mxu0 0
        %1745 = vmatprep.subr.bf16.mxu0 0
        %1746 = vmatpush1.bf16.msra.mxu0 0
        %1747 = vmatprep.mubr.bf16.mxu0 0
        %1748 = vmatmul.mubr.bf16.gmra.mrb[0].mxu0 %v668
        %v1749 = vpop.f32.mrb[0].mxu0
        %v1750 = vadd.f32 0.0, %v1749
        %v1751 = vpop.f32.mrb[0].mxu0
        %v1752 = vpop.f32.mrb[0].mxu0
        %v1753 = vpop.f32.mrb[0].mxu0
        %1754 = vdwg.mxu0
        %v1755 = vpack.c.bf16 %v1640, %v1640
        %v1756 = vpack.c.bf16 %v1693, %v1693
        %v1758 = vsel %vm768, %v1755, 0
        %v1761 = vsel %vm768, %v1756, 0
        %1763 = vmatprep.subr.bf16.mxu0 0
        %1764 = vmatpush1.bf16.xpose.msra.mxu0 %v1761
        %1765 = vmatprep.subr.bf16.mxu0 0
        %1766 = vmatpush1.bf16.xpose.msra.mxu0 0
        %1767 = vmatprep.subr.bf16.mxu0 0
        %1768 = vmatpush1.bf16.xpose.msra.mxu0 0
        %1769 = vmatprep.subr.bf16.mxu0 0
        %1770 = vmatpush1.bf16.xpose.msra.mxu0 0
        %1771 = vmatprep.subr.bf16.mxu0 0
        %1772 = vmatpush1.bf16.xpose.msra.mxu0 0
        %1773 = vmatprep.subr.bf16.mxu0 0
        %1774 = vmatpush1.bf16.xpose.msra.mxu0 0
        %1775 = vmatprep.subr.bf16.mxu0 0
        %1776 = vmatpush1.bf16.xpose.msra.mxu0 0
        %1777 = vmatprep.subr.bf16.mxu0 0
        %1778 = vmatpush1.bf16.xpose.msra.mxu0 0
        %1779 = vmatprep.subr.bf16.mxu0 0
        %1780 = vmatpush1.bf16.xpose.msra.mxu0 0
        %1781 = vmatprep.subr.bf16.mxu0 0
        %1782 = vmatpush1.bf16.xpose.msra.mxu0 0
        %1783 = vmatprep.subr.bf16.mxu0 0
        %1784 = vmatpush1.bf16.xpose.msra.mxu0 0
        %1785 = vmatprep.subr.bf16.mxu0 0
        %1786 = vmatpush1.bf16.xpose.msra.mxu0 0
        %1787 = vmatprep.subr.bf16.mxu0 0
        %1788 = vmatpush1.bf16.xpose.msra.mxu0 0
        %1789 = vmatprep.subr.bf16.mxu0 0
        %1790 = vmatpush1.bf16.xpose.msra.mxu0 0
        %1791 = vmatprep.subr.bf16.mxu0 0
        %1792 = vmatpush1.bf16.xpose.msra.mxu0 0
        %1793 = vmatprep.subr.bf16.mxu0 0
        %1794 = vmatpush1.bf16.xpose.msra.mxu0 0
        %1795 = vmatprep.mubr.bf16.mxu0 0
        %1796 = vmatmul.mubr.bf16.gmra.mrb[0].mxu0 %v1758
        %v1797 = vpop.f32.mrb[0].mxu0
        %v1798 = vadd.f32 0.0, %v1797
        %v1799 = vpop.f32.mrb[0].mxu0
        %v1800 = vpop.f32.mrb[0].mxu0
        %v1801 = vpop.f32.mrb[0].mxu0
        %1802 = vdwg.mxu0
        %v1803 = vsel %vm590, -1e+30, %v1798
        %v1804 = vsel %vm768, %v1803, -inf
        %1805 = vmax.xlane.f32.xlu0 %v1804
        %v1806 = vpop.xlane.xlu0 %1805
        %v1807 = vsub.f32 %v1803, %v1806
        %v1808 = vmul.f32 %v1807, 1.442695
        %v1809 = vpow.pop %v1808
        %v1810 = vsel %vm768, %v1809, 0.0
        %1811 = vadd.xlane.f32.xlu0 %v1810
        %v1812 = vpop.xlane.xlu0 %1811
        %v1813 = vrcp.pop %v1812
        %v1814 = vmul.f32 %v1809, %v1813
        %v1815 = vpack.c.bf16 %v1814, %v1814
        %v1816 = vpack.c.bf16 %v1750, %v1750
        %v1818 = vsel %vm768, %v1815, 0
        %v1821 = vsel %vm832, %v1816, 0
        %1823 = vmatprep.subr.bf16.mxu0 0
        %1824 = vmatpush1.bf16.msra.mxu0 %v1821
        %1825 = vmatprep.subr.bf16.mxu0 0
        %1826 = vmatpush1.bf16.msra.mxu0 0
        %1827 = vmatprep.subr.bf16.mxu0 0
        %1828 = vmatpush1.bf16.msra.mxu0 0
        %1829 = vmatprep.subr.bf16.mxu0 0
        %1830 = vmatpush1.bf16.msra.mxu0 0
        %1831 = vmatprep.subr.bf16.mxu0 0
        %1832 = vmatpush1.bf16.msra.mxu0 0
        %1833 = vmatprep.subr.bf16.mxu0 0
        %1834 = vmatpush1.bf16.msra.mxu0 0
        %1835 = vmatprep.subr.bf16.mxu0 0
        %1836 = vmatpush1.bf16.msra.mxu0 0
        %1837 = vmatprep.subr.bf16.mxu0 0
        %1838 = vmatpush1.bf16.msra.mxu0 0
        %1839 = vmatprep.subr.bf16.mxu0 0
        %1840 = vmatpush1.bf16.msra.mxu0 0
        %1841 = vmatprep.subr.bf16.mxu0 0
        %1842 = vmatpush1.bf16.msra.mxu0 0
        %1843 = vmatprep.subr.bf16.mxu0 0
        %1844 = vmatpush1.bf16.msra.mxu0 0
        %1845 = vmatprep.subr.bf16.mxu0 0
        %1846 = vmatpush1.bf16.msra.mxu0 0
        %1847 = vmatprep.subr.bf16.mxu0 0
        %1848 = vmatpush1.bf16.msra.mxu0 0
        %1849 = vmatprep.subr.bf16.mxu0 0
        %1850 = vmatpush1.bf16.msra.mxu0 0
        %1851 = vmatprep.subr.bf16.mxu0 0
        %1852 = vmatpush1.bf16.msra.mxu0 0
        %1853 = vmatprep.subr.bf16.mxu0 0
        %1854 = vmatpush1.bf16.msra.mxu0 0
        %1855 = vmatprep.mubr.bf16.mxu0 0
        %1856 = vmatmul.mubr.bf16.gmra.mrb[0].mxu0 %v1818
        %v1857 = vpop.f32.mrb[0].mxu0
        %v1858 = vadd.f32 0.0, %v1857
        %v1859 = vpop.f32.mrb[0].mxu0
        %v1860 = vpop.f32.mrb[0].mxu0
        %v1861 = vpop.f32.mrb[0].mxu0
        %1862 = vdwg.mxu0
        %v1863 = vpack.c.bf16 %v1858, %v1858
        %s1864 = scalar_lea.vmem %s9, 12
        %v1865 = vld [vmem:[%s1864] sm:$0xf]
        %v1867 = vsel %vm768, %v1863, 0
        %v1870 = vsel %vm832, %v1865, 0
        %1872 = vmatprep.subr.bf16.mxu0 0
        %1873 = vmatpush1.bf16.msra.mxu0 %v1870
        %1874 = vmatprep.subr.bf16.mxu0 0
        %1875 = vmatpush1.bf16.msra.mxu0 0
        %1876 = vmatprep.subr.bf16.mxu0 0
        %1877 = vmatpush1.bf16.msra.mxu0 0
        %1878 = vmatprep.subr.bf16.mxu0 0
        %1879 = vmatpush1.bf16.msra.mxu0 0
        %1880 = vmatprep.subr.bf16.mxu0 0
        %1881 = vmatpush1.bf16.msra.mxu0 0
        %1882 = vmatprep.subr.bf16.mxu0 0
        %1883 = vmatpush1.bf16.msra.mxu0 0
        %1884 = vmatprep.subr.bf16.mxu0 0
        %1885 = vmatpush1.bf16.msra.mxu0 0
        %1886 = vmatprep.subr.bf16.mxu0 0
        %1887 = vmatpush1.bf16.msra.mxu0 0
        %1888 = vmatprep.subr.bf16.mxu0 0
        %1889 = vmatpush1.bf16.msra.mxu0 0
        %1890 = vmatprep.subr.bf16.mxu0 0
        %1891 = vmatpush1.bf16.msra.mxu0 0
        %1892 = vmatprep.subr.bf16.mxu0 0
        %1893 = vmatpush1.bf16.msra.mxu0 0
        %1894 = vmatprep.subr.bf16.mxu0 0
        %1895 = vmatpush1.bf16.msra.mxu0 0
        %1896 = vmatprep.subr.bf16.mxu0 0
        %1897 = vmatpush1.bf16.msra.mxu0 0
        %1898 = vmatprep.subr.bf16.mxu0 0
        %1899 = vmatpush1.bf16.msra.mxu0 0
        %1900 = vmatprep.subr.bf16.mxu0 0
        %1901 = vmatpush1.bf16.msra.mxu0 0
        %1902 = vmatprep.subr.bf16.mxu0 0
        %1903 = vmatpush1.bf16.msra.mxu0 0
        %1904 = vmatprep.mubr.bf16.mxu0 0
        %1905 = vmatmul.mubr.bf16.gmra.mrb[0].mxu0 %v1867
        %v1906 = vpop.f32.mrb[0].mxu0
        %v1907 = vadd.f32 0.0, %v1906
        %v1908 = vpop.f32.mrb[0].mxu0
        %v1909 = vpop.f32.mrb[0].mxu0
        %v1910 = vpop.f32.mrb[0].mxu0
        %1911 = vdwg.mxu0
        %v1912 = vadd.f32 %v1582, %v1907
        %v1913 = vld [vmem:[%s10] sm:$0x1]
        %v1915 = vlaneseq
        %v1916 = vshrl.u32 %v1915, 7
        %v1917 = vsub.s32 0, %v1916
        %v1918 = vrot.slane %v1913, %v1917
        %v1920 = vadd.f32 %v1912, %v1918
        %v1921 = vadd.f32 %v533, %v1920
        %v1922 = vld [vmem:[%s4] sm:$0x1]
        %v1923 = vld [vmem:[%s5] sm:$0x1]
        %v1924 = vsel %vm537, %v1921, 0.0
        %1925 = vadd.xlane.f32.xlu0 %v1924
        %v1926 = vpop.xlane.xlu0 %1925
        %v1927 = vmul.f32 %v1926, %v541
        %v1928 = vsub.f32 %v1921, %v1927
        %v1929 = vmul.f32 %v1928, %v1928
        %v1930 = vsel %vm537, %v1929, 0.0
        %1931 = vadd.xlane.f32.xlu0 %v1930
        %v1932 = vpop.xlane.xlu0 %1931
        %v1933 = vmul.f32 %v1932, %v541
        %v1934 = vadd.f32 %v1933, 1e-05
        %v1935 = vrsqrt.pop %v1934
        %v1936 = vmul.f32 %v1928, %v1935
        %v1938 = vlaneseq
        %v1939 = vshrl.u32 %v1938, 7
        %v1940 = vsub.s32 0, %v1939
        %v1941 = vrot.slane %v1922, %v1940
        %v1943 = vmul.f32 %v1941, %v1936
        %v1945 = vlaneseq
        %v1946 = vshrl.u32 %v1945, 7
        %v1947 = vsub.s32 0, %v1946
        %v1948 = vrot.slane %v1923, %v1947
        %v1950 = vadd.f32 %v1943, %v1948
        %v1951 = vpack.c.bf16 %v1950, %v1950
        %v1952 = vld [vmem:[%s11] sm:$0xf]
        %v1953 = vld [vmem:[%s11 + $0x4] sm:$0xf]
        %v1954 = vld [vmem:[%s11 + $0x8] sm:$0xf]
        %v1955 = vld [vmem:[%s11 + $0xc] sm:$0xf]
        %v1956 = vld [vmem:[%s12] sm:$0x1]
        %v1958 = vlaneseq
        %v1959 = vshrl.u32 %v1958, 7
        %v1960 = vsub.s32 0, %v1959
        %v1961 = vrot.slane %v1956, %v1960
        %v1967 = vunpack.c.l.b16 %v1952
        %v1968 = vunpack.c.l.b16 %v1953
        %v1969 = vunpack.c.l.b16 %v1954
        %v1970 = vunpack.c.l.b16 %v1955
        %v1971 = vpack.c.b16 %v1968, %v1967
        %v1972 = vpack.c.b16 %v1970, %v1969
        %v1976 = vsel %vm537, %v1951, 0
        %1978 = vmatprep.subr.bf16.mxu0 0
        %1979 = vmatpush1.bf16.msra.mxu0 %v1971
        %1980 = vmatprep.subr.bf16.mxu0 0
        %1981 = vmatpush1.bf16.msra.mxu0 %v1972
        %1982 = vmatprep.subr.bf16.mxu0 0
        %1983 = vmatpush1.bf16.msra.mxu0 0
        %1984 = vmatprep.subr.bf16.mxu0 0
        %1985 = vmatpush1.bf16.msra.mxu0 0
        %1986 = vmatprep.subr.bf16.mxu0 0
        %1987 = vmatpush1.bf16.msra.mxu0 0
        %1988 = vmatprep.subr.bf16.mxu0 0
        %1989 = vmatpush1.bf16.msra.mxu0 0
        %1990 = vmatprep.subr.bf16.mxu0 0
        %1991 = vmatpush1.bf16.msra.mxu0 0
        %1992 = vmatprep.subr.bf16.mxu0 0
        %1993 = vmatpush1.bf16.msra.mxu0 0
        %1994 = vmatprep.subr.bf16.mxu0 0
        %1995 = vmatpush1.bf16.msra.mxu0 0
        %1996 = vmatprep.subr.bf16.mxu0 0
        %1997 = vmatpush1.bf16.msra.mxu0 0
        %1998 = vmatprep.subr.bf16.mxu0 0
        %1999 = vmatpush1.bf16.msra.mxu0 0
        %2000 = vmatprep.subr.bf16.mxu0 0
        %2001 = vmatpush1.bf16.msra.mxu0 0
        %2002 = vmatprep.subr.bf16.mxu0 0
        %2003 = vmatpush1.bf16.msra.mxu0 0
        %2004 = vmatprep.subr.bf16.mxu0 0
        %2005 = vmatpush1.bf16.msra.mxu0 0
        %2006 = vmatprep.subr.bf16.mxu0 0
        %2007 = vmatpush1.bf16.msra.mxu0 0
        %2008 = vmatprep.subr.bf16.mxu0 0
        %2009 = vmatpush1.bf16.msra.mxu0 0
        %2010 = vmatprep.mubr.bf16.mxu0 0
        %2011 = vmatmul.mubr.bf16.gmra.mrb[0].mxu0 %v1976
        %v2012 = vpop.f32.mrb[0].mxu0
        %v2013 = vadd.f32 %v1961, %v2012
        %v2014 = vpop.f32.mrb[0].mxu0
        %v2015 = vpop.f32.mrb[0].mxu0
        %v2016 = vpop.f32.mrb[0].mxu0
        %2017 = vdwg.mxu0
        %v2018 = vmul.f32 %v2013, 0.8
        %v2019 = vmul.f32 %v2013, 0.044715
        %v2020 = vmul.f32 %v2019, %v2013
        %v2021 = vmul.f32 %v2020, %v2013
        %v2022 = vadd.f32 %v2013, %v2021
        %v2023 = vmul.f32 %v2022, 0.7978845
        %v2024 = vtanh.pop %v2023
        %v2025 = vadd.f32 %v2024, 1.0
        %v2026 = vmul.f32 %v2018, %v2025
        %v2027 = vpack.c.bf16 %v2026, %v2026
        %v2028 = vld [vmem:[%s13] sm:$0xf]
        %v2029 = vld [vmem:[%s13 + $0x4] sm:$0xf]
        %v2030 = vld [vmem:[%s13 + $0x8] sm:$0xf]
        %v2031 = vld [vmem:[%s13 + $0xc] sm:$0xf]
        %v2032 = vld [vmem:[%s13 + $0x10] sm:$0xf]
        %v2033 = vld [vmem:[%s13 + $0x14] sm:$0xf]
        %v2034 = vld [vmem:[%s13 + $0x18] sm:$0xf]
        %v2035 = vld [vmem:[%s13 + $0x1c] sm:$0xf]
        %v2036 = vld [vmem:[%s13 + $0x20] sm:$0xf]
        %v2037 = vld [vmem:[%s13 + $0x24] sm:$0xf]
        %v2038 = vld [vmem:[%s13 + $0x28] sm:$0xf]
        %v2039 = vld [vmem:[%s13 + $0x2c] sm:$0xf]
        %v2040 = vld [vmem:[%s13 + $0x30] sm:$0xf]
        %v2041 = vld [vmem:[%s13 + $0x34] sm:$0xf]
        %v2042 = vld [vmem:[%s13 + $0x38] sm:$0xf]
        %v2043 = vld [vmem:[%s13 + $0x3c] sm:$0xf]
        %v2044 = vld [vmem:[%s14] sm:$0x1]
        %v2046 = vlaneseq
        %v2047 = vshrl.u32 %v2046, 7
        %v2048 = vsub.s32 0, %v2047
        %v2049 = vrot.slane %v2044, %v2048
        %v2067 = vunpack.c.l.b16 %v2028
        %v2068 = vunpack.c.l.b16 %v2029
        %v2069 = vunpack.c.l.b16 %v2030
        %v2070 = vunpack.c.l.b16 %v2031
        %v2071 = vunpack.c.l.b16 %v2032
        %v2072 = vunpack.c.l.b16 %v2033
        %v2073 = vunpack.c.l.b16 %v2034
        %v2074 = vunpack.c.l.b16 %v2035
        %v2075 = vunpack.c.l.b16 %v2036
        %v2076 = vunpack.c.l.b16 %v2037
        %v2077 = vunpack.c.l.b16 %v2038
        %v2078 = vunpack.c.l.b16 %v2039
        %v2079 = vunpack.c.l.b16 %v2040
        %v2080 = vunpack.c.l.b16 %v2041
        %v2081 = vunpack.c.l.b16 %v2042
        %v2082 = vunpack.c.l.b16 %v2043
        %v2083 = vpack.c.b16 %v2068, %v2067
        %v2084 = vpack.c.b16 %v2070, %v2069
        %v2085 = vpack.c.b16 %v2072, %v2071
        %v2086 = vpack.c.b16 %v2074, %v2073
        %v2087 = vpack.c.b16 %v2076, %v2075
        %v2088 = vpack.c.b16 %v2078, %v2077
        %v2089 = vpack.c.b16 %v2080, %v2079
        %v2090 = vpack.c.b16 %v2082, %v2081
        %2099 = vmatprep.subr.bf16.mxu0 0
        %2100 = vmatpush1.bf16.msra.mxu0 %v2083
        %2101 = vmatprep.subr.bf16.mxu0 0
        %2102 = vmatpush1.bf16.msra.mxu0 %v2084
        %2103 = vmatprep.subr.bf16.mxu0 0
        %2104 = vmatpush1.bf16.msra.mxu0 %v2085
        %2105 = vmatprep.subr.bf16.mxu0 0
        %2106 = vmatpush1.bf16.msra.mxu0 %v2086
        %2107 = vmatprep.subr.bf16.mxu0 0
        %2108 = vmatpush1.bf16.msra.mxu0 %v2087
        %2109 = vmatprep.subr.bf16.mxu0 0
        %2110 = vmatpush1.bf16.msra.mxu0 %v2088
        %2111 = vmatprep.subr.bf16.mxu0 0
        %2112 = vmatpush1.bf16.msra.mxu0 %v2089
        %2113 = vmatprep.subr.bf16.mxu0 0
        %2114 = vmatpush1.bf16.msra.mxu0 %v2090
        %2115 = vmatprep.subr.bf16.mxu0 0
        %2116 = vmatpush1.bf16.msra.mxu0 0
        %2117 = vmatprep.subr.bf16.mxu0 0
        %2118 = vmatpush1.bf16.msra.mxu0 0
        %2119 = vmatprep.subr.bf16.mxu0 0
        %2120 = vmatpush1.bf16.msra.mxu0 0
        %2121 = vmatprep.subr.bf16.mxu0 0
        %2122 = vmatpush1.bf16.msra.mxu0 0
        %2123 = vmatprep.subr.bf16.mxu0 0
        %2124 = vmatpush1.bf16.msra.mxu0 0
        %2125 = vmatprep.subr.bf16.mxu0 0
        %2126 = vmatpush1.bf16.msra.mxu0 0
        %2127 = vmatprep.subr.bf16.mxu0 0
        %2128 = vmatpush1.bf16.msra.mxu0 0
        %2129 = vmatprep.subr.bf16.mxu0 0
        %2130 = vmatpush1.bf16.msra.mxu0 0
        %2131 = vmatprep.mubr.bf16.mxu0 0
        %2132 = vmatmul.mubr.bf16.gmra.mrb[0].mxu0 %v2027
        %v2133 = vpop.f32.mrb[0].mxu0
        %v2134 = vadd.f32 %v2049, %v2133
        %v2135 = vpop.f32.mrb[0].mxu0
        %v2136 = vpop.f32.mrb[0].mxu0
        %v2137 = vpop.f32.mrb[0].mxu0
        %2138 = vdwg.mxu0
        %v2139 = vadd.f32 %v1921, %v2134
        %2140 = vst.msk [vmem:[%s520] sm:$0xff] %vm537, %v2139
        %s2141 = sand.u32 %s378, 1
        %s2142 = scalar_lea.sflag [#allocation3], %s2141
        %s2143 = sand.u32 %s378, 1
        %s2144 = smul.addr %s2143, 8
        %s2145 = scalar_lea.vmem [#allocation2], %s2144
        // Predicated region
        $region81: #{tpu_custom_call.1} parent=79 // pred_check
          %p2146 = pneg %p388
        $region82: #{tpu_custom_call.1} parent=79 // pred_check_branch
          %2148 = sbr.rel (%p2146) target = $region84
        $region83: #{tpu_custom_call.1} parent=79 // pred_region
          %s2150 = ssub.s32 128, 128
          %2151 = vsyncadd %s2142, %s2150
          %s2152 = sadd.s32 %s34, %s33
          %s2153 = smul.addr %s2152, 128
          %s2154 = scalar_lea.hbm %s15, %s2153
          %s2156 = sshll.u32 %s2145, 4
          %s2157 = int_to_ptr.vmem [resolvable:$true] %s2156
          %2159 = dma.vmem_to_hbm [thread:$0]  %s2157, 128, %s2154, %s2142
        $region84: #{tpu_custom_call.1} parent=79 // pred_fallthru
          _
      $region80: #{tpu_custom_call.1} parent=5 // pred_fallthru
        _
      %p2160 = scmp.le.s32.totalorder 2, %s24
      // Predicated region
      $region85: #{tpu_custom_call.1} parent=5 // pred_check
        %p2161 = pneg %p2160
      $region86: #{tpu_custom_call.1} parent=5 // pred_check_branch
        %2163 = sbr.rel (%p2161) target = $region88
      $region87: #{tpu_custom_call.1} parent=5 // pred_region
        %s2164 = ssub.s32 %s24, 2
        // Predicated region
        $region89: #{tpu_custom_call.1} parent=87 // pred_check
          %p2165 = pneg %p394
        $region90: #{tpu_custom_call.1} parent=87 // pred_check_branch
          %2167 = sbr.rel (%p2165) target = $region92
        $region91: #{tpu_custom_call.1} parent=87 // pred_region
          %s2168 = sand.u32 %s379, 1
          %s2169 = scalar_lea.sflag [#allocation3], %s2168
          %s2170 = sand.u32 %s379, 1
          %s2171 = smul.addr %s2170, 8
          %s2172 = scalar_lea.vmem [#allocation2], %s2171
          %2173 = dma.done %s2169, 128
        $region92: #{tpu_custom_call.1} parent=87 // pred_fallthru
          _
      $region88: #{tpu_custom_call.1} parent=5 // pred_fallthru
        _
    $region6: #{tpu_custom_call.1} parent=1 // loop_footer
      %s28 = sadd.s32 1, %s24
    $region7: #{tpu_custom_call.1} parent=1 // loop_footer_branch
      %23 = sbr.rel target = $region3
    $region8: #{tpu_custom_call.1} parent=1 // loop_exit
      _
    %2174 = vsyncpa [#allocation3], 1
    %s2175 = scalar_lea.sflag [#allocation3], 1
    %2176 = vsyncpa %s2175, 1

</llo_original>
